<compile_context>
chip_gen: v7x
topology: tpu7x:2x2x1
jax: 0.10.0
libtpu: 0.0.40
codegen_flags: <defaults>
</compile_context>

<pallas_src>
import jax
import jax.numpy as jnp
from jax.experimental import pallas as pl
from jax.experimental.pallas import tpu as pltpu

OUT_PAD = 128  # lane-dense padding of the scalar regression head


def _round_up(v, m):
    return ((v + m - 1) // m) * m


def _vmem_budget():
    """Scoped-VMEM limit sized from the actual chip (fallback: 64 MiB phys)."""
    phys = 64 * 1024 * 1024
    try:
        info = pltpu.get_tpu_info()
        phys = int(getattr(info, "vmem_capacity_bytes", phys)) or phys
    except Exception:
        pass
    return max(int(phys * 0.85), 32 * 1024 * 1024)


def _vmem_need(n_pad, g_pad, hidden, tile, cache_a):
    """Rough resident-VMEM estimate (scratch + BlockSpec buffers)."""
    h = hidden
    need = 0
    need += n_pad * h * 4                 # h_s (f32 layer-input carry)
    need += n_pad * h * 2 * 3             # xwb_s + rootb_s + hn_s (bf16)
    need += tile * h * 4                  # acc_s
    need += 4 * 128 * 4 * 2               # stat_s + bnp_s (padded)
    if cache_a:
        need += n_pad * n_pad * 2         # full bf16 A cache
    need += 2 * tile * tile * 2           # double-buffered A input tile
    need += n_pad * h * 4                 # resident padded X
    need += g_pad * n_pad * 4             # resident pooling matrix
    need += 2 * (h * 2 * h * 2 + 3 * 128 * 4)   # double-buffered per-layer params
    need += h * h * 4 + h * OUT_PAD * 4 + 2 * OUT_PAD * 4 + g_pad * OUT_PAD * 4
    return need


def _make_kernel(hidden, tile, n_valid, res0, res_last, n_row, n_col, cache_a,
                 eps=1e-5):
    """Build the Pallas kernel body with static config baked in via closure."""
    inv_n = 1.0 / float(n_valid)
    tr = tc = tile

    def kernel(a_ref, x_ref, p_ref, w_ref, b_ref, g_ref, be_ref,
               lw0_ref, lb0_ref, lw1_ref, lb1_ref, out_ref, *scratch):
        h_s, xwb_s, rootb_s, hn_s, acc_s, stat_s, bnp_s = scratch[:7]
        a_cache = scratch[7] if cache_a else None

        l = pl.program_id(0)           # conv layer
        i = pl.program_id(1)           # A row tile
        j = pl.program_id(2)           # A column tile (reduction axis, last)

        r0 = pl.multiple_of(i * tr, tr)
        c0 = pl.multiple_of(j * tc, tc)

        # ---- i==0 sweep: distributed per-chunk layer prologue ----------------
        @pl.when(i == 0)
        def _():
            @pl.when(j == 0)
            def _():
                stat_s[...] = jnp.zeros_like(stat_s)   # reset BN stats

            @pl.when(l == 0)
            def _():
                # layer-0 input = padded node features (chunk by chunk)
                h_s[pl.ds(c0, tc), :] = x_ref[pl.ds(c0, tc), :]

            @pl.when(l > 0)
            def _():
                # deferred BN + relu + residual of the *previous* layer, chunk c0
                hn = hn_s[pl.ds(c0, tc), :].astype(jnp.float32)
                hv = jnp.maximum(hn * bnp_s[0:1, :] + bnp_s[1:2, :], 0.0)
                res_prev = jnp.where(l == 1, res0, 1.0)
                hv = hv + res_prev * h_s[pl.ds(c0, tc), :]
                rid = jax.lax.broadcasted_iota(jnp.int32, (tc, 1), 0) + c0
                hv = hv * (rid < n_valid).astype(jnp.float32)   # keep pad rows 0
                h_s[pl.ds(c0, tc), :] = hv

            # fused lane-dense [H, 2H] weight matmul for this chunk (bf16 MXU)
            hw = jnp.dot(h_s[pl.ds(c0, tc), :].astype(jnp.bfloat16), w_ref[...],
                         preferred_element_type=jnp.float32)
            xwb_s[pl.ds(c0, tc), :] = hw[:, :hidden].astype(jnp.bfloat16)
            rootb_s[pl.ds(c0, tc), :] = hw[:, hidden:].astype(jnp.bfloat16)

        # ---- row-tile start: reset propagation accumulator --------------------
        @pl.when(j == 0)
        def _():
            acc_s[...] = jnp.zeros_like(acc_s)

        # ---- main propagation: bf16 A tile @ bf16 (X W_init) chunk, f32 acc ---
        xw_chunk = xwb_s[pl.ds(c0, tc), :]
        if cache_a:
            @pl.when(l == 0)
            def _():
                a_cache[pl.ds(r0, tr), pl.ds(c0, tc)] = a_ref[...]
                acc_s[...] += jnp.dot(a_ref[...], xw_chunk,
                                      preferred_element_type=jnp.float32)

            @pl.when(l > 0)
            def _():
                acc_s[...] += jnp.dot(
                    a_cache[pl.ds(r0, tr), pl.ds(c0, tc)], xw_chunk,
                    preferred_element_type=jnp.float32)
        else:
            acc_s[...] += jnp.dot(a_ref[...], xw_chunk,
                                  preferred_element_type=jnp.float32)

        # ---- row tile done: ARMA output + fused (sum, sumsq) BN statistics ----
        @pl.when(j == n_col - 1)
        def _():
            conv = jnp.maximum(
                acc_s[...]
                + rootb_s[pl.ds(r0, tr), :].astype(jnp.float32)
                + b_ref[...],
                0.0)
            hn_s[pl.ds(r0, tr), :] = conv.astype(jnp.bfloat16)
            rid = jax.lax.broadcasted_iota(jnp.int32, (tr, 1), 0) + r0
            cm = conv * (rid < n_valid).astype(jnp.float32)
            stat_s[...] += jnp.concatenate(
                [jnp.sum(cm, axis=0, keepdims=True),
                 jnp.sum(cm * cm, axis=0, keepdims=True)], axis=0)

        # ---- layer done: finalize BN scale/shift (applied lazily next layer) --
        @pl.when((i == n_row - 1) & (j == n_col - 1))
        def _():
            mu = stat_s[0:1, :] * inv_n
            var = jnp.maximum(stat_s[1:2, :] * inv_n - mu * mu, 0.0)
            scale = g_ref[...] * jax.lax.rsqrt(var + eps)     # gamma / std
            bnp_s[0:1, :] = scale
            bnp_s[1:2, :] = be_ref[...] - mu * scale           # beta - mu*gamma/std

            # ---- after the last conv layer: BN apply + mean pool + lin head ---
            @pl.when(l == pl.num_programs(0) - 1)
            def _():
                sc = bnp_s[0:1, :]
                sh = bnp_s[1:2, :]

                def apply_row(r, carry):
                    rr = pl.multiple_of(r * tr, tr)
                    hn = hn_s[pl.ds(rr, tr), :].astype(jnp.float32)
                    hv = (jnp.maximum(hn * sc + sh, 0.0)
                          + res_last * h_s[pl.ds(rr, tr), :])
                    rid2 = jax.lax.broadcasted_iota(jnp.int32, (tr, 1), 0) + rr
                    hv = hv * (rid2 < n_valid).astype(jnp.float32)
                    h_s[pl.ds(rr, tr), :] = hv
                    return carry

                jax.lax.fori_loop(0, n_row, apply_row, 0)

                pooled = jnp.dot(p_ref[...], h_s[...],
                                 preferred_element_type=jnp.float32)
                z = jnp.maximum(
                    jnp.dot(pooled, lw0_ref[...],
                            preferred_element_type=jnp.float32) + lb0_ref[...],
                    0.0)
                out_ref[...] = (jnp.dot(z, lw1_ref[...],
                                        preferred_element_type=jnp.float32)
                                + lb1_ref[...])

    return kernel


def pyg_regression_forward(x, a_norm, pool_mat, params):
    n, f_in = x.shape
    g = pool_mat.shape[0]
    hidden = params["lin_w0"].shape[0]
    two_h = 2 * hidden
    n_layers = len(params["conv_wi"])
    assert f_in <= hidden, "packed node-feature layout assumes F_in <= hidden_dim"
    # TODO(synk): F_in > hidden_dim would need a wider packed feature dimension.

    g_pad = _round_up(g, 8)
    budget = _vmem_budget()

    # Tile selection: biggest 128-multiple tile (<=1024) whose streaming budget
    # fits the per-generation VMEM limit; then decide whether the full A fits
    # in a persistent VMEM cache (eliminates the per-layer A re-stream).
    tile = 128
    n_pad = _round_up(n, tile)
    for cand in (1024, 512, 256, 128):
        t = min(cand, _round_up(n, 128))
        npad = _round_up(n, t)
        if _vmem_need(npad, g_pad, hidden, t, cache_a=False) <= budget - (2 << 20):
            tile, n_pad = t, npad
            break
    cache_a = (_vmem_need(n_pad, g_pad, hidden, tile, cache_a=True)
               <= budget - (2 << 20))

    # ---- wrapper-side layout plumbing (zero-pad / fuse), no compute hoisted ----
    x_pad = jnp.zeros((n_pad, hidden), jnp.float32).at[:n, :f_in].set(x)
    # bf16 adjacency: the A @ (X W_init) product is memory-bound on A everywhere.
    a_pad = (jnp.zeros((n_pad, n_pad), jnp.float32)
             .at[:n, :n].set(a_norm)).astype(jnp.bfloat16)
    p_pad = jnp.zeros((g_pad, n_pad), jnp.float32).at[:g, :n].set(pool_mat)

    # Fuse [W_init | W_root] per conv layer into one [hidden, 2*hidden] bf16
    # weight (layer-0 rows zero-padded F_in -> hidden).
    w_stack = []
    for wi, wr in zip(params["conv_wi"], params["conv_wr"]):
        wf = jnp.zeros((hidden, two_h), jnp.float32)
        wf = wf.at[:wi.shape[0], :hidden].set(wi)
        wf = wf.at[:wr.shape[0], hidden:].set(wr)
        w_stack.append(wf)
    w_stack = jnp.stack(w_stack).astype(jnp.bfloat16)   # [L, H, 2H] bf16
    b_stack = jnp.stack(params["conv_b"])                # [L, 1, H] f32
    gamma, beta = params["bn_gamma"], params["bn_beta"]  # [L, 1, H] each
    lw0, lb0 = params["lin_w0"], params["lin_b0"]
    # lane-dense final head: pad [H,1] -> [H,128] so the output store is unmasked
    lw1 = jnp.zeros((hidden, OUT_PAD), jnp.float32).at[:, :1].set(params["lin_w1"])
    lb1 = jnp.zeros((1, OUT_PAD), jnp.float32).at[:, :1].set(params["lin_b1"])

    res0 = 1.0 if f_in == hidden else 0.0
    res_last = 1.0 if n_layers > 1 else res0
    n_row = n_col = n_pad // tile
    kernel = _make_kernel(hidden, tile, n, res0, res_last, n_row, n_col, cache_a)

    last_blk = n_row - 1
    if cache_a:
        # After layer 0 hold the last block index -> no further A DMA; layers
        # 1..L-1 read A from the persistent VMEM cache instead.
        def a_index(l, i, j):
            return (jnp.where(l == 0, i, last_blk), jnp.where(l == 0, j, last_blk))
    else:
        def a_index(l, i, j):
            return (i, j)

    def full(shape):
        return pl.BlockSpec(shape, lambda l, i, j: (0,) * len(shape))

    def per_layer(shape):
        return pl.BlockSpec((None,) + shape,
                            lambda l, i, j: (l,) + (0,) * len(shape))

    scratch = [
        pltpu.VMEM((n_pad, hidden), jnp.float32),   # h_s: layer-input carry
        pltpu.VMEM((n_pad, hidden), jnp.bfloat16),  # X @ W_init (bf16)
        pltpu.VMEM((n_pad, hidden), jnp.bfloat16),  # X @ W_root (bf16)
        pltpu.VMEM((n_pad, hidden), jnp.bfloat16),  # conv output of current layer
        pltpu.VMEM((tile, hidden), jnp.float32),    # A-row-tile accumulator
        pltpu.VMEM((2, hidden), jnp.float32),       # fused BN sum / sumsq
        pltpu.VMEM((2, hidden), jnp.float32),       # BN scale / shift (lazy apply)
    ]
    if cache_a:
        scratch.append(pltpu.VMEM((n_pad, n_pad), jnp.bfloat16))  # cached A

    out = pl.pallas_call(
        kernel,
        out_shape=jax.ShapeDtypeStruct((g_pad, OUT_PAD), jnp.float32),
        grid_spec=pltpu.PrefetchScalarGridSpec(
            num_scalar_prefetch=0,
            grid=(n_layers, n_row, n_col),
            in_specs=[
                pl.BlockSpec((tile, tile), a_index),             # A_norm (bf16)
                full((n_pad, hidden)),                           # X (padded)
                full((g_pad, n_pad)),                            # pooling matrix
                per_layer((hidden, two_h)),                      # fused conv W (bf16)
                per_layer((1, hidden)),                          # conv bias
                per_layer((1, hidden)),                          # BN gamma
                per_layer((1, hidden)),                          # BN beta
                full((hidden, hidden)),                          # lin0 W
                full((1, hidden)),                               # lin0 b
                full((hidden, OUT_PAD)),                         # lin1 W (padded)
                full((1, OUT_PAD)),                              # lin1 b (padded)
            ],
            out_specs=pl.BlockSpec((g_pad, OUT_PAD), lambda l, i, j: (0, 0)),
            scratch_shapes=scratch,
        ),
        compiler_params=pltpu.CompilerParams(
            # Every grid axis carries state in scratch (layer chaining, A cache,
            # global BN statistics), so all axes stay "arbitrary".
            # TODO(synk): v7x megacore would need per-core BN partials + reduce.
            dimension_semantics=("arbitrary", "arbitrary", "arbitrary"),
            vmem_limit_bytes=budget,   # sized per generation from get_tpu_info
        ),
    )(a_pad, x_pad, p_pad, w_stack, b_stack, gamma, beta, lw0, lb0, lw1, lb1)

    return jnp.squeeze(out[:g, 0])   # matches xx.squeeze()


def build_graph(key, n_nodes_per_graph, n_graphs):
    """Deterministic random undirected graph(s); dense A_norm and pooling matrix."""
    blocks = []
    for _ in range(n_graphs):
        key, sub = jax.random.split(key)
        upper = jax.random.bernoulli(
            sub, p=0.3, shape=(n_nodes_per_graph, n_nodes_per_graph)
        ).astype(jnp.float32)
        upper = jnp.triu(upper, k=1)
        # guarantee a ring so every node has degree >= 1
        ring = jnp.eye(n_nodes_per_graph, k=1, dtype=jnp.float32)
        upper = jnp.clip(upper + ring, 0.0, 1.0)
        blocks.append(upper + upper.T)
    a = jax.scipy.linalg.block_diag(*blocks)
    # gcn_norm (add_self_loops=False): D^-1/2 A D^-1/2
    deg = jnp.sum(a, axis=1)
    dinv = jnp.where(deg > 0, jax.lax.rsqrt(deg), 0.0)
    a_norm = dinv[:, None] * a * dinv[None, :]
    # global_mean_pool as a [G, N] averaging matrix
    batch = jnp.repeat(jnp.arange(n_graphs), n_nodes_per_graph)
    onehot = (batch[None, :] == jnp.arange(n_graphs)[:, None]).astype(jnp.float32)
    pool_mat = onehot / jnp.sum(onehot, axis=1, keepdims=True)
    return a_norm.astype(jnp.float32), pool_mat.astype(jnp.float32)


def init_params(key, f_in, hidden, n_conv_layers=3):
    def dense(k, shape, scale=0.1):
        return (scale * jax.random.normal(k, shape)).astype(jnp.float32)

    keys = jax.random.split(key, 3 * n_conv_layers + 4)
    conv_wi, conv_wr, conv_b = [], [], []
    for ii in range(n_conv_layers):
        d_in = f_in if ii == 0 else hidden
        conv_wi.append(dense(keys[3 * ii + 0], (d_in, hidden)))   # ARMA W_init
        conv_wr.append(dense(keys[3 * ii + 1], (d_in, hidden)))   # ARMA W_root
        conv_b.append(dense(keys[3 * ii + 2], (1, hidden), 0.01))  # ARMA bias
    k0 = 3 * n_conv_layers
    return dict(
        conv_wi=conv_wi, conv_wr=conv_wr, conv_b=conv_b,
        # BatchNorm1d init (torch): gamma=1, beta=0
        bn_gamma=jnp.ones((n_conv_layers, 1, hidden), jnp.float32),
        bn_beta=jnp.zeros((n_conv_layers, 1, hidden), jnp.float32),
        lin_w0=dense(keys[k0 + 0], (hidden, hidden)),
        lin_b0=dense(keys[k0 + 1], (1, hidden), 0.01),
        lin_w1=dense(keys[k0 + 2], (hidden, 1)),
        lin_b1=dense(keys[k0 + 3], (1, 1), 0.01),
    )


if __name__ == "__main__":
    key = jax.random.PRNGKey(0)
    n_nodes_per_graph = 16
    n_graphs = 2
    num_node_features = 16
    hidden_dim = 64
    n_nodes = n_nodes_per_graph * n_graphs

    k_graph, k_x, k_params = jax.random.split(key, 3)
    a_norm, pool_mat = build_graph(k_graph, n_nodes_per_graph, n_graphs)
    x = jax.random.normal(k_x, (n_nodes, num_node_features), jnp.float32)
    params = init_params(k_params, num_node_features, hidden_dim)

    # TODO(synk): dropout omitted (module default dropout=0.0 -> no-op)
    out = pyg_regression_forward(x, a_norm, pool_mat, params)
    out = jax.block_until_ready(out)
    assert out.shape == (n_graphs,)
    print("KERNEL_OK")
</pallas_src>

<mosaic_0001>
module attributes {stable_mosaic.version = 11 : i64} {
  func.func @kernel(%arg0: i32, %arg1: i32, %arg2: i32, %arg3: memref<128x128xbf16, #tpu.memory_space<vmem>>, %arg4: memref<128x64xf32, #tpu.memory_space<vmem>>, %arg5: memref<8x128xf32, #tpu.memory_space<vmem>>, %arg6: memref<1x64x128xbf16, #tpu.memory_space<vmem>>, %arg7: memref<1x1x64xf32, #tpu.memory_space<vmem>>, %arg8: memref<1x1x64xf32, #tpu.memory_space<vmem>>, %arg9: memref<1x1x64xf32, #tpu.memory_space<vmem>>, %arg10: memref<64x64xf32, #tpu.memory_space<vmem>>, %arg11: memref<1x64xf32, #tpu.memory_space<vmem>>, %arg12: memref<64x128xf32, #tpu.memory_space<vmem>>, %arg13: memref<1x128xf32, #tpu.memory_space<vmem>>, %arg14: memref<8x128xf32, #tpu.memory_space<vmem>>, %arg15: memref<128x64xf32, #tpu.memory_space<vmem>>, %arg16: memref<128x64xbf16, #tpu.memory_space<vmem>>, %arg17: memref<128x64xbf16, #tpu.memory_space<vmem>>, %arg18: memref<128x64xbf16, #tpu.memory_space<vmem>>, %arg19: memref<128x64xf32, #tpu.memory_space<vmem>>, %arg20: memref<2x64xf32, #tpu.memory_space<vmem>>, %arg21: memref<2x64xf32, #tpu.memory_space<vmem>>, %arg22: memref<128x128xbf16, #tpu.memory_space<vmem>>) attributes {dimension_semantics = [#tpu.dimension_semantics<arbitrary>, #tpu.dimension_semantics<arbitrary>, #tpu.dimension_semantics<arbitrary>], iteration_bounds = array<i64: 3, 1, 1>, scalar_prefetch = 0 : i64, scratch_operands = 8 : i64, tpu.core_type = #tpu.core_type<tc>, window_params = [{transform_indices = @transform_0, window_bounds = array<i64: 128, 128>}, {pipeline_mode = #tpu.pipeline_mode<synchronous>, transform_indices = @transform_1, window_bounds = array<i64: 128, 64>}, {pipeline_mode = #tpu.pipeline_mode<synchronous>, transform_indices = @transform_2, window_bounds = array<i64: 8, 128>}, {transform_indices = @transform_3, window_bounds = array<i64: 1, 64, 128>}, {transform_indices = @transform_4, window_bounds = array<i64: 1, 1, 64>}, {transform_indices = @transform_5, window_bounds = array<i64: 1, 1, 64>}, {transform_indices = @transform_6, window_bounds = array<i64: 1, 1, 64>}, {pipeline_mode = #tpu.pipeline_mode<synchronous>, transform_indices = @transform_7, window_bounds = array<i64: 64, 64>}, {pipeline_mode = #tpu.pipeline_mode<synchronous>, transform_indices = @transform_8, window_bounds = array<i64: 1, 64>}, {pipeline_mode = #tpu.pipeline_mode<synchronous>, transform_indices = @transform_9, window_bounds = array<i64: 64, 128>}, {pipeline_mode = #tpu.pipeline_mode<synchronous>, transform_indices = @transform_10, window_bounds = array<i64: 1, 128>}, {pipeline_mode = #tpu.pipeline_mode<synchronous>, transform_indices = @transform_11, window_bounds = array<i64: 8, 128>}]} {
    %c128_i32 = arith.constant 128 : i32
    %0 = arith.muli %arg1, %c128_i32 : i32
    %1 = tpu.assume_multiple %0, 128 : i32
    %c128_i32_0 = arith.constant 128 : i32
    %2 = arith.muli %arg2, %c128_i32_0 : i32
    %3 = tpu.assume_multiple %2, 128 : i32
    %c0_i32 = arith.constant 0 : i32
    %4 = arith.cmpi eq, %arg1, %c0_i32 : i32
    %5 = arith.extui %4 : i1 to i32
    %c0_i32_1 = arith.constant 0 : i32
    %6 = arith.cmpi ne, %5, %c0_i32_1 : i32
    scf.if %6 {
      %c0_i32_13 = arith.constant 0 : i32
      %26 = arith.cmpi eq, %arg2, %c0_i32_13 : i32
      %27 = arith.extui %26 : i1 to i32
      %c0_i32_14 = arith.constant 0 : i32
      %28 = arith.cmpi ne, %27, %c0_i32_14 : i32
      scf.if %28 {
        %cst_25 = arith.constant 0.000000e+00 : f32
        %49 = vector.broadcast %cst_25 : f32 to vector<2x64xf32>
        %c0_26 = arith.constant 0 : index
        %c0_27 = arith.constant 0 : index
        %50 = vector.load %arg20[%c0_26, %c0_27] : memref<2x64xf32, #tpu.memory_space<vmem>>, vector<2x64xf32>
        tpu.vector_store %arg20[%c0_26, %c0_27], %49 {strides = array<i32>} : memref<2x64xf32, #tpu.memory_space<vmem>>, vector<2x64xf32>,
      } else {
      }
      %c0_i32_15 = arith.constant 0 : i32
      %29 = arith.cmpi eq, %arg0, %c0_i32_15 : i32
      %30 = arith.extui %29 : i1 to i32
      %c0_i32_16 = arith.constant 0 : i32
      %31 = arith.cmpi ne, %30, %c0_i32_16 : i32
      scf.if %31 {
        %49 = arith.index_cast %3 : i32 to index
        %c0_25 = arith.constant 0 : index
        %50 = vector.load %arg4[%49, %c0_25] : memref<128x64xf32, #tpu.memory_space<vmem>>, vector<128x64xf32>
        %51 = arith.index_cast %3 : i32 to index
        %c0_26 = arith.constant 0 : index
        %52 = vector.load %arg15[%51, %c0_26] : memref<128x64xf32, #tpu.memory_space<vmem>>, vector<128x64xf32>
        tpu.vector_store %arg15[%51, %c0_26], %50 {strides = array<i32>} : memref<128x64xf32, #tpu.memory_space<vmem>>, vector<128x64xf32>,
      } else {
      }
      %c0_i32_17 = arith.constant 0 : i32
      %32 = arith.cmpi sgt, %arg0, %c0_i32_17 : i32
      %33 = arith.extui %32 : i1 to i32
      %c0_i32_18 = arith.constant 0 : i32
      %34 = arith.cmpi ne, %33, %c0_i32_18 : i32
      scf.if %34 {
        %49 = arith.index_cast %3 : i32 to index
        %c0_25 = arith.constant 0 : index
        %50 = vector.load %arg18[%49, %c0_25] : memref<128x64xbf16, #tpu.memory_space<vmem>>, vector<128x64xbf16>
        %51 = arith.extf %50 : vector<128x64xbf16> to vector<128x64xf32>
        %c0_26 = arith.constant 0 : index
        %c0_27 = arith.constant 0 : index
        %52 = vector.load %arg21[%c0_26, %c0_27] : memref<2x64xf32, #tpu.memory_space<vmem>>, vector<1x64xf32>
        %53 = vector.broadcast %52 : vector<1x64xf32> to vector<128x64xf32>
        %54 = arith.mulf %51, %53 : vector<128x64xf32>
        %c1 = arith.constant 1 : index
        %c0_28 = arith.constant 0 : index
        %55 = vector.load %arg21[%c1, %c0_28] : memref<2x64xf32, #tpu.memory_space<vmem>>, vector<1x64xf32>
        %56 = vector.broadcast %55 : vector<1x64xf32> to vector<128x64xf32>
        %57 = arith.addf %54, %56 : vector<128x64xf32>
        %cst_29 = arith.constant 0.000000e+00 : f32
        %58 = vector.broadcast %cst_29 : f32 to vector<128x64xf32>
        %59 = arith.maximumf %57, %58 : vector<128x64xf32>
        %c1_i32 = arith.constant 1 : i32
        %60 = arith.cmpi eq, %arg0, %c1_i32 : i32
        %cst_30 = arith.constant 0.000000e+00 : f32
        %cst_31 = arith.constant 1.000000e+00 : f32
        %61 = arith.select %60, %cst_30, %cst_31 : f32
        %62 = arith.index_cast %3 : i32 to index
        %c0_32 = arith.constant 0 : index
        %63 = vector.load %arg15[%62, %c0_32] : memref<128x64xf32, #tpu.memory_space<vmem>>, vector<128x64xf32>
        %64 = vector.broadcast %61 : f32 to vector<128x64xf32>
        %65 = arith.mulf %64, %63 : vector<128x64xf32>
        %66 = arith.addf %59, %65 : vector<128x64xf32>
        %67 = tpu.iota {dimensions = array<i32: 0>} : vector<128x1xi32>
        %68 = vector.broadcast %3 : i32 to vector<128x1xi32>
        %69 = arith.addi %67, %68 : vector<128x1xi32>
        %c32_i32 = arith.constant 32 : i32
        %70 = vector.broadcast %c32_i32 : i32 to vector<128x1xi32>
        %71 = arith.cmpi slt, %69, %70 : vector<128x1xi32>
        %72 = arith.extui %71 : vector<128x1xi1> to vector<128x1xi32>
        %73 = arith.sitofp %72 : vector<128x1xi32> to vector<128x1xf32>
        %74 = vector.broadcast %73 : vector<128x1xf32> to vector<128x64xf32>
        %75 = arith.mulf %66, %74 : vector<128x64xf32>
        %76 = arith.index_cast %3 : i32 to index
        %c0_33 = arith.constant 0 : index
        %77 = vector.load %arg15[%76, %c0_33] : memref<128x64xf32, #tpu.memory_space<vmem>>, vector<128x64xf32>
        tpu.vector_store %arg15[%76, %c0_33], %75 {strides = array<i32>} : memref<128x64xf32, #tpu.memory_space<vmem>>, vector<128x64xf32>,
      } else {
      }
      %35 = arith.index_cast %3 : i32 to index
      %c0_19 = arith.constant 0 : index
      %36 = vector.load %arg15[%35, %c0_19] : memref<128x64xf32, #tpu.memory_space<vmem>>, vector<128x64xf32>
      %37 = arith.truncf %36 : vector<128x64xf32> to vector<128x64xbf16>
      %c0_20 = arith.constant 0 : index
      %c0_21 = arith.constant 0 : index
      %c0_22 = arith.constant 0 : index
      %38 = vector.load %arg6[%c0_20, %c0_21, %c0_22] : memref<1x64x128xbf16, #tpu.memory_space<vmem>>, vector<1x64x128xbf16>
      %39 = vector.shape_cast %38 : vector<1x64x128xbf16> to vector<64x128xbf16>
      %cst = arith.constant dense<0.000000e+00> : vector<128x128xf32>
      %40 = tpu.matmul %37, %39, %cst {dimension_numbers = #tpu.dot_dimension_numbers<[1], [0], [0], [1], [0, 0, 1, 1], [], []>} : vector<128x64xbf16>, vector<64x128xbf16>, vector<128x128xf32> -> vector<128x128xf32>
      %41 = vector.extract_strided_slice %40 {offsets = [0, 0], sizes = [128, 64], strides = [1, 1]} : vector<128x128xf32> to vector<128x64xf32>
      %42 = arith.truncf %41 : vector<128x64xf32> to vector<128x64xbf16>
      %43 = arith.index_cast %3 : i32 to index
      %c0_23 = arith.constant 0 : index
      %44 = vector.load %arg16[%43, %c0_23] : memref<128x64xbf16, #tpu.memory_space<vmem>>, vector<128x64xbf16>
      tpu.vector_store %arg16[%43, %c0_23], %42 {strides = array<i32>} : memref<128x64xbf16, #tpu.memory_space<vmem>>, vector<128x64xbf16>,
      %45 = vector.extract_strided_slice %40 {offsets = [0, 64], sizes = [128, 64], strides = [1, 1]} : vector<128x128xf32> to vector<128x64xf32>
      %46 = arith.truncf %45 : vector<128x64xf32> to vector<128x64xbf16>
      %47 = arith.index_cast %3 : i32 to index
      %c0_24 = arith.constant 0 : index
      %48 = vector.load %arg17[%47, %c0_24] : memref<128x64xbf16, #tpu.memory_space<vmem>>, vector<128x64xbf16>
      tpu.vector_store %arg17[%47, %c0_24], %46 {strides = array<i32>} : memref<128x64xbf16, #tpu.memory_space<vmem>>, vector<128x64xbf16>,
    } else {
    }
    %c0_i32_2 = arith.constant 0 : i32
    %7 = arith.cmpi eq, %arg2, %c0_i32_2 : i32
    %8 = arith.extui %7 : i1 to i32
    %c0_i32_3 = arith.constant 0 : i32
    %9 = arith.cmpi ne, %8, %c0_i32_3 : i32
    scf.if %9 {
      %cst = arith.constant 0.000000e+00 : f32
      %26 = vector.broadcast %cst : f32 to vector<128x64xf32>
      %c0_13 = arith.constant 0 : index
      %c0_14 = arith.constant 0 : index
      %27 = vector.load %arg19[%c0_13, %c0_14] : memref<128x64xf32, #tpu.memory_space<vmem>>, vector<128x64xf32>
      tpu.vector_store %arg19[%c0_13, %c0_14], %26 {strides = array<i32>} : memref<128x64xf32, #tpu.memory_space<vmem>>, vector<128x64xf32>,
    } else {
    }
    %10 = arith.index_cast %3 : i32 to index
    %c0 = arith.constant 0 : index
    %11 = vector.load %arg16[%10, %c0] : memref<128x64xbf16, #tpu.memory_space<vmem>>, vector<128x64xbf16>
    %c0_i32_4 = arith.constant 0 : i32
    %12 = arith.cmpi eq, %arg0, %c0_i32_4 : i32
    %13 = arith.extui %12 : i1 to i32
    %c0_i32_5 = arith.constant 0 : i32
    %14 = arith.cmpi ne, %13, %c0_i32_5 : i32
    scf.if %14 {
      %c0_13 = arith.constant 0 : index
      %c0_14 = arith.constant 0 : index
      %26 = vector.load %arg3[%c0_13, %c0_14] : memref<128x128xbf16, #tpu.memory_space<vmem>>, vector<128x128xbf16>
      %27 = arith.index_cast %1 : i32 to index
      %28 = arith.index_cast %3 : i32 to index
      %29 = vector.load %arg22[%27, %28] : memref<128x128xbf16, #tpu.memory_space<vmem>>, vector<128x128xbf16>
      tpu.vector_store %arg22[%27, %28], %26 {strides = array<i32>} : memref<128x128xbf16, #tpu.memory_space<vmem>>, vector<128x128xbf16>,
      %c0_15 = arith.constant 0 : index
      %c0_16 = arith.constant 0 : index
      %30 = vector.load %arg19[%c0_15, %c0_16] : memref<128x64xf32, #tpu.memory_space<vmem>>, vector<128x64xf32>
      %c0_17 = arith.constant 0 : index
      %c0_18 = arith.constant 0 : index
      %31 = vector.load %arg3[%c0_17, %c0_18] : memref<128x128xbf16, #tpu.memory_space<vmem>>, vector<128x128xbf16>
      %cst = arith.constant dense<0.000000e+00> : vector<128x64xf32>
      %32 = tpu.matmul %31, %11, %cst {dimension_numbers = #tpu.dot_dimension_numbers<[1], [0], [0], [1], [0, 0, 1, 1], [], []>} : vector<128x128xbf16>, vector<128x64xbf16>, vector<128x64xf32> -> vector<128x64xf32>
      %33 = arith.addf %30, %32 : vector<128x64xf32>
      %c0_19 = arith.constant 0 : index
      %c0_20 = arith.constant 0 : index
      %34 = vector.load %arg19[%c0_19, %c0_20] : memref<128x64xf32, #tpu.memory_space<vmem>>, vector<128x64xf32>
      tpu.vector_store %arg19[%c0_19, %c0_20], %33 {strides = array<i32>} : memref<128x64xf32, #tpu.memory_space<vmem>>, vector<128x64xf32>,
    } else {
    }
    %c0_i32_6 = arith.constant 0 : i32
    %15 = arith.cmpi sgt, %arg0, %c0_i32_6 : i32
    %16 = arith.extui %15 : i1 to i32
    %c0_i32_7 = arith.constant 0 : i32
    %17 = arith.cmpi ne, %16, %c0_i32_7 : i32
    scf.if %17 {
      %c0_13 = arith.constant 0 : index
      %c0_14 = arith.constant 0 : index
      %26 = vector.load %arg19[%c0_13, %c0_14] : memref<128x64xf32, #tpu.memory_space<vmem>>, vector<128x64xf32>
      %27 = arith.index_cast %1 : i32 to index
      %28 = arith.index_cast %3 : i32 to index
      %29 = vector.load %arg22[%27, %28] : memref<128x128xbf16, #tpu.memory_space<vmem>>, vector<128x128xbf16>
      %cst = arith.constant dense<0.000000e+00> : vector<128x64xf32>
      %30 = tpu.matmul %29, %11, %cst {dimension_numbers = #tpu.dot_dimension_numbers<[1], [0], [0], [1], [0, 0, 1, 1], [], []>} : vector<128x128xbf16>, vector<128x64xbf16>, vector<128x64xf32> -> vector<128x64xf32>
      %31 = arith.addf %26, %30 : vector<128x64xf32>
      %c0_15 = arith.constant 0 : index
      %c0_16 = arith.constant 0 : index
      %32 = vector.load %arg19[%c0_15, %c0_16] : memref<128x64xf32, #tpu.memory_space<vmem>>, vector<128x64xf32>
      tpu.vector_store %arg19[%c0_15, %c0_16], %31 {strides = array<i32>} : memref<128x64xf32, #tpu.memory_space<vmem>>, vector<128x64xf32>,
    } else {
    }
    %c0_i32_8 = arith.constant 0 : i32
    %18 = arith.cmpi eq, %arg2, %c0_i32_8 : i32
    %19 = arith.extui %18 : i1 to i32
    %c0_i32_9 = arith.constant 0 : i32
    %20 = arith.cmpi ne, %19, %c0_i32_9 : i32
    scf.if %20 {
      %c0_13 = arith.constant 0 : index
      %c0_14 = arith.constant 0 : index
      %26 = vector.load %arg19[%c0_13, %c0_14] : memref<128x64xf32, #tpu.memory_space<vmem>>, vector<128x64xf32>
      %27 = arith.index_cast %1 : i32 to index
      %c0_15 = arith.constant 0 : index
      %28 = vector.load %arg17[%27, %c0_15] : memref<128x64xbf16, #tpu.memory_space<vmem>>, vector<128x64xbf16>
      %29 = arith.extf %28 : vector<128x64xbf16> to vector<128x64xf32>
      %30 = arith.addf %26, %29 : vector<128x64xf32>
      %c0_16 = arith.constant 0 : index
      %c0_17 = arith.constant 0 : index
      %c0_18 = arith.constant 0 : index
      %31 = vector.load %arg7[%c0_16, %c0_17, %c0_18] : memref<1x1x64xf32, #tpu.memory_space<vmem>>, vector<1x1x64xf32>
      %32 = vector.shape_cast %31 : vector<1x1x64xf32> to vector<1x64xf32>
      %33 = vector.broadcast %32 : vector<1x64xf32> to vector<128x64xf32>
      %34 = arith.addf %30, %33 : vector<128x64xf32>
      %cst = arith.constant 0.000000e+00 : f32
      %35 = vector.broadcast %cst : f32 to vector<128x64xf32>
      %36 = arith.maximumf %34, %35 : vector<128x64xf32>
      %37 = arith.truncf %36 : vector<128x64xf32> to vector<128x64xbf16>
      %38 = arith.index_cast %1 : i32 to index
      %c0_19 = arith.constant 0 : index
      %39 = vector.load %arg18[%38, %c0_19] : memref<128x64xbf16, #tpu.memory_space<vmem>>, vector<128x64xbf16>
      tpu.vector_store %arg18[%38, %c0_19], %37 {strides = array<i32>} : memref<128x64xbf16, #tpu.memory_space<vmem>>, vector<128x64xbf16>,
      %40 = tpu.iota {dimensions = array<i32: 0>} : vector<128x1xi32>
      %41 = vector.broadcast %1 : i32 to vector<128x1xi32>
      %42 = arith.addi %40, %41 : vector<128x1xi32>
      %c32_i32 = arith.constant 32 : i32
      %43 = vector.broadcast %c32_i32 : i32 to vector<128x1xi32>
      %44 = arith.cmpi slt, %42, %43 : vector<128x1xi32>
      %45 = arith.extui %44 : vector<128x1xi1> to vector<128x1xi32>
      %46 = arith.sitofp %45 : vector<128x1xi32> to vector<128x1xf32>
      %47 = vector.broadcast %46 : vector<128x1xf32> to vector<128x64xf32>
      %48 = arith.mulf %36, %47 : vector<128x64xf32>
      %c0_20 = arith.constant 0 : index
      %c0_21 = arith.constant 0 : index
      %49 = vector.load %arg20[%c0_20, %c0_21] : memref<2x64xf32, #tpu.memory_space<vmem>>, vector<2x64xf32>
      %cst_22 = arith.constant dense<0.000000e+00> : vector<64xf32>
      %50 = vector.multi_reduction <add>, %48, %cst_22 [0] : vector<128x64xf32> to vector<64xf32>
      %51 = vector.shape_cast %50 : vector<64xf32> to vector<1x64xf32>
      %52 = arith.mulf %48, %48 : vector<128x64xf32>
      %cst_23 = arith.constant dense<0.000000e+00> : vector<64xf32>
      %53 = vector.multi_reduction <add>, %52, %cst_23 [0] : vector<128x64xf32> to vector<64xf32>
      %54 = vector.shape_cast %53 : vector<64xf32> to vector<1x64xf32>
      %55 = tpu.concatenate %51, %54 in 0 : vector<1x64xf32>, vector<1x64xf32> -> vector<2x64xf32>
      %56 = arith.addf %49, %55 : vector<2x64xf32>
      %c0_24 = arith.constant 0 : index
      %c0_25 = arith.constant 0 : index
      %57 = vector.load %arg20[%c0_24, %c0_25] : memref<2x64xf32, #tpu.memory_space<vmem>>, vector<2x64xf32>
      tpu.vector_store %arg20[%c0_24, %c0_25], %56 {strides = array<i32>} : memref<2x64xf32, #tpu.memory_space<vmem>>, vector<2x64xf32>,
    } else {
    }
    %c0_i32_10 = arith.constant 0 : i32
    %21 = arith.cmpi eq, %arg1, %c0_i32_10 : i32
    %c0_i32_11 = arith.constant 0 : i32
    %22 = arith.cmpi eq, %arg2, %c0_i32_11 : i32
    %23 = arith.andi %21, %22 : i1
    %24 = arith.extui %23 : i1 to i32
    %c0_i32_12 = arith.constant 0 : i32
    %25 = arith.cmpi ne, %24, %c0_i32_12 : i32
    scf.if %25 {
      %c0_13 = arith.constant 0 : index
      %c0_14 = arith.constant 0 : index
      %26 = vector.load %arg20[%c0_13, %c0_14] : memref<2x64xf32, #tpu.memory_space<vmem>>, vector<1x64xf32>
      %cst = arith.constant 3.125000e-02 : f32
      %27 = vector.broadcast %cst : f32 to vector<1x64xf32>
      %28 = arith.mulf %26, %27 : vector<1x64xf32>
      %c1 = arith.constant 1 : index
      %c0_15 = arith.constant 0 : index
      %29 = vector.load %arg20[%c1, %c0_15] : memref<2x64xf32, #tpu.memory_space<vmem>>, vector<1x64xf32>
      %cst_16 = arith.constant 3.125000e-02 : f32
      %30 = vector.broadcast %cst_16 : f32 to vector<1x64xf32>
      %31 = arith.mulf %29, %30 : vector<1x64xf32>
      %32 = arith.mulf %28, %28 : vector<1x64xf32>
      %33 = arith.subf %31, %32 : vector<1x64xf32>
      %cst_17 = arith.constant 0.000000e+00 : f32
      %34 = vector.broadcast %cst_17 : f32 to vector<1x64xf32>
      %35 = arith.maximumf %33, %34 : vector<1x64xf32>
      %c0_18 = arith.constant 0 : index
      %c0_19 = arith.constant 0 : index
      %c0_20 = arith.constant 0 : index
      %36 = vector.load %arg8[%c0_18, %c0_19, %c0_20] : memref<1x1x64xf32, #tpu.memory_space<vmem>>, vector<1x1x64xf32>
      %37 = vector.shape_cast %36 : vector<1x1x64xf32> to vector<1x64xf32>
      %cst_21 = arith.constant 9.99999974E-6 : f32
      %38 = vector.broadcast %cst_21 : f32 to vector<1x64xf32>
      %39 = arith.addf %35, %38 : vector<1x64xf32>
      %40 = math.rsqrt %39 : vector<1x64xf32>
      %41 = arith.mulf %37, %40 : vector<1x64xf32>
      %c0_22 = arith.constant 0 : index
      %c0_23 = arith.constant 0 : index
      %42 = vector.load %arg21[%c0_22, %c0_23] : memref<2x64xf32, #tpu.memory_space<vmem>>, vector<1x64xf32>
      tpu.vector_store %arg21[%c0_22, %c0_23], %41 {strides = array<i32>} : memref<2x64xf32, #tpu.memory_space<vmem>>, vector<1x64xf32>,
      %c0_24 = arith.constant 0 : index
      %c0_25 = arith.constant 0 : index
      %c0_26 = arith.constant 0 : index
      %43 = vector.load %arg9[%c0_24, %c0_25, %c0_26] : memref<1x1x64xf32, #tpu.memory_space<vmem>>, vector<1x1x64xf32>
      %44 = vector.shape_cast %43 : vector<1x1x64xf32> to vector<1x64xf32>
      %45 = arith.mulf %28, %41 : vector<1x64xf32>
      %46 = arith.subf %44, %45 : vector<1x64xf32>
      %c1_27 = arith.constant 1 : index
      %c0_28 = arith.constant 0 : index
      %47 = vector.load %arg21[%c1_27, %c0_28] : memref<2x64xf32, #tpu.memory_space<vmem>>, vector<1x64xf32>
      tpu.vector_store %arg21[%c1_27, %c0_28], %46 {strides = array<i32>} : memref<2x64xf32, #tpu.memory_space<vmem>>, vector<1x64xf32>,
      %c2_i32 = arith.constant 2 : i32
      %48 = arith.cmpi eq, %arg0, %c2_i32 : i32
      %49 = arith.extui %48 : i1 to i32
      %c0_i32_29 = arith.constant 0 : i32
      %50 = arith.cmpi ne, %49, %c0_i32_29 : i32
      scf.if %50 {
        %c0_30 = arith.constant 0 : index
        %c0_31 = arith.constant 0 : index
        %51 = vector.load %arg21[%c0_30, %c0_31] : memref<2x64xf32, #tpu.memory_space<vmem>>, vector<1x64xf32>
        %c1_32 = arith.constant 1 : index
        %c0_33 = arith.constant 0 : index
        %52 = vector.load %arg21[%c1_32, %c0_33] : memref<2x64xf32, #tpu.memory_space<vmem>>, vector<1x64xf32>
        %c0_i32_34 = arith.constant 0 : i32
        %c128_i32_35 = arith.constant 128 : i32
        %53 = arith.muli %c0_i32_34, %c128_i32_35 : i32
        %54 = tpu.assume_multiple %53, 128 : i32
        %55 = arith.index_cast %54 : i32 to index
        %c0_36 = arith.constant 0 : index
        %56 = vector.load %arg18[%55, %c0_36] : memref<128x64xbf16, #tpu.memory_space<vmem>>, vector<128x64xbf16>
        %57 = arith.extf %56 : vector<128x64xbf16> to vector<128x64xf32>
        %58 = vector.broadcast %51 : vector<1x64xf32> to vector<128x64xf32>
        %59 = arith.mulf %57, %58 : vector<128x64xf32>
        %60 = vector.broadcast %52 : vector<1x64xf32> to vector<128x64xf32>
        %61 = arith.addf %59, %60 : vector<128x64xf32>
        %cst_37 = arith.constant 0.000000e+00 : f32
        %62 = vector.broadcast %cst_37 : f32 to vector<128x64xf32>
        %63 = arith.maximumf %61, %62 : vector<128x64xf32>
        %64 = arith.index_cast %54 : i32 to index
        %c0_38 = arith.constant 0 : index
        %65 = vector.load %arg15[%64, %c0_38] : memref<128x64xf32, #tpu.memory_space<vmem>>, vector<128x64xf32>
        %cst_39 = arith.constant 1.000000e+00 : f32
        %66 = vector.broadcast %cst_39 : f32 to vector<128x64xf32>
        %67 = arith.mulf %66, %65 : vector<128x64xf32>
        %68 = arith.addf %63, %67 : vector<128x64xf32>
        %69 = tpu.iota {dimensions = array<i32: 0>} : vector<128x1xi32>
        %70 = vector.broadcast %54 : i32 to vector<128x1xi32>
        %71 = arith.addi %69, %70 : vector<128x1xi32>
        %c32_i32 = arith.constant 32 : i32
        %72 = vector.broadcast %c32_i32 : i32 to vector<128x1xi32>
        %73 = arith.cmpi slt, %71, %72 : vector<128x1xi32>
        %74 = arith.extui %73 : vector<128x1xi1> to vector<128x1xi32>
        %75 = arith.sitofp %74 : vector<128x1xi32> to vector<128x1xf32>
        %76 = vector.broadcast %75 : vector<128x1xf32> to vector<128x64xf32>
        %77 = arith.mulf %68, %76 : vector<128x64xf32>
        %78 = arith.index_cast %54 : i32 to index
        %c0_40 = arith.constant 0 : index
        %79 = vector.load %arg15[%78, %c0_40] : memref<128x64xf32, #tpu.memory_space<vmem>>, vector<128x64xf32>
        tpu.vector_store %arg15[%78, %c0_40], %77 {strides = array<i32>} : memref<128x64xf32, #tpu.memory_space<vmem>>, vector<128x64xf32>,
        %c1_i32 = arith.constant 1 : i32
        %c0_41 = arith.constant 0 : index
        %c0_42 = arith.constant 0 : index
        %80 = vector.load %arg5[%c0_41, %c0_42] : memref<8x128xf32, #tpu.memory_space<vmem>>, vector<8x128xf32>
        %c0_43 = arith.constant 0 : index
        %c0_44 = arith.constant 0 : index
        %81 = vector.load %arg15[%c0_43, %c0_44] : memref<128x64xf32, #tpu.memory_space<vmem>>, vector<128x64xf32>
        %cst_45 = arith.constant dense<0.000000e+00> : vector<8x64xf32>
        %82 = tpu.matmul %80, %81, %cst_45 {dimension_numbers = #tpu.dot_dimension_numbers<[1], [0], [0], [1], [0, 0, 1, 1], [], []>} : vector<8x128xf32>, vector<128x64xf32>, vector<8x64xf32> -> vector<8x64xf32>
        %c0_46 = arith.constant 0 : index
        %c0_47 = arith.constant 0 : index
        %83 = vector.load %arg10[%c0_46, %c0_47] : memref<64x64xf32, #tpu.memory_space<vmem>>, vector<64x64xf32>
        %cst_48 = arith.constant dense<0.000000e+00> : vector<8x64xf32>
        %84 = tpu.matmul %82, %83, %cst_48 {dimension_numbers = #tpu.dot_dimension_numbers<[1], [0], [0], [1], [0, 0, 1, 1], [], []>} : vector<8x64xf32>, vector<64x64xf32>, vector<8x64xf32> -> vector<8x64xf32>
        %c0_49 = arith.constant 0 : index
        %c0_50 = arith.constant 0 : index
        %85 = vector.load %arg11[%c0_49, %c0_50] : memref<1x64xf32, #tpu.memory_space<vmem>>, vector<1x64xf32>
        %86 = vector.broadcast %85 : vector<1x64xf32> to vector<8x64xf32>
        %87 = arith.addf %84, %86 : vector<8x64xf32>
        %cst_51 = arith.constant 0.000000e+00 : f32
        %88 = vector.broadcast %cst_51 : f32 to vector<8x64xf32>
        %89 = arith.maximumf %87, %88 : vector<8x64xf32>
        %c0_52 = arith.constant 0 : index
        %c0_53 = arith.constant 0 : index
        %90 = vector.load %arg12[%c0_52, %c0_53] : memref<64x128xf32, #tpu.memory_space<vmem>>, vector<64x128xf32>
        %cst_54 = arith.constant dense<0.000000e+00> : vector<8x128xf32>
        %91 = tpu.matmul %89, %90, %cst_54 {dimension_numbers = #tpu.dot_dimension_numbers<[1], [0], [0], [1], [0, 0, 1, 1], [], []>} : vector<8x64xf32>, vector<64x128xf32>, vector<8x128xf32> -> vector<8x128xf32>
        %c0_55 = arith.constant 0 : index
        %c0_56 = arith.constant 0 : index
        %92 = vector.load %arg13[%c0_55, %c0_56] : memref<1x128xf32, #tpu.memory_space<vmem>>, vector<1x128xf32>
        %93 = vector.broadcast %92 : vector<1x128xf32> to vector<8x128xf32>
        %94 = arith.addf %91, %93 : vector<8x128xf32>
        %c0_57 = arith.constant 0 : index
        %c0_58 = arith.constant 0 : index
        %95 = vector.load %arg14[%c0_57, %c0_58] : memref<8x128xf32, #tpu.memory_space<vmem>>, vector<8x128xf32>
        tpu.vector_store %arg14[%c0_57, %c0_58], %94 {strides = array<i32>} : memref<8x128xf32, #tpu.memory_space<vmem>>, vector<8x128xf32>,
      } else {
      }
    } else {
    }
    return
  }
  func.func @transform_0(%arg0: i32, %arg1: i32, %arg2: i32) -> (i32, i32) {
    %c0_i32 = arith.constant 0 : i32
    %0 = arith.cmpi eq, %arg0, %c0_i32 : i32
    %c0_i32_0 = arith.constant 0 : i32
    %1 = arith.select %0, %arg1, %c0_i32_0 : i32
    %c0_i32_1 = arith.constant 0 : i32
    %2 = arith.cmpi eq, %arg0, %c0_i32_1 : i32
    %c0_i32_2 = arith.constant 0 : i32
    %3 = arith.select %2, %arg2, %c0_i32_2 : i32
    %c0_i32_3 = arith.constant 0 : i32
    return %1, %3 : i32, i32
  }
  func.func @transform_1(%arg0: i32, %arg1: i32, %arg2: i32) -> (i32, i32) {
    %c0_i32 = arith.constant 0 : i32
    %c0_i32_0 = arith.constant 0 : i32
    %c0_i32_1 = arith.constant 0 : i32
    return %c0_i32, %c0_i32_0 : i32, i32
  }
  func.func @transform_2(%arg0: i32, %arg1: i32, %arg2: i32) -> (i32, i32) {
    %c0_i32 = arith.constant 0 : i32
    %c0_i32_0 = arith.constant 0 : i32
    %c0_i32_1 = arith.constant 0 : i32
    return %c0_i32, %c0_i32_0 : i32, i32
  }
  func.func @transform_3(%arg0: i32, %arg1: i32, %arg2: i32) -> (i32, i32, i32) {
    %c0_i32 = arith.constant 0 : i32
    %c0_i32_0 = arith.constant 0 : i32
    %c0_i32_1 = arith.constant 0 : i32
    return %arg0, %c0_i32, %c0_i32_0 : i32, i32, i32
  }
  func.func @transform_4(%arg0: i32, %arg1: i32, %arg2: i32) -> (i32, i32, i32) {
    %c0_i32 = arith.constant 0 : i32
    %c0_i32_0 = arith.constant 0 : i32
    %c0_i32_1 = arith.constant 0 : i32
    return %arg0, %c0_i32, %c0_i32_0 : i32, i32, i32
  }
  func.func @transform_5(%arg0: i32, %arg1: i32, %arg2: i32) -> (i32, i32, i32) {
    %c0_i32 = arith.constant 0 : i32
    %c0_i32_0 = arith.constant 0 : i32
    %c0_i32_1 = arith.constant 0 : i32
    return %arg0, %c0_i32, %c0_i32_0 : i32, i32, i32
  }
  func.func @transform_6(%arg0: i32, %arg1: i32, %arg2: i32) -> (i32, i32, i32) {
    %c0_i32 = arith.constant 0 : i32
    %c0_i32_0 = arith.constant 0 : i32
    %c0_i32_1 = arith.constant 0 : i32
    return %arg0, %c0_i32, %c0_i32_0 : i32, i32, i32
  }
  func.func @transform_7(%arg0: i32, %arg1: i32, %arg2: i32) -> (i32, i32) {
    %c0_i32 = arith.constant 0 : i32
    %c0_i32_0 = arith.constant 0 : i32
    %c0_i32_1 = arith.constant 0 : i32
    return %c0_i32, %c0_i32_0 : i32, i32
  }
  func.func @transform_8(%arg0: i32, %arg1: i32, %arg2: i32) -> (i32, i32) {
    %c0_i32 = arith.constant 0 : i32
    %c0_i32_0 = arith.constant 0 : i32
    %c0_i32_1 = arith.constant 0 : i32
    return %c0_i32, %c0_i32_0 : i32, i32
  }
  func.func @transform_9(%arg0: i32, %arg1: i32, %arg2: i32) -> (i32, i32) {
    %c0_i32 = arith.constant 0 : i32
    %c0_i32_0 = arith.constant 0 : i32
    %c0_i32_1 = arith.constant 0 : i32
    return %c0_i32, %c0_i32_0 : i32, i32
  }
  func.func @transform_10(%arg0: i32, %arg1: i32, %arg2: i32) -> (i32, i32) {
    %c0_i32 = arith.constant 0 : i32
    %c0_i32_0 = arith.constant 0 : i32
    %c0_i32_1 = arith.constant 0 : i32
    return %c0_i32, %c0_i32_0 : i32, i32
  }
  func.func @transform_11(%arg0: i32, %arg1: i32, %arg2: i32) -> (i32, i32) {
    %c0_i32 = arith.constant 0 : i32
    %c0_i32_0 = arith.constant 0 : i32
    %c0_i32_1 = arith.constant 0 : i32
    return %c0_i32, %c0_i32_0 : i32, i32
  }
}

</mosaic_0001>

<llo_original>
// kernel: tpu_custom_call.1
$region0: #{tpu_custom_call.1}
  #allocation0 [shape = 'u32[]', space=smem, size = 0x4, offset = 0x4, fixed_abs, tag = 'smem constant byte address 0x4 - core index']
  #allocation1 [shape = 'u32[144,128]{1,0:T(1,128)}', space=vmem, size = 0x12000, scoped, tag = 'internal scratch']
  #allocation2 [shape = 'f32[128,64]{1,0:T(8,128)}', space=vmem, size = 0x10000, scoped, tag = 'scratch operand']
  #allocation3 [shape = 'bf16[128,64]{1,0:T(16,128)(2,1)}', space=vmem, size = 0x8000, scoped, tag = 'scratch operand']
  #allocation4 [shape = 'bf16[128,64]{1,0:T(16,128)(2,1)}', space=vmem, size = 0x8000, scoped, tag = 'scratch operand']
  #allocation5 [shape = 'bf16[128,64]{1,0:T(16,128)(2,1)}', space=vmem, size = 0x8000, scoped, tag = 'scratch operand']
  #allocation6 [shape = 'f32[128,64]{1,0:T(8,128)}', space=vmem, size = 0x10000, scoped, tag = 'scratch operand']
  #allocation7 [shape = 'f32[2,64]{1,0:T(2,128)}', space=vmem, size = 0x400, scoped, tag = 'scratch operand']
  #allocation8 [shape = 'f32[2,64]{1,0:T(2,128)}', space=vmem, size = 0x400, scoped, tag = 'scratch operand']
  #allocation9 [shape = 'bf16[128,128]{1,0:T(16,128)(2,1)}', space=vmem, size = 0x8000, scoped, tag = 'scratch operand']
  %s0 = inlined_call_operand.vmem [shape: bf16[128,128], index: 0, kind: input, shape index: {}]
  %s1 = inlined_call_operand.vmem [shape: f32[128,64], index: 1, kind: input, shape index: {}]
  %s2 = inlined_call_operand.hbm [shape: f32[8,128], index: 2, kind: input, shape index: {}]
  %s3 = inlined_call_operand.vmem [shape: bf16[3,64,128], index: 3, kind: input, shape index: {}]
  %s4 = inlined_call_operand.hbm [shape: f32[3,1,64], index: 4, kind: input, shape index: {}]
  %s5 = inlined_call_operand.hbm [shape: f32[3,1,64], index: 5, kind: input, shape index: {}]
  %s6 = inlined_call_operand.hbm [shape: f32[3,1,64], index: 6, kind: input, shape index: {}]
  %s7 = inlined_call_operand.hbm [shape: f32[64,64], index: 7, kind: input, shape index: {}]
  %s8 = inlined_call_operand.vmem [shape: f32[1,64], index: 8, kind: input, shape index: {}]
  %s9 = inlined_call_operand.vmem [shape: f32[64,128], index: 9, kind: input, shape index: {}]
  %s10 = inlined_call_operand.vmem [shape: f32[1,128], index: 10, kind: input, shape index: {}]
  %s11 = inlined_call_operand.hbm [shape: f32[8,128], index: 11, kind: output, shape index: {}]
  %s12 = sld [smem:[#allocation0]]
  $region137: #{tpu_custom_call.1} parent=0
    _
  %s14 = ssub.s32 1, %s12
  %s15 = scalar_select 0, %s14, %s12
  $region1: #{tpu_custom_call.1} parent=0
    #allocation10 [shape = 'u8[4096]{0}', space=vmem, size = 0x1000, scoped, tag = 'input window, operand 2, single buffered']
    #allocation11 [shape = 's32[2]{0}', space=sflag, size = 0x8, scoped, tag = 'scoped memory for tpu_custom_call.1']
    #allocation12 [shape = 's32[2]{0}', space=sflag, size = 0x8, scoped, tag = 'scoped memory for tpu_custom_call.1']
    #allocation13 [shape = 'u8[1024]{0}', space=vmem, size = 0x400, scoped, tag = 'input window, operand 4']
    #allocation14 [shape = 's32[2]{0}', space=sflag, size = 0x8, scoped, tag = 'scoped memory for tpu_custom_call.1']
    #allocation15 [shape = 'u8[1024]{0}', space=vmem, size = 0x400, scoped, tag = 'input window, operand 5']
    #allocation16 [shape = 'u8[1024]{0}', space=vmem, size = 0x400, scoped, tag = 'input window, operand 6']
    #allocation17 [shape = 's32[2]{0}', space=sflag, size = 0x8, scoped, tag = 'scoped memory for tpu_custom_call.1']
    #allocation18 [shape = 'u8[32768]{0}', space=vmem, size = 0x8000, scoped, tag = 'input window, operand 7, single buffered']
    #allocation19 [shape = 'u8[4096]{0}', space=vmem, size = 0x1000, scoped, tag = 'output window, operand 0, single buffered']
    %16 = vsyncpa [#allocation11], 0
    %17 = vsyncpa [#allocation14], 0
    %s18 = scalar_lea.sflag [#allocation14], 1
    %19 = vsyncpa %s18, 0
    %20 = vsyncpa [#allocation17], 0
    %s21 = scalar_lea.sflag [#allocation17], 1
    %22 = vsyncpa %s21, 0
    %23 = vsyncpa [#allocation12], 0
    loop: start=0, step=1, limit=5
    $region2: #{tpu_custom_call.1} parent=1 // loop_pre_header
      _
    $region3: #{tpu_custom_call.1} parent=1 // loop_header
      %s25 = sphi 0, %s29
      %p26 = scmp.ge.s32.totalorder %s25, 5
      %s32 = sphi 0, %s51
      %s33 = sphi 0, %s47
      %s34 = sphi 0, %s43
      %s35 = sphi 0, %s32
      %s36 = sphi 0, %s33
      %s37 = sphi 0, %s34
      %s38 = sphi 0, %s35
      %s39 = sphi 0, %s36
      %s40 = sphi 0, %s37
      %s62 = sphi 0, %s64
      %s65 = sphi 0, %s62
      %s66 = sphi 0, %s65
      %s82 = sphi 0, %s66
      %s86 = sphi 0, %s86
      %s88 = sphi 0, %s86
      %s89 = sphi 0, %s88
      %s103 = sphi 0, %s89
      %s107 = sphi 0, %s107
      %s109 = sphi 0, %s107
      %s110 = sphi 0, %s109
      %s124 = sphi 0, %s110
      %s130 = sphi 0, %s132
      %s133 = sphi 0, %s130
      %s134 = sphi 0, %s133
      %s150 = sphi 0, %s134
      %s156 = sphi 0, %s158
      %s159 = sphi 0, %s156
      %s160 = sphi 0, %s159
      %s176 = sphi 0, %s160
      %s182 = sphi 0, %s184
      %s185 = sphi 0, %s182
      %s186 = sphi 0, %s185
      %s202 = sphi 0, %s186
      %s208 = sphi 0, %s210
      %s211 = sphi 0, %s208
      %s212 = sphi 0, %s211
      %s228 = sphi 0, %s212
      %s232 = sphi 0, %s232
      %s234 = sphi 0, %s232
      %s235 = sphi 0, %s234
      %s249 = sphi 0, %s235
      %s253 = sphi 0, %s253
      %s255 = sphi 0, %s253
      %s256 = sphi 0, %s255
      %s270 = sphi 0, %s256
      %s274 = sphi 0, %s274
      %s276 = sphi 0, %s274
      %s277 = sphi 0, %s276
      %s291 = sphi 0, %s277
      %s295 = sphi 0, %s295
      %s297 = sphi 0, %s295
      %s298 = sphi 0, %s297
      %s312 = sphi 0, %s298
      %s316 = sphi 0, %s316
      %s318 = sphi 0, %s316
      %s319 = sphi 0, %s318
      %s333 = sphi 0, %s319
    $region4: #{tpu_custom_call.1} parent=1 // loop_header_branch
      %28 = sbr.rel (%p26) target = $region8
    $region5: #{tpu_custom_call.1} parent=1 // loop_body
      %s30 = ssub.s32 %s25, 1
      %s31 = ssub.s32 %s25, 2
      %s41 = sadd.s32 1, %s34
      %p42 = scmp.ge.s32.totalorder %s41, 1
      %s43 = scalar_select %p42, 0, %s41
      %s44 = sadd.s32 1, %s33
      %s45 = scalar_select %p42, %s44, %s33
      %p46 = scmp.ge.s32.totalorder %s45, 1
      %s47 = scalar_select %p46, 0, %s45
      %s48 = sadd.s32 1, %s32
      %s49 = scalar_select %p46, %s48, %s32
      %p50 = scmp.ge.s32.totalorder %s49, 3
      %s51 = scalar_select %p50, 0, %s49
      %p52 = scmp.eq.s32.totalorder %s32, 0
      %s53 = scalar_select %p52, %s33, 0
      %s54 = scalar_select %p52, %s34, 0
      %p55 = scmp.eq.s32.totalorder %s51, 0
      %s56 = scalar_select %p55, %s47, 0
      %s57 = scalar_select %p55, %s43, 0
      %s58 = ssub.s32 %s53, %s56
      %s59 = ssub.s32 %s54, %s57
      %s60 = sor.u32 %s58, %s59
      %p61 = scmp.eq.s32.totalorder %s60, 0
      %s63 = sadd.s32 %s62, 1
      %s64 = scalar_select %p61, %s62, %s63
      %p67 = pneg %p61
      %p68 = scmp.eq.s32.totalorder %s25, 2
      %p69 = por %p67, %p68
      %p70 = scmp.ne.s32.totalorder %s62, %s65
      %p71 = scmp.eq.s32.totalorder %s25, 0
      %p72 = por %p70, %p71
      %p73 = scmp.ne.s32.totalorder %s62, %s65
      %p74 = scmp.eq.s32.totalorder %s30, 2
      %p75 = por %p73, %p74
      %p76 = scmp.ne.s32.totalorder %s65, %s66
      %p77 = scmp.eq.s32.totalorder %s30, 0
      %p78 = por %p76, %p77
      %p79 = scmp.ne.s32.totalorder %s65, %s66
      %p80 = scmp.eq.s32.totalorder %s31, 2
      %p81 = por %p79, %p80
      %p83 = scmp.ne.s32.totalorder %s66, %s82
      %p84 = scmp.eq.s32.totalorder %s31, 0
      %p85 = por %p83, %p84
      %s87 = sadd.s32 %s86, 1
      %p90 = scmp.eq.s32.totalorder %s25, 2
      %p91 = scmp.ne.s32.totalorder %s86, %s88
      %p92 = scmp.eq.s32.totalorder %s25, 0
      %p93 = por %p91, %p92
      %p94 = scmp.ne.s32.totalorder %s86, %s88
      %p95 = scmp.eq.s32.totalorder %s30, 2
      %p96 = por %p94, %p95
      %p97 = scmp.ne.s32.totalorder %s88, %s89
      %p98 = scmp.eq.s32.totalorder %s30, 0
      %p99 = por %p97, %p98
      %p100 = scmp.ne.s32.totalorder %s88, %s89
      %p101 = scmp.eq.s32.totalorder %s31, 2
      %p102 = por %p100, %p101
      %p104 = scmp.ne.s32.totalorder %s89, %s103
      %p105 = scmp.eq.s32.totalorder %s31, 0
      %p106 = por %p104, %p105
      %s108 = sadd.s32 %s107, 1
      %p111 = scmp.eq.s32.totalorder %s25, 2
      %p112 = scmp.ne.s32.totalorder %s107, %s109
      %p113 = scmp.eq.s32.totalorder %s25, 0
      %p114 = por %p112, %p113
      %p115 = scmp.ne.s32.totalorder %s107, %s109
      %p116 = scmp.eq.s32.totalorder %s30, 2
      %p117 = por %p115, %p116
      %p118 = scmp.ne.s32.totalorder %s109, %s110
      %p119 = scmp.eq.s32.totalorder %s30, 0
      %p120 = por %p118, %p119
      %p121 = scmp.ne.s32.totalorder %s109, %s110
      %p122 = scmp.eq.s32.totalorder %s31, 2
      %p123 = por %p121, %p122
      %p125 = scmp.ne.s32.totalorder %s110, %s124
      %p126 = scmp.eq.s32.totalorder %s31, 0
      %p127 = por %p125, %p126
      %s128 = ssub.s32 %s32, %s51
      %p129 = scmp.eq.s32.totalorder %s128, 0
      %s131 = sadd.s32 %s130, 1
      %s132 = scalar_select %p129, %s130, %s131
      %p135 = pneg %p129
      %p136 = scmp.eq.s32.totalorder %s25, 2
      %p137 = por %p135, %p136
      %p138 = scmp.ne.s32.totalorder %s130, %s133
      %p139 = scmp.eq.s32.totalorder %s25, 0
      %p140 = por %p138, %p139
      %p141 = scmp.ne.s32.totalorder %s130, %s133
      %p142 = scmp.eq.s32.totalorder %s30, 2
      %p143 = por %p141, %p142
      %p144 = scmp.ne.s32.totalorder %s133, %s134
      %p145 = scmp.eq.s32.totalorder %s30, 0
      %p146 = por %p144, %p145
      %p147 = scmp.ne.s32.totalorder %s133, %s134
      %p148 = scmp.eq.s32.totalorder %s31, 2
      %p149 = por %p147, %p148
      %p151 = scmp.ne.s32.totalorder %s134, %s150
      %p152 = scmp.eq.s32.totalorder %s31, 0
      %p153 = por %p151, %p152
      %s154 = ssub.s32 %s32, %s51
      %p155 = scmp.eq.s32.totalorder %s154, 0
      %s157 = sadd.s32 %s156, 1
      %s158 = scalar_select %p155, %s156, %s157
      %p161 = pneg %p155
      %p162 = scmp.eq.s32.totalorder %s25, 2
      %p163 = por %p161, %p162
      %p164 = scmp.ne.s32.totalorder %s156, %s159
      %p165 = scmp.eq.s32.totalorder %s25, 0
      %p166 = por %p164, %p165
      %p167 = scmp.ne.s32.totalorder %s156, %s159
      %p168 = scmp.eq.s32.totalorder %s30, 2
      %p169 = por %p167, %p168
      %p170 = scmp.ne.s32.totalorder %s159, %s160
      %p171 = scmp.eq.s32.totalorder %s30, 0
      %p172 = por %p170, %p171
      %p173 = scmp.ne.s32.totalorder %s159, %s160
      %p174 = scmp.eq.s32.totalorder %s31, 2
      %p175 = por %p173, %p174
      %p177 = scmp.ne.s32.totalorder %s160, %s176
      %p178 = scmp.eq.s32.totalorder %s31, 0
      %p179 = por %p177, %p178
      %s180 = ssub.s32 %s32, %s51
      %p181 = scmp.eq.s32.totalorder %s180, 0
      %s183 = sadd.s32 %s182, 1
      %s184 = scalar_select %p181, %s182, %s183
      %p187 = pneg %p181
      %p188 = scmp.eq.s32.totalorder %s25, 2
      %p189 = por %p187, %p188
      %p190 = scmp.ne.s32.totalorder %s182, %s185
      %p191 = scmp.eq.s32.totalorder %s25, 0
      %p192 = por %p190, %p191
      %p193 = scmp.ne.s32.totalorder %s182, %s185
      %p194 = scmp.eq.s32.totalorder %s30, 2
      %p195 = por %p193, %p194
      %p196 = scmp.ne.s32.totalorder %s185, %s186
      %p197 = scmp.eq.s32.totalorder %s30, 0
      %p198 = por %p196, %p197
      %p199 = scmp.ne.s32.totalorder %s185, %s186
      %p200 = scmp.eq.s32.totalorder %s31, 2
      %p201 = por %p199, %p200
      %p203 = scmp.ne.s32.totalorder %s186, %s202
      %p204 = scmp.eq.s32.totalorder %s31, 0
      %p205 = por %p203, %p204
      %s206 = ssub.s32 %s32, %s51
      %p207 = scmp.eq.s32.totalorder %s206, 0
      %s209 = sadd.s32 %s208, 1
      %s210 = scalar_select %p207, %s208, %s209
      %p213 = pneg %p207
      %p214 = scmp.eq.s32.totalorder %s25, 2
      %p215 = por %p213, %p214
      %p216 = scmp.ne.s32.totalorder %s208, %s211
      %p217 = scmp.eq.s32.totalorder %s25, 0
      %p218 = por %p216, %p217
      %p219 = scmp.ne.s32.totalorder %s208, %s211
      %p220 = scmp.eq.s32.totalorder %s30, 2
      %p221 = por %p219, %p220
      %p222 = scmp.ne.s32.totalorder %s211, %s212
      %p223 = scmp.eq.s32.totalorder %s30, 0
      %p224 = por %p222, %p223
      %p225 = scmp.ne.s32.totalorder %s211, %s212
      %p226 = scmp.eq.s32.totalorder %s31, 2
      %p227 = por %p225, %p226
      %p229 = scmp.ne.s32.totalorder %s212, %s228
      %p230 = scmp.eq.s32.totalorder %s31, 0
      %p231 = por %p229, %p230
      %s233 = sadd.s32 %s232, 1
      %p236 = scmp.eq.s32.totalorder %s25, 2
      %p237 = scmp.ne.s32.totalorder %s232, %s234
      %p238 = scmp.eq.s32.totalorder %s25, 0
      %p239 = por %p237, %p238
      %p240 = scmp.ne.s32.totalorder %s232, %s234
      %p241 = scmp.eq.s32.totalorder %s30, 2
      %p242 = por %p240, %p241
      %p243 = scmp.ne.s32.totalorder %s234, %s235
      %p244 = scmp.eq.s32.totalorder %s30, 0
      %p245 = por %p243, %p244
      %p246 = scmp.ne.s32.totalorder %s234, %s235
      %p247 = scmp.eq.s32.totalorder %s31, 2
      %p248 = por %p246, %p247
      %p250 = scmp.ne.s32.totalorder %s235, %s249
      %p251 = scmp.eq.s32.totalorder %s31, 0
      %p252 = por %p250, %p251
      %s254 = sadd.s32 %s253, 1
      %p257 = scmp.eq.s32.totalorder %s25, 2
      %p258 = scmp.ne.s32.totalorder %s253, %s255
      %p259 = scmp.eq.s32.totalorder %s25, 0
      %p260 = por %p258, %p259
      %p261 = scmp.ne.s32.totalorder %s253, %s255
      %p262 = scmp.eq.s32.totalorder %s30, 2
      %p263 = por %p261, %p262
      %p264 = scmp.ne.s32.totalorder %s255, %s256
      %p265 = scmp.eq.s32.totalorder %s30, 0
      %p266 = por %p264, %p265
      %p267 = scmp.ne.s32.totalorder %s255, %s256
      %p268 = scmp.eq.s32.totalorder %s31, 2
      %p269 = por %p267, %p268
      %p271 = scmp.ne.s32.totalorder %s256, %s270
      %p272 = scmp.eq.s32.totalorder %s31, 0
      %p273 = por %p271, %p272
      %s275 = sadd.s32 %s274, 1
      %p278 = scmp.eq.s32.totalorder %s25, 2
      %p279 = scmp.ne.s32.totalorder %s274, %s276
      %p280 = scmp.eq.s32.totalorder %s25, 0
      %p281 = por %p279, %p280
      %p282 = scmp.ne.s32.totalorder %s274, %s276
      %p283 = scmp.eq.s32.totalorder %s30, 2
      %p284 = por %p282, %p283
      %p285 = scmp.ne.s32.totalorder %s276, %s277
      %p286 = scmp.eq.s32.totalorder %s30, 0
      %p287 = por %p285, %p286
      %p288 = scmp.ne.s32.totalorder %s276, %s277
      %p289 = scmp.eq.s32.totalorder %s31, 2
      %p290 = por %p288, %p289
      %p292 = scmp.ne.s32.totalorder %s277, %s291
      %p293 = scmp.eq.s32.totalorder %s31, 0
      %p294 = por %p292, %p293
      %s296 = sadd.s32 %s295, 1
      %p299 = scmp.eq.s32.totalorder %s25, 2
      %p300 = scmp.ne.s32.totalorder %s295, %s297
      %p301 = scmp.eq.s32.totalorder %s25, 0
      %p302 = por %p300, %p301
      %p303 = scmp.ne.s32.totalorder %s295, %s297
      %p304 = scmp.eq.s32.totalorder %s30, 2
      %p305 = por %p303, %p304
      %p306 = scmp.ne.s32.totalorder %s297, %s298
      %p307 = scmp.eq.s32.totalorder %s30, 0
      %p308 = por %p306, %p307
      %p309 = scmp.ne.s32.totalorder %s297, %s298
      %p310 = scmp.eq.s32.totalorder %s31, 2
      %p311 = por %p309, %p310
      %p313 = scmp.ne.s32.totalorder %s298, %s312
      %p314 = scmp.eq.s32.totalorder %s31, 0
      %p315 = por %p313, %p314
      %s317 = sadd.s32 %s316, 1
      %p320 = scmp.eq.s32.totalorder %s25, 2
      %p321 = scmp.ne.s32.totalorder %s316, %s318
      %p322 = scmp.eq.s32.totalorder %s25, 0
      %p323 = por %p321, %p322
      %p324 = scmp.ne.s32.totalorder %s316, %s318
      %p325 = scmp.eq.s32.totalorder %s30, 2
      %p326 = por %p324, %p325
      %p327 = scmp.ne.s32.totalorder %s318, %s319
      %p328 = scmp.eq.s32.totalorder %s30, 0
      %p329 = por %p327, %p328
      %p330 = scmp.ne.s32.totalorder %s318, %s319
      %p331 = scmp.eq.s32.totalorder %s31, 2
      %p332 = por %p330, %p331
      %p334 = scmp.ne.s32.totalorder %s319, %s333
      %p335 = scmp.eq.s32.totalorder %s31, 0
      %p336 = por %p334, %p335
      %p337 = scmp.le.s32.totalorder 1, %s25
      %p338 = scmp.lt.s32.totalorder %s25, 4
      %p339 = pnand %p337, %p338
      %p340 = pneg %p339
      // Predicated region
      $region9: #{tpu_custom_call.1} parent=5 // pred_check
        _
      $region10: #{tpu_custom_call.1} parent=5 // pred_check_branch
        %342 = sbr.rel (%p339) target = $region12
      $region11: #{tpu_custom_call.1} parent=5 // pred_region
        %s343 = ssub.s32 %s25, 1
        // Predicated region
        $region13: #{tpu_custom_call.1} parent=11 // pred_check
          %p344 = pneg %p99
        $region14: #{tpu_custom_call.1} parent=11 // pred_check_branch
          %346 = sbr.rel (%p344) target = $region16
        $region15: #{tpu_custom_call.1} parent=11 // pred_region
          _
        $region16: #{tpu_custom_call.1} parent=11 // pred_fallthru
          _
        // Predicated region
        $region17: #{tpu_custom_call.1} parent=11 // pred_check
          %p347 = pneg %p120
        $region18: #{tpu_custom_call.1} parent=11 // pred_check_branch
          %349 = sbr.rel (%p347) target = $region20
        $region19: #{tpu_custom_call.1} parent=11 // pred_region
          %s351 = ssub.s32 128, 128
          %352 = vsyncadd [#allocation11], %s351
          %s354 = sshll.u32 [#allocation10], 4
          %s355 = int_to_ptr.vmem [resolvable:$true] %s354
          %357 = dma.hbm_to_vmem [thread:$0]  %s2, 128, %s355, [#allocation11]
        $region20: #{tpu_custom_call.1} parent=11 // pred_fallthru
          _
        // Predicated region
        $region21: #{tpu_custom_call.1} parent=11 // pred_check
          %p358 = pneg %p245
        $region22: #{tpu_custom_call.1} parent=11 // pred_check_branch
          %360 = sbr.rel (%p358) target = $region24
        $region23: #{tpu_custom_call.1} parent=11 // pred_region
          %s362 = ssub.s32 1024, 1024
          %363 = vsyncadd [#allocation17], %s362
          %s364 = sshll.u32 [#allocation18], 4
          %s365 = int_to_ptr.vmem [resolvable:$true] %s364
          %370 = dma.hbm_to_vmem [thread:$0]  %s7, 1024, %s365, [#allocation17], 128, 128, 8
        $region24: #{tpu_custom_call.1} parent=11 // pred_fallthru
          _
        // Predicated region
        $region25: #{tpu_custom_call.1} parent=11 // pred_check
          %p371 = pneg %p266
        $region26: #{tpu_custom_call.1} parent=11 // pred_check_branch
          %373 = sbr.rel (%p371) target = $region28
        $region27: #{tpu_custom_call.1} parent=11 // pred_region
          _
        $region28: #{tpu_custom_call.1} parent=11 // pred_fallthru
          _
        // Predicated region
        $region29: #{tpu_custom_call.1} parent=11 // pred_check
          %p374 = pneg %p287
        $region30: #{tpu_custom_call.1} parent=11 // pred_check_branch
          %376 = sbr.rel (%p374) target = $region32
        $region31: #{tpu_custom_call.1} parent=11 // pred_region
          _
        $region32: #{tpu_custom_call.1} parent=11 // pred_fallthru
          _
        // Predicated region
        $region33: #{tpu_custom_call.1} parent=11 // pred_check
          %p377 = pneg %p308
        $region34: #{tpu_custom_call.1} parent=11 // pred_check_branch
          %379 = sbr.rel (%p377) target = $region36
        $region35: #{tpu_custom_call.1} parent=11 // pred_region
          _
        $region36: #{tpu_custom_call.1} parent=11 // pred_fallthru
          _
      $region12: #{tpu_custom_call.1} parent=5 // pred_fallthru
        _
      %p380 = scmp.lt.s32.totalorder %s25, 3
      // Predicated region
      $region37: #{tpu_custom_call.1} parent=5 // pred_check
        %p381 = pneg %p380
      $region38: #{tpu_custom_call.1} parent=5 // pred_check_branch
        %383 = sbr.rel (%p381) target = $region40
      $region39: #{tpu_custom_call.1} parent=5 // pred_region
        // Predicated region
        $region41: #{tpu_custom_call.1} parent=39 // pred_check
          %p384 = pneg %p72
        $region42: #{tpu_custom_call.1} parent=39 // pred_check_branch
          %386 = sbr.rel (%p384) target = $region44
        $region43: #{tpu_custom_call.1} parent=39 // pred_region
          %p387 = scmp.eq.s32.totalorder %s32, 0
          %s388 = scalar_select %p387, %s33, 0
          %s389 = scalar_select %p387, %s34, 0
          %s390 = smul.u32 16, %s388
          %p391 = scmp.lt.s32.totalorder %s390, 15
          %s392 = scalar_select %p391, %s390, 15
          %p393 = scmp.lt.s32.totalorder %s389, 0
          %s394 = scalar_select %p393, %s389, 0
          %s395 = sadd.s32 %s394, %s392
          %s396 = smul.addr %s395, 4
          %s397 = scalar_lea.vmem %s0, %s396
          %p398 = scmp.eq.s32.totalorder %s32, 0
          %s399 = scalar_select %p398, %s33, 0
          %s400 = scalar_select %p398, %s34, 0
          %s401 = smul.u32 16, %s399
        $region44: #{tpu_custom_call.1} parent=39 // pred_fallthru
          _
        // Predicated region
        $region45: #{tpu_custom_call.1} parent=39 // pred_check
          %p402 = pneg %p140
        $region46: #{tpu_custom_call.1} parent=39 // pred_check_branch
          %404 = sbr.rel (%p402) target = $region48
        $region47: #{tpu_custom_call.1} parent=39 // pred_region
          %p405 = scmp.lt.s32.totalorder %s32, 2
          %s406 = scalar_select %p405, %s32, 2
          %s407 = smul.addr %s406, 8
          %s408 = smul.addr %s407, 4
          %s409 = scalar_lea.vmem %s3, %s408
        $region48: #{tpu_custom_call.1} parent=39 // pred_fallthru
          _
        // Predicated region
        $region49: #{tpu_custom_call.1} parent=39 // pred_check
          %p410 = pneg %p166
        $region50: #{tpu_custom_call.1} parent=39 // pred_check_branch
          %412 = sbr.rel (%p410) target = $region52
        $region51: #{tpu_custom_call.1} parent=39 // pred_region
          %s413 = sand.u32 %s25, 1
          %s414 = scalar_lea.sflag [#allocation14], %s413
          %s415 = sand.u32 %s156, 1
          %s416 = scalar_lea.vmem [#allocation13], %s415
          %s418 = ssub.s32 16, 16
          %419 = vsyncadd %s414, %s418
          %s420 = smul.addr %s32, 16
          %s421 = scalar_lea.hbm %s4, %s420
          %s423 = sshll.u32 %s416, 4
          %s424 = int_to_ptr.vmem [resolvable:$true] %s423
          %426 = dma.hbm_to_vmem [thread:$0]  %s421, 16, %s424, %s414
        $region52: #{tpu_custom_call.1} parent=39 // pred_fallthru
          _
        // Predicated region
        $region53: #{tpu_custom_call.1} parent=39 // pred_check
          %p427 = pneg %p192
        $region54: #{tpu_custom_call.1} parent=39 // pred_check_branch
          %429 = sbr.rel (%p427) target = $region56
        $region55: #{tpu_custom_call.1} parent=39 // pred_region
          %s430 = sand.u32 %s25, 1
          %s431 = scalar_lea.sflag [#allocation14], %s430
          %s432 = sand.u32 %s182, 1
          %s433 = scalar_lea.vmem [#allocation15], %s432
          %s435 = ssub.s32 16, 16
          %436 = vsyncadd %s431, %s435
          %s437 = smul.addr %s32, 16
          %s438 = scalar_lea.hbm %s5, %s437
          %s440 = sshll.u32 %s433, 4
          %s441 = int_to_ptr.vmem [resolvable:$true] %s440
          %443 = dma.hbm_to_vmem [thread:$0]  %s438, 16, %s441, %s431
        $region56: #{tpu_custom_call.1} parent=39 // pred_fallthru
          _
        // Predicated region
        $region57: #{tpu_custom_call.1} parent=39 // pred_check
          %p444 = pneg %p218
        $region58: #{tpu_custom_call.1} parent=39 // pred_check_branch
          %446 = sbr.rel (%p444) target = $region60
        $region59: #{tpu_custom_call.1} parent=39 // pred_region
          %s447 = sand.u32 %s25, 1
          %s448 = scalar_lea.sflag [#allocation17], %s447
          %s449 = sand.u32 %s208, 1
          %s450 = scalar_lea.vmem [#allocation16], %s449
          %s452 = ssub.s32 16, 16
          %453 = vsyncadd %s448, %s452
          %s454 = smul.addr %s32, 16
          %s455 = scalar_lea.hbm %s6, %s454
          %s457 = sshll.u32 %s450, 4
          %s458 = int_to_ptr.vmem [resolvable:$true] %s457
          %460 = dma.hbm_to_vmem [thread:$0]  %s455, 16, %s458, %s448
        $region60: #{tpu_custom_call.1} parent=39 // pred_fallthru
          _
      $region40: #{tpu_custom_call.1} parent=5 // pred_fallthru
        _
      %p461 = scmp.le.s32.totalorder 1, %s25
      %p462 = scmp.lt.s32.totalorder %s25, 4
      %p463 = pnand %p461, %p462
      %p464 = pneg %p463
      // Predicated region
      $region61: #{tpu_custom_call.1} parent=5 // pred_check
        _
      $region62: #{tpu_custom_call.1} parent=5 // pred_check_branch
        %466 = sbr.rel (%p463) target = $region64
      $region63: #{tpu_custom_call.1} parent=5 // pred_region
        %s467 = ssub.s32 %s25, 1
        // Predicated region
        $region65: #{tpu_custom_call.1} parent=63 // pred_check
          %p468 = pneg %p120
        $region66: #{tpu_custom_call.1} parent=63 // pred_check_branch
          %470 = sbr.rel (%p468) target = $region68
        $region67: #{tpu_custom_call.1} parent=63 // pred_region
          %471 = dma.done [#allocation11], 128
        $region68: #{tpu_custom_call.1} parent=63 // pred_fallthru
          _
        %s472 = sand.u32 %s30, 1
        %s473 = scalar_lea.sflag [#allocation14], %s472
        %s474 = sand.u32 %s159, 1
        %s475 = scalar_lea.vmem [#allocation13], %s474
        // Predicated region
        $region69: #{tpu_custom_call.1} parent=63 // pred_check
          %p476 = pneg %p172
        $region70: #{tpu_custom_call.1} parent=63 // pred_check_branch
          %478 = sbr.rel (%p476) target = $region72
        $region71: #{tpu_custom_call.1} parent=63 // pred_region
          %479 = dma.done %s473, 16
        $region72: #{tpu_custom_call.1} parent=63 // pred_fallthru
          _
        %s480 = sand.u32 %s30, 1
        %s481 = scalar_lea.sflag [#allocation14], %s480
        %s482 = sand.u32 %s185, 1
        %s483 = scalar_lea.vmem [#allocation15], %s482
        // Predicated region
        $region73: #{tpu_custom_call.1} parent=63 // pred_check
          %p484 = pneg %p198
        $region74: #{tpu_custom_call.1} parent=63 // pred_check_branch
          %486 = sbr.rel (%p484) target = $region76
        $region75: #{tpu_custom_call.1} parent=63 // pred_region
          %487 = dma.done %s481, 16
        $region76: #{tpu_custom_call.1} parent=63 // pred_fallthru
          _
        %s488 = sand.u32 %s30, 1
        %s489 = scalar_lea.sflag [#allocation17], %s488
        %s490 = sand.u32 %s211, 1
        %s491 = scalar_lea.vmem [#allocation16], %s490
        // Predicated region
        $region77: #{tpu_custom_call.1} parent=63 // pred_check
          %p492 = pneg %p224
        $region78: #{tpu_custom_call.1} parent=63 // pred_check_branch
          %494 = sbr.rel (%p492) target = $region80
        $region79: #{tpu_custom_call.1} parent=63 // pred_region
          %495 = dma.done %s489, 16
        $region80: #{tpu_custom_call.1} parent=63 // pred_fallthru
          _
        // Predicated region
        $region81: #{tpu_custom_call.1} parent=63 // pred_check
          %p496 = pneg %p245
        $region82: #{tpu_custom_call.1} parent=63 // pred_check_branch
          %498 = sbr.rel (%p496) target = $region84
        $region83: #{tpu_custom_call.1} parent=63 // pred_region
          %499 = dma.done [#allocation17], 1024
        $region84: #{tpu_custom_call.1} parent=63 // pred_fallthru
          _
        %p500 = scmp.eq.s32.totalorder %s35, 0
        %s501 = scalar_select %p500, %s36, 0
        %s502 = scalar_select %p500, %s37, 0
        %s503 = smul.u32 16, %s501
        %p504 = scmp.lt.s32.totalorder %s503, 15
        %s505 = scalar_select %p504, %s503, 15
        %p506 = scmp.lt.s32.totalorder %s502, 0
        %s507 = scalar_select %p506, %s502, 0
        %s508 = sadd.s32 %s507, %s505
        %s509 = smul.addr %s508, 4
        %s510 = scalar_lea.vmem %s0, %s509
        %p511 = pneg %p78
        %p512 = pneg %p75
        %p513 = pneg %p99
        %p514 = pneg %p96
        %p515 = pneg %p120
        %p516 = pneg %p117
        %p517 = scmp.lt.s32.totalorder %s35, 2
        %s518 = scalar_select %p517, %s35, 2
        %s519 = smul.addr %s518, 8
        %s520 = smul.addr %s519, 4
        %s521 = scalar_lea.vmem %s3, %s520
        %p522 = pneg %p146
        %p523 = pneg %p143
        %s524 = sand.u32 %s30, 1
        %s525 = scalar_lea.sflag [#allocation14], %s524
        %s526 = sand.u32 %s159, 1
        %s527 = scalar_lea.vmem [#allocation13], %s526
        %p528 = pneg %p172
        %p529 = pneg %p169
        %s530 = sand.u32 %s30, 1
        %s531 = scalar_lea.sflag [#allocation14], %s530
        %s532 = sand.u32 %s185, 1
        %s533 = scalar_lea.vmem [#allocation15], %s532
        %p534 = pneg %p198
        %p535 = pneg %p195
        %s536 = sand.u32 %s30, 1
        %s537 = scalar_lea.sflag [#allocation17], %s536
        %s538 = sand.u32 %s211, 1
        %s539 = scalar_lea.vmem [#allocation16], %s538
        %p540 = pneg %p224
        %p541 = pneg %p221
        %p542 = pneg %p245
        %p543 = pneg %p242
        %p544 = pneg %p266
        %p545 = pneg %p263
        %p546 = pneg %p287
        %p547 = pneg %p284
        %p548 = pneg %p308
        %p549 = pneg %p305
        %p550 = pneg %p329
        %p551 = pneg %p326
        %p552 = scmp.eq.s32.totalorder %s35, 0
        %s553 = scalar_select %p552, %s36, 0
        %s554 = scalar_select %p552, %s37, 0
        %s555 = smul.u32 16, %s553
        %p556 = scmp.lt.s32.totalorder %s555, 15
        %s557 = scalar_select %p556, %s555, 15
        %p558 = scmp.lt.s32.totalorder %s554, 0
        %s559 = scalar_select %p558, %s554, 0
        %s560 = sadd.s32 %s559, %s557
        %s561 = smul.addr %s560, 4
        %s562 = scalar_lea.vmem %s0, %s561
        %p563 = scmp.eq.s32.totalorder %s35, 0
        %s564 = scalar_select %p563, %s36, 0
        %s565 = scalar_select %p563, %s37, 0
        %s566 = smul.u32 16, %s564
        %p567 = scmp.lt.s32.totalorder %s35, 2
        %s568 = scalar_select %p567, %s35, 2
        %s569 = smul.addr %s568, 8
        %s570 = smul.addr %s569, 4
        %s571 = scalar_lea.vmem %s3, %s570
        %s573 = smul.u32 %s36, 128
        %s574 = smul.u32 %s37, 128
        %p575 = scmp.eq.s32.totalorder %s36, 0
        // Predicated region
        $region85: #{tpu_custom_call.1} parent=63 // pred_check
          %p576 = pneg %p575
        $region86: #{tpu_custom_call.1} parent=63 // pred_check_branch
          %578 = sbr.rel (%p576) target = $region88
        $region87: #{tpu_custom_call.1} parent=63 // pred_region
          %p579 = scmp.eq.s32.totalorder %s37, 0
          // Predicated region
          $region89: #{tpu_custom_call.1} parent=87 // pred_check
            %p580 = pneg %p579
          $region90: #{tpu_custom_call.1} parent=87 // pred_check_branch
            %582 = sbr.rel (%p580) target = $region92
          $region91: #{tpu_custom_call.1} parent=87 // pred_region
            %vm583 = vcmask 517120
            %584 = vst.msk [vmem:[#allocation7] sm:$0x3] %vm583, 0.0
          $region92: #{tpu_custom_call.1} parent=87 // pred_fallthru
            _
          %p585 = scmp.eq.s32.totalorder %s35, 0
          // Predicated region
          $region93: #{tpu_custom_call.1} parent=87 // pred_check
            %p586 = pneg %p585
          $region94: #{tpu_custom_call.1} parent=87 // pred_check_branch
            %588 = sbr.rel (%p586) target = $region96
          $region95: #{tpu_custom_call.1} parent=87 // pred_region
            %s589 = scalar_lea.vmem %s1, %s574
            %v590 = vld [vmem:[%s589] sm:$0xff]
            %v591 = vld [vmem:[%s589 + $0x8] sm:$0xff]
            %v592 = vld [vmem:[%s589 + $0x10] sm:$0xff]
            %v593 = vld [vmem:[%s589 + $0x18] sm:$0xff]
            %v594 = vld [vmem:[%s589 + $0x20] sm:$0xff]
            %v595 = vld [vmem:[%s589 + $0x28] sm:$0xff]
            %v596 = vld [vmem:[%s589 + $0x30] sm:$0xff]
            %v597 = vld [vmem:[%s589 + $0x38] sm:$0xff]
            %v598 = vld [vmem:[%s589 + $0x40] sm:$0xff]
            %v599 = vld [vmem:[%s589 + $0x48] sm:$0xff]
            %v600 = vld [vmem:[%s589 + $0x50] sm:$0xff]
            %v601 = vld [vmem:[%s589 + $0x58] sm:$0xff]
            %v602 = vld [vmem:[%s589 + $0x60] sm:$0xff]
            %v603 = vld [vmem:[%s589 + $0x68] sm:$0xff]
            %v604 = vld [vmem:[%s589 + $0x70] sm:$0xff]
            %v605 = vld [vmem:[%s589 + $0x78] sm:$0xff]
            %s606 = scalar_lea.vmem [#allocation2], %s574
            %vm607 = vcmask 523264
            %608 = vst.msk [vmem:[%s606] sm:$0xff] %vm607, %v590
            %609 = vst.msk [vmem:[%s606 + $0x8] sm:$0xff] %vm607, %v591
            %610 = vst.msk [vmem:[%s606 + $0x10] sm:$0xff] %vm607, %v592
            %611 = vst.msk [vmem:[%s606 + $0x18] sm:$0xff] %vm607, %v593
            %612 = vst.msk [vmem:[%s606 + $0x20] sm:$0xff] %vm607, %v594
            %613 = vst.msk [vmem:[%s606 + $0x28] sm:$0xff] %vm607, %v595
            %614 = vst.msk [vmem:[%s606 + $0x30] sm:$0xff] %vm607, %v596
            %615 = vst.msk [vmem:[%s606 + $0x38] sm:$0xff] %vm607, %v597
            %616 = vst.msk [vmem:[%s606 + $0x40] sm:$0xff] %vm607, %v598
            %617 = vst.msk [vmem:[%s606 + $0x48] sm:$0xff] %vm607, %v599
            %618 = vst.msk [vmem:[%s606 + $0x50] sm:$0xff] %vm607, %v600
            %619 = vst.msk [vmem:[%s606 + $0x58] sm:$0xff] %vm607, %v601
            %620 = vst.msk [vmem:[%s606 + $0x60] sm:$0xff] %vm607, %v602
            %621 = vst.msk [vmem:[%s606 + $0x68] sm:$0xff] %vm607, %v603
            %622 = vst.msk [vmem:[%s606 + $0x70] sm:$0xff] %vm607, %v604
            %623 = vst.msk [vmem:[%s606 + $0x78] sm:$0xff] %vm607, %v605
          $region96: #{tpu_custom_call.1} parent=87 // pred_fallthru
            _
          %p624 = scmp.gt.s32.totalorder %s35, 0
          // Predicated region
          $region97: #{tpu_custom_call.1} parent=87 // pred_check
            %p625 = pneg %p624
          $region98: #{tpu_custom_call.1} parent=87 // pred_check_branch
            %627 = sbr.rel (%p625) target = $region100
          $region99: #{tpu_custom_call.1} parent=87 // pred_region
            %s628 = sshra.s32 %s574, 4
            %s629 = sand.u32 %s574, 15
            %s630 = smul.addr %s628, 8
            %s631 = scalar_lea.vmem [#allocation5], %s630
            %v632 = vld [vmem:[%s631] sm:$0xff]
            %v633 = vld [vmem:[%s631 + $0x8] sm:$0xff]
            %v634 = vld [vmem:[%s631 + $0x10] sm:$0xff]
            %v635 = vld [vmem:[%s631 + $0x18] sm:$0xff]
            %v636 = vld [vmem:[%s631 + $0x20] sm:$0xff]
            %v637 = vld [vmem:[%s631 + $0x28] sm:$0xff]
            %v638 = vld [vmem:[%s631 + $0x30] sm:$0xff]
            %v639 = vld [vmem:[%s631 + $0x38] sm:$0xff]
            %v640 = vunpack.c.l.bf16 %v632
            %v641 = vunpack.c.h.bf16 %v632
            %v642 = vunpack.c.l.bf16 %v633
            %v643 = vunpack.c.h.bf16 %v633
            %v644 = vunpack.c.l.bf16 %v634
            %v645 = vunpack.c.h.bf16 %v634
            %v646 = vunpack.c.l.bf16 %v635
            %v647 = vunpack.c.h.bf16 %v635
            %v648 = vunpack.c.l.bf16 %v636
            %v649 = vunpack.c.h.bf16 %v636
            %v650 = vunpack.c.l.bf16 %v637
            %v651 = vunpack.c.h.bf16 %v637
            %v652 = vunpack.c.l.bf16 %v638
            %v653 = vunpack.c.h.bf16 %v638
            %v654 = vunpack.c.l.bf16 %v639
            %v655 = vunpack.c.h.bf16 %v639
            %v656 = vld [vmem:[#allocation8] sm:$0x1]
            %v657 = vlaneseq
            %v658 = vshrl.u32 %v657, 7
            %v659 = vsub.s32 0, %v658
            %v660 = vrot.slane %v656, %v659
            %v661 = vmul.f32 %v640, %v660
            %v662 = vmul.f32 %v641, %v660
            %v663 = vmul.f32 %v642, %v660
            %v664 = vmul.f32 %v643, %v660
            %v665 = vmul.f32 %v644, %v660
            %v666 = vmul.f32 %v645, %v660
            %v667 = vmul.f32 %v646, %v660
            %v668 = vmul.f32 %v647, %v660
            %v669 = vmul.f32 %v648, %v660
            %v670 = vmul.f32 %v649, %v660
            %v671 = vmul.f32 %v650, %v660
            %v672 = vmul.f32 %v651, %v660
            %v673 = vmul.f32 %v652, %v660
            %v674 = vmul.f32 %v653, %v660
            %v675 = vmul.f32 %v654, %v660
            %v676 = vmul.f32 %v655, %v660
            %v677 = vld [vmem:[#allocation8 + $0x1] sm:$0x1]
            %v678 = vlaneseq
            %v679 = vshrl.u32 %v678, 7
            %v680 = vsub.s32 0, %v679
            %v681 = vrot.slane %v677, %v680
            %v682 = vadd.f32 %v661, %v681
            %v683 = vadd.f32 %v662, %v681
            %v684 = vadd.f32 %v663, %v681
            %v685 = vadd.f32 %v664, %v681
            %v686 = vadd.f32 %v665, %v681
            %v687 = vadd.f32 %v666, %v681
            %v688 = vadd.f32 %v667, %v681
            %v689 = vadd.f32 %v668, %v681
            %v690 = vadd.f32 %v669, %v681
            %v691 = vadd.f32 %v670, %v681
            %v692 = vadd.f32 %v671, %v681
            %v693 = vadd.f32 %v672, %v681
            %v694 = vadd.f32 %v673, %v681
            %v695 = vadd.f32 %v674, %v681
            %v696 = vadd.f32 %v675, %v681
            %v697 = vadd.f32 %v676, %v681
            %v698 = vmax.f32 %v682, 0.0
            %v699 = vmax.f32 %v683, 0.0
            %v700 = vmax.f32 %v684, 0.0
            %v701 = vmax.f32 %v685, 0.0
            %v702 = vmax.f32 %v686, 0.0
            %v703 = vmax.f32 %v687, 0.0
            %v704 = vmax.f32 %v688, 0.0
            %v705 = vmax.f32 %v689, 0.0
            %v706 = vmax.f32 %v690, 0.0
            %v707 = vmax.f32 %v691, 0.0
            %v708 = vmax.f32 %v692, 0.0
            %v709 = vmax.f32 %v693, 0.0
            %v710 = vmax.f32 %v694, 0.0
            %v711 = vmax.f32 %v695, 0.0
            %v712 = vmax.f32 %v696, 0.0
            %v713 = vmax.f32 %v697, 0.0
            %p714 = scmp.eq.s32.totalorder %s35, 1
            %s715 = scalar_select %p714, 0.0, 1.0
            %s716 = scalar_lea.vmem [#allocation2], %s574
            %v717 = vld [vmem:[%s716] sm:$0xff]
            %v718 = vld [vmem:[%s716 + $0x8] sm:$0xff]
            %v719 = vld [vmem:[%s716 + $0x10] sm:$0xff]
            %v720 = vld [vmem:[%s716 + $0x18] sm:$0xff]
            %v721 = vld [vmem:[%s716 + $0x20] sm:$0xff]
            %v722 = vld [vmem:[%s716 + $0x28] sm:$0xff]
            %v723 = vld [vmem:[%s716 + $0x30] sm:$0xff]
            %v724 = vld [vmem:[%s716 + $0x38] sm:$0xff]
            %v725 = vld [vmem:[%s716 + $0x40] sm:$0xff]
            %v726 = vld [vmem:[%s716 + $0x48] sm:$0xff]
            %v727 = vld [vmem:[%s716 + $0x50] sm:$0xff]
            %v728 = vld [vmem:[%s716 + $0x58] sm:$0xff]
            %v729 = vld [vmem:[%s716 + $0x60] sm:$0xff]
            %v730 = vld [vmem:[%s716 + $0x68] sm:$0xff]
            %v731 = vld [vmem:[%s716 + $0x70] sm:$0xff]
            %v732 = vld [vmem:[%s716 + $0x78] sm:$0xff]
            %v733 = vstv %s715
            %v734 = vmul.f32 %v733, %v717
            %v735 = vmul.f32 %v733, %v718
            %v736 = vmul.f32 %v733, %v719
            %v737 = vmul.f32 %v733, %v720
            %v738 = vmul.f32 %v733, %v721
            %v739 = vmul.f32 %v733, %v722
            %v740 = vmul.f32 %v733, %v723
            %v741 = vmul.f32 %v733, %v724
            %v742 = vmul.f32 %v733, %v725
            %v743 = vmul.f32 %v733, %v726
            %v744 = vmul.f32 %v733, %v727
            %v745 = vmul.f32 %v733, %v728
            %v746 = vmul.f32 %v733, %v729
            %v747 = vmul.f32 %v733, %v730
            %v748 = vmul.f32 %v733, %v731
            %v749 = vmul.f32 %v733, %v732
            %v750 = vadd.f32 %v698, %v734
            %v751 = vadd.f32 %v699, %v735
            %v752 = vadd.f32 %v700, %v736
            %v753 = vadd.f32 %v701, %v737
            %v754 = vadd.f32 %v702, %v738
            %v755 = vadd.f32 %v703, %v739
            %v756 = vadd.f32 %v704, %v740
            %v757 = vadd.f32 %v705, %v741
            %v758 = vadd.f32 %v706, %v742
            %v759 = vadd.f32 %v707, %v743
            %v760 = vadd.f32 %v708, %v744
            %v761 = vadd.f32 %v709, %v745
            %v762 = vadd.f32 %v710, %v746
            %v763 = vadd.f32 %v711, %v747
            %v764 = vadd.f32 %v712, %v748
            %v765 = vadd.f32 %v713, %v749
            %v766 = vlaneseq
            %v767 = vshrl.u32 %v766, 7
            %v768 = vadd.s32 %v767, 8
            %v769 = vadd.s32 %v767, 16
            %v770 = vadd.s32 %v767, 24
            %v771 = vadd.s32 %v767, 32
            %v772 = vadd.s32 %v767, 40
            %v773 = vadd.s32 %v767, 48
            %v774 = vadd.s32 %v767, 56
            %v775 = vadd.s32 %v767, 64
            %v776 = vadd.s32 %v767, 72
            %v777 = vadd.s32 %v767, 80
            %v778 = vadd.s32 %v767, 88
            %v779 = vadd.s32 %v767, 96
            %v780 = vadd.s32 %v767, 104
            %v781 = vadd.s32 %v767, 112
            %v782 = vadd.s32 %v767, 120
            %v783 = vstv %s574
            %v784 = vadd.s32 %v767, %v783
            %v785 = vadd.s32 %v768, %v783
            %v786 = vadd.s32 %v769, %v783
            %v787 = vadd.s32 %v770, %v783
            %v788 = vadd.s32 %v771, %v783
            %v789 = vadd.s32 %v772, %v783
            %v790 = vadd.s32 %v773, %v783
            %v791 = vadd.s32 %v774, %v783
            %v792 = vadd.s32 %v775, %v783
            %v793 = vadd.s32 %v776, %v783
            %v794 = vadd.s32 %v777, %v783
            %v795 = vadd.s32 %v778, %v783
            %v796 = vadd.s32 %v779, %v783
            %v797 = vadd.s32 %v780, %v783
            %v798 = vadd.s32 %v781, %v783
            %v799 = vadd.s32 %v782, %v783
            %vm800 = vcmp.lt.s32.totalorder %v784, 32
            %vm801 = vcmp.lt.s32.totalorder %v785, 32
            %vm802 = vcmp.lt.s32.totalorder %v786, 32
            %vm803 = vcmp.lt.s32.totalorder %v787, 32
            %vm804 = vcmp.lt.s32.totalorder %v788, 32
            %vm805 = vcmp.lt.s32.totalorder %v789, 32
            %vm806 = vcmp.lt.s32.totalorder %v790, 32
            %vm807 = vcmp.lt.s32.totalorder %v791, 32
            %vm808 = vcmp.lt.s32.totalorder %v792, 32
            %vm809 = vcmp.lt.s32.totalorder %v793, 32
            %vm810 = vcmp.lt.s32.totalorder %v794, 32
            %vm811 = vcmp.lt.s32.totalorder %v795, 32
            %vm812 = vcmp.lt.s32.totalorder %v796, 32
            %vm813 = vcmp.lt.s32.totalorder %v797, 32
            %vm814 = vcmp.lt.s32.totalorder %v798, 32
            %vm815 = vcmp.lt.s32.totalorder %v799, 32
            %v816 = vsel %vm800, 1, 0
            %v817 = vsel %vm801, 1, 0
            %v818 = vsel %vm802, 1, 0
            %v819 = vsel %vm803, 1, 0
            %v820 = vsel %vm804, 1, 0
            %v821 = vsel %vm805, 1, 0
            %v822 = vsel %vm806, 1, 0
            %v823 = vsel %vm807, 1, 0
            %v824 = vsel %vm808, 1, 0
            %v825 = vsel %vm809, 1, 0
            %v826 = vsel %vm810, 1, 0
            %v827 = vsel %vm811, 1, 0
            %v828 = vsel %vm812, 1, 0
            %v829 = vsel %vm813, 1, 0
            %v830 = vsel %vm814, 1, 0
            %v831 = vsel %vm815, 1, 0
            %v832 = vcvt.s32.f32 %v816
            %v833 = vcvt.s32.f32 %v817
            %v834 = vcvt.s32.f32 %v818
            %v835 = vcvt.s32.f32 %v819
            %v836 = vcvt.s32.f32 %v820
            %v837 = vcvt.s32.f32 %v821
            %v838 = vcvt.s32.f32 %v822
            %v839 = vcvt.s32.f32 %v823
            %v840 = vcvt.s32.f32 %v824
            %v841 = vcvt.s32.f32 %v825
            %v842 = vcvt.s32.f32 %v826
            %v843 = vcvt.s32.f32 %v827
            %v844 = vcvt.s32.f32 %v828
            %v845 = vcvt.s32.f32 %v829
            %v846 = vcvt.s32.f32 %v830
            %v847 = vcvt.s32.f32 %v831
            %v848 = vmul.f32 %v750, %v832
            %v849 = vmul.f32 %v751, %v833
            %v850 = vmul.f32 %v752, %v834
            %v851 = vmul.f32 %v753, %v835
            %v852 = vmul.f32 %v754, %v836
            %v853 = vmul.f32 %v755, %v837
            %v854 = vmul.f32 %v756, %v838
            %v855 = vmul.f32 %v757, %v839
            %v856 = vmul.f32 %v758, %v840
            %v857 = vmul.f32 %v759, %v841
            %v858 = vmul.f32 %v760, %v842
            %v859 = vmul.f32 %v761, %v843
            %v860 = vmul.f32 %v762, %v844
            %v861 = vmul.f32 %v763, %v845
            %v862 = vmul.f32 %v764, %v846
            %v863 = vmul.f32 %v765, %v847
            %vm864 = vcmask 523264
            %865 = vst.msk [vmem:[%s716] sm:$0xff] %vm864, %v848
            %866 = vst.msk [vmem:[%s716 + $0x8] sm:$0xff] %vm864, %v849
            %867 = vst.msk [vmem:[%s716 + $0x10] sm:$0xff] %vm864, %v850
            %868 = vst.msk [vmem:[%s716 + $0x18] sm:$0xff] %vm864, %v851
            %869 = vst.msk [vmem:[%s716 + $0x20] sm:$0xff] %vm864, %v852
            %870 = vst.msk [vmem:[%s716 + $0x28] sm:$0xff] %vm864, %v853
            %871 = vst.msk [vmem:[%s716 + $0x30] sm:$0xff] %vm864, %v854
            %872 = vst.msk [vmem:[%s716 + $0x38] sm:$0xff] %vm864, %v855
            %873 = vst.msk [vmem:[%s716 + $0x40] sm:$0xff] %vm864, %v856
            %874 = vst.msk [vmem:[%s716 + $0x48] sm:$0xff] %vm864, %v857
            %875 = vst.msk [vmem:[%s716 + $0x50] sm:$0xff] %vm864, %v858
            %876 = vst.msk [vmem:[%s716 + $0x58] sm:$0xff] %vm864, %v859
            %877 = vst.msk [vmem:[%s716 + $0x60] sm:$0xff] %vm864, %v860
            %878 = vst.msk [vmem:[%s716 + $0x68] sm:$0xff] %vm864, %v861
            %879 = vst.msk [vmem:[%s716 + $0x70] sm:$0xff] %vm864, %v862
            %880 = vst.msk [vmem:[%s716 + $0x78] sm:$0xff] %vm864, %v863
          $region100: #{tpu_custom_call.1} parent=87 // pred_fallthru
            _
          %s881 = scalar_lea.vmem [#allocation2], %s574
          %v882 = vld [vmem:[%s881] sm:$0xff]
          %v883 = vld [vmem:[%s881 + $0x8] sm:$0xff]
          %v884 = vld [vmem:[%s881 + $0x10] sm:$0xff]
          %v885 = vld [vmem:[%s881 + $0x18] sm:$0xff]
          %v886 = vld [vmem:[%s881 + $0x20] sm:$0xff]
          %v887 = vld [vmem:[%s881 + $0x28] sm:$0xff]
          %v888 = vld [vmem:[%s881 + $0x30] sm:$0xff]
          %v889 = vld [vmem:[%s881 + $0x38] sm:$0xff]
          %v890 = vld [vmem:[%s881 + $0x40] sm:$0xff]
          %v891 = vld [vmem:[%s881 + $0x48] sm:$0xff]
          %v892 = vld [vmem:[%s881 + $0x50] sm:$0xff]
          %v893 = vld [vmem:[%s881 + $0x58] sm:$0xff]
          %v894 = vld [vmem:[%s881 + $0x60] sm:$0xff]
          %v895 = vld [vmem:[%s881 + $0x68] sm:$0xff]
          %v896 = vld [vmem:[%s881 + $0x70] sm:$0xff]
          %v897 = vld [vmem:[%s881 + $0x78] sm:$0xff]
          %v898 = vpack.c.bf16 %v883, %v882
          %v899 = vpack.c.bf16 %v885, %v884
          %v900 = vpack.c.bf16 %v887, %v886
          %v901 = vpack.c.bf16 %v889, %v888
          %v902 = vpack.c.bf16 %v891, %v890
          %v903 = vpack.c.bf16 %v893, %v892
          %v904 = vpack.c.bf16 %v895, %v894
          %v905 = vpack.c.bf16 %v897, %v896
          %v906 = vld [vmem:[%s571] sm:$0xf]
          %v907 = vld [vmem:[%s571 + $0x4] sm:$0xf]
          %v908 = vld [vmem:[%s571 + $0x8] sm:$0xf]
          %v909 = vld [vmem:[%s571 + $0xc] sm:$0xf]
          %v910 = vld [vmem:[%s571 + $0x10] sm:$0xf]
          %v911 = vld [vmem:[%s571 + $0x14] sm:$0xf]
          %v912 = vld [vmem:[%s571 + $0x18] sm:$0xf]
          %v913 = vld [vmem:[%s571 + $0x1c] sm:$0xf]
          %v922 = vunpack.c.l.b16 %v906
          %v923 = vunpack.c.l.b16 %v907
          %v924 = vunpack.c.l.b16 %v908
          %v925 = vunpack.c.l.b16 %v909
          %v926 = vunpack.c.l.b16 %v910
          %v927 = vunpack.c.l.b16 %v911
          %v928 = vunpack.c.l.b16 %v912
          %v929 = vunpack.c.l.b16 %v913
          %v930 = vpack.c.b16 %v923, %v922
          %v931 = vpack.c.b16 %v925, %v924
          %v932 = vpack.c.b16 %v927, %v926
          %v933 = vpack.c.b16 %v929, %v928
          %vm938 = vcmask 523264
          %v940 = vsel %vm938, %v898, 0
          %v943 = vsel %vm938, %v899, 0
          %v946 = vsel %vm938, %v900, 0
          %v949 = vsel %vm938, %v901, 0
          %v952 = vsel %vm938, %v902, 0
          %v955 = vsel %vm938, %v903, 0
          %v958 = vsel %vm938, %v904, 0
          %v961 = vsel %vm938, %v905, 0
          %963 = vmatprep.subr.bf16.mxu0 0
          %964 = vmatpush1.bf16.msra.mxu0 %v930
          %965 = vmatprep.subr.bf16.mxu0 0
          %966 = vmatpush1.bf16.msra.mxu0 %v931
          %967 = vmatprep.subr.bf16.mxu0 0
          %968 = vmatpush1.bf16.msra.mxu0 %v932
          %969 = vmatprep.subr.bf16.mxu0 0
          %970 = vmatpush1.bf16.msra.mxu0 %v933
          %971 = vmatprep.subr.bf16.mxu0 0
          %972 = vmatpush1.bf16.msra.mxu0 0
          %973 = vmatprep.subr.bf16.mxu0 0
          %974 = vmatpush1.bf16.msra.mxu0 0
          %975 = vmatprep.subr.bf16.mxu0 0
          %976 = vmatpush1.bf16.msra.mxu0 0
          %977 = vmatprep.subr.bf16.mxu0 0
          %978 = vmatpush1.bf16.msra.mxu0 0
          %979 = vmatprep.subr.bf16.mxu0 0
          %980 = vmatpush1.bf16.msra.mxu0 0
          %981 = vmatprep.subr.bf16.mxu0 0
          %982 = vmatpush1.bf16.msra.mxu0 0
          %983 = vmatprep.subr.bf16.mxu0 0
          %984 = vmatpush1.bf16.msra.mxu0 0
          %985 = vmatprep.subr.bf16.mxu0 0
          %986 = vmatpush1.bf16.msra.mxu0 0
          %987 = vmatprep.subr.bf16.mxu0 0
          %988 = vmatpush1.bf16.msra.mxu0 0
          %989 = vmatprep.subr.bf16.mxu0 0
          %990 = vmatpush1.bf16.msra.mxu0 0
          %991 = vmatprep.subr.bf16.mxu0 0
          %992 = vmatpush1.bf16.msra.mxu0 0
          %993 = vmatprep.subr.bf16.mxu0 0
          %994 = vmatpush1.bf16.msra.mxu0 0
          %995 = vmatprep.mubr.bf16.mxu0 0
          %996 = vmatmul.mubr.bf16.gmra.mrb[0].mxu0 %v940
          %v997 = vpop.f32.mrb[0].mxu0
          %v998 = vadd.f32 0.0, %v997
          %v999 = vpop.f32.mrb[0].mxu0
          %v1000 = vpop.f32.mrb[0].mxu0
          %v1001 = vadd.f32 0.0, %v1000
          %v1002 = vpop.f32.mrb[0].mxu0
          %1003 = vmatprep.mubr.bf16.mxu0 0
          %1004 = vmatmul.mubr.bf16.gmra.mrb[0].mxu0 %v943
          %v1005 = vpop.f32.mrb[0].mxu0
          %v1006 = vadd.f32 0.0, %v1005
          %v1007 = vpop.f32.mrb[0].mxu0
          %v1008 = vpop.f32.mrb[0].mxu0
          %v1009 = vadd.f32 0.0, %v1008
          %v1010 = vpop.f32.mrb[0].mxu0
          %1011 = vmatprep.mubr.bf16.mxu0 0
          %1012 = vmatmul.mubr.bf16.gmra.mrb[0].mxu0 %v946
          %v1013 = vpop.f32.mrb[0].mxu0
          %v1014 = vadd.f32 0.0, %v1013
          %v1015 = vpop.f32.mrb[0].mxu0
          %v1016 = vpop.f32.mrb[0].mxu0
          %v1017 = vadd.f32 0.0, %v1016
          %v1018 = vpop.f32.mrb[0].mxu0
          %1019 = vmatprep.mubr.bf16.mxu0 0
          %1020 = vmatmul.mubr.bf16.gmra.mrb[0].mxu0 %v949
          %v1021 = vpop.f32.mrb[0].mxu0
          %v1022 = vadd.f32 0.0, %v1021
          %v1023 = vpop.f32.mrb[0].mxu0
          %v1024 = vpop.f32.mrb[0].mxu0
          %v1025 = vadd.f32 0.0, %v1024
          %v1026 = vpop.f32.mrb[0].mxu0
          %1027 = vmatprep.mubr.bf16.mxu0 0
          %1028 = vmatmul.mubr.bf16.gmra.mrb[0].mxu0 %v952
          %v1029 = vpop.f32.mrb[0].mxu0
          %v1030 = vadd.f32 0.0, %v1029
          %v1031 = vpop.f32.mrb[0].mxu0
          %v1032 = vpop.f32.mrb[0].mxu0
          %v1033 = vadd.f32 0.0, %v1032
          %v1034 = vpop.f32.mrb[0].mxu0
          %1035 = vmatprep.mubr.bf16.mxu0 0
          %1036 = vmatmul.mubr.bf16.gmra.mrb[0].mxu0 %v955
          %v1037 = vpop.f32.mrb[0].mxu0
          %v1038 = vadd.f32 0.0, %v1037
          %v1039 = vpop.f32.mrb[0].mxu0
          %v1040 = vpop.f32.mrb[0].mxu0
          %v1041 = vadd.f32 0.0, %v1040
          %v1042 = vpop.f32.mrb[0].mxu0
          %1043 = vmatprep.mubr.bf16.mxu0 0
          %1044 = vmatmul.mubr.bf16.gmra.mrb[0].mxu0 %v958
          %v1045 = vpop.f32.mrb[0].mxu0
          %v1046 = vadd.f32 0.0, %v1045
          %v1047 = vpop.f32.mrb[0].mxu0
          %v1048 = vpop.f32.mrb[0].mxu0
          %v1049 = vadd.f32 0.0, %v1048
          %v1050 = vpop.f32.mrb[0].mxu0
          %1051 = vmatprep.mubr.bf16.mxu0 0
          %1052 = vmatmul.mubr.bf16.gmra.mrb[0].mxu0 %v961
          %v1053 = vpop.f32.mrb[0].mxu0
          %v1054 = vadd.f32 0.0, %v1053
          %v1055 = vpop.f32.mrb[0].mxu0
          %v1056 = vpop.f32.mrb[0].mxu0
          %v1057 = vadd.f32 0.0, %v1056
          %v1058 = vpop.f32.mrb[0].mxu0
          %1059 = vdwg.mxu0
          %v1060 = vpack.c.bf16 %v1001, %v998
          %v1061 = vpack.c.bf16 %v1009, %v1006
          %v1062 = vpack.c.bf16 %v1017, %v1014
          %v1063 = vpack.c.bf16 %v1025, %v1022
          %v1064 = vpack.c.bf16 %v1033, %v1030
          %v1065 = vpack.c.bf16 %v1041, %v1038
          %v1066 = vpack.c.bf16 %v1049, %v1046
          %v1067 = vpack.c.bf16 %v1057, %v1054
          %s1068 = sshra.s32 %s574, 4
          %s1069 = sand.u32 %s574, 15
          %s1070 = smul.addr %s1068, 8
          %s1071 = scalar_lea.vmem [#allocation3], %s1070
          %1072 = vst.msk [vmem:[%s1071] sm:$0xff] %vm938, %v1060
          %1073 = vst.msk [vmem:[%s1071 + $0x8] sm:$0xff] %vm938, %v1061
          %1074 = vst.msk [vmem:[%s1071 + $0x10] sm:$0xff] %vm938, %v1062
          %1075 = vst.msk [vmem:[%s1071 + $0x18] sm:$0xff] %vm938, %v1063
          %1076 = vst.msk [vmem:[%s1071 + $0x20] sm:$0xff] %vm938, %v1064
          %1077 = vst.msk [vmem:[%s1071 + $0x28] sm:$0xff] %vm938, %v1065
          %1078 = vst.msk [vmem:[%s1071 + $0x30] sm:$0xff] %vm938, %v1066
          %1079 = vst.msk [vmem:[%s1071 + $0x38] sm:$0xff] %vm938, %v1067
          %1088 = vrot.lane.b32.xlu0 %v1060, 64
          %v1089 = vpop.permute.xlu0 %1088
          %1090 = vrot.lane.b32.xlu0 %v1061, 64
          %v1091 = vpop.permute.xlu0 %1090
          %1092 = vrot.lane.b32.xlu0 %v1062, 64
          %v1093 = vpop.permute.xlu0 %1092
          %1094 = vrot.lane.b32.xlu0 %v1063, 64
          %v1095 = vpop.permute.xlu0 %1094
          %1096 = vrot.lane.b32.xlu0 %v1064, 64
          %v1097 = vpop.permute.xlu0 %1096
          %1098 = vrot.lane.b32.xlu0 %v1065, 64
          %v1099 = vpop.permute.xlu0 %1098
          %1100 = vrot.lane.b32.xlu0 %v1066, 64
          %v1101 = vpop.permute.xlu0 %1100
          %1102 = vrot.lane.b32.xlu0 %v1067, 64
          %v1103 = vpop.permute.xlu0 %1102
          %s1112 = smul.addr %s1068, 8
          %s1113 = scalar_lea.vmem [#allocation4], %s1112
          %1114 = vst.msk [vmem:[%s1113] sm:$0xff] %vm938, %v1089
          %1115 = vst.msk [vmem:[%s1113 + $0x8] sm:$0xff] %vm938, %v1091
          %1116 = vst.msk [vmem:[%s1113 + $0x10] sm:$0xff] %vm938, %v1093
          %1117 = vst.msk [vmem:[%s1113 + $0x18] sm:$0xff] %vm938, %v1095
          %1118 = vst.msk [vmem:[%s1113 + $0x20] sm:$0xff] %vm938, %v1097
          %1119 = vst.msk [vmem:[%s1113 + $0x28] sm:$0xff] %vm938, %v1099
          %1120 = vst.msk [vmem:[%s1113 + $0x30] sm:$0xff] %vm938, %v1101
          %1121 = vst.msk [vmem:[%s1113 + $0x38] sm:$0xff] %vm938, %v1103
        $region88: #{tpu_custom_call.1} parent=63 // pred_fallthru
          _
        %p1122 = scmp.eq.s32.totalorder %s37, 0
        // Predicated region
        $region101: #{tpu_custom_call.1} parent=63 // pred_check
          %p1123 = pneg %p1122
        $region102: #{tpu_custom_call.1} parent=63 // pred_check_branch
          %1125 = sbr.rel (%p1123) target = $region104
        $region103: #{tpu_custom_call.1} parent=63 // pred_region
          %vm1126 = vcmask 523264
          %1127 = vst.msk [vmem:[#allocation6] sm:$0xff] %vm1126, 0.0
          %1128 = vst.msk [vmem:[#allocation6 + $0x8] sm:$0xff] %vm1126, 0.0
          %1129 = vst.msk [vmem:[#allocation6 + $0x10] sm:$0xff] %vm1126, 0.0
          %1130 = vst.msk [vmem:[#allocation6 + $0x18] sm:$0xff] %vm1126, 0.0
          %1131 = vst.msk [vmem:[#allocation6 + $0x20] sm:$0xff] %vm1126, 0.0
          %1132 = vst.msk [vmem:[#allocation6 + $0x28] sm:$0xff] %vm1126, 0.0
          %1133 = vst.msk [vmem:[#allocation6 + $0x30] sm:$0xff] %vm1126, 0.0
          %1134 = vst.msk [vmem:[#allocation6 + $0x38] sm:$0xff] %vm1126, 0.0
          %1135 = vst.msk [vmem:[#allocation6 + $0x40] sm:$0xff] %vm1126, 0.0
          %1136 = vst.msk [vmem:[#allocation6 + $0x48] sm:$0xff] %vm1126, 0.0
          %1137 = vst.msk [vmem:[#allocation6 + $0x50] sm:$0xff] %vm1126, 0.0
          %1138 = vst.msk [vmem:[#allocation6 + $0x58] sm:$0xff] %vm1126, 0.0
          %1139 = vst.msk [vmem:[#allocation6 + $0x60] sm:$0xff] %vm1126, 0.0
          %1140 = vst.msk [vmem:[#allocation6 + $0x68] sm:$0xff] %vm1126, 0.0
          %1141 = vst.msk [vmem:[#allocation6 + $0x70] sm:$0xff] %vm1126, 0.0
          %1142 = vst.msk [vmem:[#allocation6 + $0x78] sm:$0xff] %vm1126, 0.0
        $region104: #{tpu_custom_call.1} parent=63 // pred_fallthru
          _
        %s1143 = sshra.s32 %s574, 4
        %s1144 = sand.u32 %s574, 15
        %s1145 = smul.addr %s1143, 8
        %s1146 = scalar_lea.vmem [#allocation3], %s1145
        %v1147 = vld [vmem:[%s1146] sm:$0xff]
        %v1148 = vld [vmem:[%s1146 + $0x8] sm:$0xff]
        %v1149 = vld [vmem:[%s1146 + $0x10] sm:$0xff]
        %v1150 = vld [vmem:[%s1146 + $0x18] sm:$0xff]
        %v1151 = vld [vmem:[%s1146 + $0x20] sm:$0xff]
        %v1152 = vld [vmem:[%s1146 + $0x28] sm:$0xff]
        %v1153 = vld [vmem:[%s1146 + $0x30] sm:$0xff]
        %v1154 = vld [vmem:[%s1146 + $0x38] sm:$0xff]
        %p1155 = scmp.eq.s32.totalorder %s35, 0
        // Predicated region
        $region105: #{tpu_custom_call.1} parent=63 // pred_check
          %p1156 = pneg %p1155
        $region106: #{tpu_custom_call.1} parent=63 // pred_check_branch
          %1158 = sbr.rel (%p1156) target = $region108
        $region107: #{tpu_custom_call.1} parent=63 // pred_region
          %v1159 = vld [vmem:[%s562] sm:$0xf]
          %v1160 = vld [vmem:[%s562 + $0x4] sm:$0xf]
          %v1161 = vld [vmem:[%s562 + $0x8] sm:$0xf]
          %v1162 = vld [vmem:[%s562 + $0xc] sm:$0xf]
          %v1163 = vld [vmem:[%s562 + $0x10] sm:$0xf]
          %v1164 = vld [vmem:[%s562 + $0x14] sm:$0xf]
          %v1165 = vld [vmem:[%s562 + $0x18] sm:$0xf]
          %v1166 = vld [vmem:[%s562 + $0x1c] sm:$0xf]
          %v1167 = vld [vmem:[%s562 + $0x20] sm:$0xf]
          %v1168 = vld [vmem:[%s562 + $0x24] sm:$0xf]
          %v1169 = vld [vmem:[%s562 + $0x28] sm:$0xf]
          %v1170 = vld [vmem:[%s562 + $0x2c] sm:$0xf]
          %v1171 = vld [vmem:[%s562 + $0x30] sm:$0xf]
          %v1172 = vld [vmem:[%s562 + $0x34] sm:$0xf]
          %v1173 = vld [vmem:[%s562 + $0x38] sm:$0xf]
          %v1174 = vld [vmem:[%s562 + $0x3c] sm:$0xf]
          %v1191 = vunpack.c.l.b16 %v1159
          %v1192 = vunpack.c.l.b16 %v1160
          %v1193 = vunpack.c.l.b16 %v1161
          %v1194 = vunpack.c.l.b16 %v1162
          %v1195 = vunpack.c.l.b16 %v1163
          %v1196 = vunpack.c.l.b16 %v1164
          %v1197 = vunpack.c.l.b16 %v1165
          %v1198 = vunpack.c.l.b16 %v1166
          %v1199 = vunpack.c.l.b16 %v1167
          %v1200 = vunpack.c.l.b16 %v1168
          %v1201 = vunpack.c.l.b16 %v1169
          %v1202 = vunpack.c.l.b16 %v1170
          %v1203 = vunpack.c.l.b16 %v1171
          %v1204 = vunpack.c.l.b16 %v1172
          %v1205 = vunpack.c.l.b16 %v1173
          %v1206 = vunpack.c.l.b16 %v1174
          %v1207 = vpack.c.b16 %v1192, %v1191
          %v1208 = vpack.c.b16 %v1194, %v1193
          %v1209 = vpack.c.b16 %v1196, %v1195
          %v1210 = vpack.c.b16 %v1198, %v1197
          %v1211 = vpack.c.b16 %v1200, %v1199
          %v1212 = vpack.c.b16 %v1202, %v1201
          %v1213 = vpack.c.b16 %v1204, %v1203
          %v1214 = vpack.c.b16 %v1206, %v1205
          %s1223 = sshra.s32 %s574, 7
          %s1224 = sand.u32 %s574, 127
          %s1225 = sshra.s32 %s573, 4
          %s1226 = sand.u32 %s573, 15
          %s1227 = sadd.s32 %s1223, %s1225
          %s1228 = smul.addr %s1227, 8
          %s1229 = scalar_lea.vmem [#allocation9], %s1228
          %1230 = vst [vmem:[%s1229] sm:$0xff] %v1207
          %1231 = vst [vmem:[%s1229 + $0x8] sm:$0xff] %v1208
          %1232 = vst [vmem:[%s1229 + $0x10] sm:$0xff] %v1209
          %1233 = vst [vmem:[%s1229 + $0x18] sm:$0xff] %v1210
          %1234 = vst [vmem:[%s1229 + $0x20] sm:$0xff] %v1211
          %1235 = vst [vmem:[%s1229 + $0x28] sm:$0xff] %v1212
          %1236 = vst [vmem:[%s1229 + $0x30] sm:$0xff] %v1213
          %1237 = vst [vmem:[%s1229 + $0x38] sm:$0xff] %v1214
          %v1238 = vld [vmem:[#allocation6] sm:$0xff]
          %v1239 = vld [vmem:[#allocation6 + $0x8] sm:$0xff]
          %v1240 = vld [vmem:[#allocation6 + $0x10] sm:$0xff]
          %v1241 = vld [vmem:[#allocation6 + $0x18] sm:$0xff]
          %v1242 = vld [vmem:[#allocation6 + $0x20] sm:$0xff]
          %v1243 = vld [vmem:[#allocation6 + $0x28] sm:$0xff]
          %v1244 = vld [vmem:[#allocation6 + $0x30] sm:$0xff]
          %v1245 = vld [vmem:[#allocation6 + $0x38] sm:$0xff]
          %v1246 = vld [vmem:[#allocation6 + $0x40] sm:$0xff]
          %v1247 = vld [vmem:[#allocation6 + $0x48] sm:$0xff]
          %v1248 = vld [vmem:[#allocation6 + $0x50] sm:$0xff]
          %v1249 = vld [vmem:[#allocation6 + $0x58] sm:$0xff]
          %v1250 = vld [vmem:[#allocation6 + $0x60] sm:$0xff]
          %v1251 = vld [vmem:[#allocation6 + $0x68] sm:$0xff]
          %v1252 = vld [vmem:[#allocation6 + $0x70] sm:$0xff]
          %v1253 = vld [vmem:[#allocation6 + $0x78] sm:$0xff]
          %v1254 = vld [vmem:[%s562] sm:$0xf]
          %v1255 = vld [vmem:[%s562 + $0x4] sm:$0xf]
          %v1256 = vld [vmem:[%s562 + $0x8] sm:$0xf]
          %v1257 = vld [vmem:[%s562 + $0xc] sm:$0xf]
          %v1258 = vld [vmem:[%s562 + $0x10] sm:$0xf]
          %v1259 = vld [vmem:[%s562 + $0x14] sm:$0xf]
          %v1260 = vld [vmem:[%s562 + $0x18] sm:$0xf]
          %v1261 = vld [vmem:[%s562 + $0x1c] sm:$0xf]
          %v1262 = vld [vmem:[%s562 + $0x20] sm:$0xf]
          %v1263 = vld [vmem:[%s562 + $0x24] sm:$0xf]
          %v1264 = vld [vmem:[%s562 + $0x28] sm:$0xf]
          %v1265 = vld [vmem:[%s562 + $0x2c] sm:$0xf]
          %v1266 = vld [vmem:[%s562 + $0x30] sm:$0xf]
          %v1267 = vld [vmem:[%s562 + $0x34] sm:$0xf]
          %v1268 = vld [vmem:[%s562 + $0x38] sm:$0xf]
          %v1269 = vld [vmem:[%s562 + $0x3c] sm:$0xf]
          %v1286 = vunpack.c.l.b16 %v1254
          %v1287 = vunpack.c.l.b16 %v1255
          %v1288 = vunpack.c.l.b16 %v1256
          %v1289 = vunpack.c.l.b16 %v1257
          %v1290 = vunpack.c.l.b16 %v1258
          %v1291 = vunpack.c.l.b16 %v1259
          %v1292 = vunpack.c.l.b16 %v1260
          %v1293 = vunpack.c.l.b16 %v1261
          %v1294 = vunpack.c.l.b16 %v1262
          %v1295 = vunpack.c.l.b16 %v1263
          %v1296 = vunpack.c.l.b16 %v1264
          %v1297 = vunpack.c.l.b16 %v1265
          %v1298 = vunpack.c.l.b16 %v1266
          %v1299 = vunpack.c.l.b16 %v1267
          %v1300 = vunpack.c.l.b16 %v1268
          %v1301 = vunpack.c.l.b16 %v1269
          %v1302 = vpack.c.b16 %v1287, %v1286
          %v1303 = vpack.c.b16 %v1289, %v1288
          %v1304 = vpack.c.b16 %v1291, %v1290
          %v1305 = vpack.c.b16 %v1293, %v1292
          %v1306 = vpack.c.b16 %v1295, %v1294
          %v1307 = vpack.c.b16 %v1297, %v1296
          %v1308 = vpack.c.b16 %v1299, %v1298
          %v1309 = vpack.c.b16 %v1301, %v1300
          %1318 = vmatprep.subr.bf16.mxu0 0
          %1319 = vmatpush1.bf16.msra.mxu0 %v1147
          %1320 = vmatprep.subr.bf16.mxu0 0
          %1321 = vmatpush1.bf16.msra.mxu0 %v1148
          %1322 = vmatprep.subr.bf16.mxu0 0
          %1323 = vmatpush1.bf16.msra.mxu0 %v1149
          %1324 = vmatprep.subr.bf16.mxu0 0
          %1325 = vmatpush1.bf16.msra.mxu0 %v1150
          %1326 = vmatprep.subr.bf16.mxu0 0
          %1327 = vmatpush1.bf16.msra.mxu0 %v1151
          %1328 = vmatprep.subr.bf16.mxu0 0
          %1329 = vmatpush1.bf16.msra.mxu0 %v1152
          %1330 = vmatprep.subr.bf16.mxu0 0
          %1331 = vmatpush1.bf16.msra.mxu0 %v1153
          %1332 = vmatprep.subr.bf16.mxu0 0
          %1333 = vmatpush1.bf16.msra.mxu0 %v1154
          %1334 = vmatprep.subr.bf16.mxu0 0
          %1335 = vmatpush1.bf16.msra.mxu0 0
          %1336 = vmatprep.subr.bf16.mxu0 0
          %1337 = vmatpush1.bf16.msra.mxu0 0
          %1338 = vmatprep.subr.bf16.mxu0 0
          %1339 = vmatpush1.bf16.msra.mxu0 0
          %1340 = vmatprep.subr.bf16.mxu0 0
          %1341 = vmatpush1.bf16.msra.mxu0 0
          %1342 = vmatprep.subr.bf16.mxu0 0
          %1343 = vmatpush1.bf16.msra.mxu0 0
          %1344 = vmatprep.subr.bf16.mxu0 0
          %1345 = vmatpush1.bf16.msra.mxu0 0
          %1346 = vmatprep.subr.bf16.mxu0 0
          %1347 = vmatpush1.bf16.msra.mxu0 0
          %1348 = vmatprep.subr.bf16.mxu0 0
          %1349 = vmatpush1.bf16.msra.mxu0 0
          %1350 = vmatprep.mubr.bf16.mxu0 0
          %1351 = vmatmul.mubr.bf16.gmra.mrb[0].mxu0 %v1302
          %v1352 = vpop.f32.mrb[0].mxu0
          %v1353 = vadd.f32 0.0, %v1352
          %v1354 = vpop.f32.mrb[0].mxu0
          %v1355 = vpop.f32.mrb[0].mxu0
          %v1356 = vadd.f32 0.0, %v1355
          %v1357 = vpop.f32.mrb[0].mxu0
          %1358 = vmatprep.mubr.bf16.mxu0 0
          %1359 = vmatmul.mubr.bf16.gmra.mrb[0].mxu0 %v1303
          %v1360 = vpop.f32.mrb[0].mxu0
          %v1361 = vadd.f32 0.0, %v1360
          %v1362 = vpop.f32.mrb[0].mxu0
          %v1363 = vpop.f32.mrb[0].mxu0
          %v1364 = vadd.f32 0.0, %v1363
          %v1365 = vpop.f32.mrb[0].mxu0
          %1366 = vmatprep.mubr.bf16.mxu0 0
          %1367 = vmatmul.mubr.bf16.gmra.mrb[0].mxu0 %v1304
          %v1368 = vpop.f32.mrb[0].mxu0
          %v1369 = vadd.f32 0.0, %v1368
          %v1370 = vpop.f32.mrb[0].mxu0
          %v1371 = vpop.f32.mrb[0].mxu0
          %v1372 = vadd.f32 0.0, %v1371
          %v1373 = vpop.f32.mrb[0].mxu0
          %1374 = vmatprep.mubr.bf16.mxu0 0
          %1375 = vmatmul.mubr.bf16.gmra.mrb[0].mxu0 %v1305
          %v1376 = vpop.f32.mrb[0].mxu0
          %v1377 = vadd.f32 0.0, %v1376
          %v1378 = vpop.f32.mrb[0].mxu0
          %v1379 = vpop.f32.mrb[0].mxu0
          %v1380 = vadd.f32 0.0, %v1379
          %v1381 = vpop.f32.mrb[0].mxu0
          %1382 = vmatprep.mubr.bf16.mxu0 0
          %1383 = vmatmul.mubr.bf16.gmra.mrb[0].mxu0 %v1306
          %v1384 = vpop.f32.mrb[0].mxu0
          %v1385 = vadd.f32 0.0, %v1384
          %v1386 = vpop.f32.mrb[0].mxu0
          %v1387 = vpop.f32.mrb[0].mxu0
          %v1388 = vadd.f32 0.0, %v1387
          %v1389 = vpop.f32.mrb[0].mxu0
          %1390 = vmatprep.mubr.bf16.mxu0 0
          %1391 = vmatmul.mubr.bf16.gmra.mrb[0].mxu0 %v1307
          %v1392 = vpop.f32.mrb[0].mxu0
          %v1393 = vadd.f32 0.0, %v1392
          %v1394 = vpop.f32.mrb[0].mxu0
          %v1395 = vpop.f32.mrb[0].mxu0
          %v1396 = vadd.f32 0.0, %v1395
          %v1397 = vpop.f32.mrb[0].mxu0
          %1398 = vmatprep.mubr.bf16.mxu0 0
          %1399 = vmatmul.mubr.bf16.gmra.mrb[0].mxu0 %v1308
          %v1400 = vpop.f32.mrb[0].mxu0
          %v1401 = vadd.f32 0.0, %v1400
          %v1402 = vpop.f32.mrb[0].mxu0
          %v1403 = vpop.f32.mrb[0].mxu0
          %v1404 = vadd.f32 0.0, %v1403
          %v1405 = vpop.f32.mrb[0].mxu0
          %1406 = vmatprep.mubr.bf16.mxu0 0
          %1407 = vmatmul.mubr.bf16.gmra.mrb[0].mxu0 %v1309
          %v1408 = vpop.f32.mrb[0].mxu0
          %v1409 = vadd.f32 0.0, %v1408
          %v1410 = vpop.f32.mrb[0].mxu0
          %v1411 = vpop.f32.mrb[0].mxu0
          %v1412 = vadd.f32 0.0, %v1411
          %v1413 = vpop.f32.mrb[0].mxu0
          %1414 = vdwg.mxu0
          %v1415 = vadd.f32 %v1238, %v1353
          %v1416 = vadd.f32 %v1239, %v1356
          %v1417 = vadd.f32 %v1240, %v1361
          %v1418 = vadd.f32 %v1241, %v1364
          %v1419 = vadd.f32 %v1242, %v1369
          %v1420 = vadd.f32 %v1243, %v1372
          %v1421 = vadd.f32 %v1244, %v1377
          %v1422 = vadd.f32 %v1245, %v1380
          %v1423 = vadd.f32 %v1246, %v1385
          %v1424 = vadd.f32 %v1247, %v1388
          %v1425 = vadd.f32 %v1248, %v1393
          %v1426 = vadd.f32 %v1249, %v1396
          %v1427 = vadd.f32 %v1250, %v1401
          %v1428 = vadd.f32 %v1251, %v1404
          %v1429 = vadd.f32 %v1252, %v1409
          %v1430 = vadd.f32 %v1253, %v1412
          %vm1431 = vcmask 523264
          %1432 = vst.msk [vmem:[#allocation6] sm:$0xff] %vm1431, %v1415
          %1433 = vst.msk [vmem:[#allocation6 + $0x8] sm:$0xff] %vm1431, %v1416
          %1434 = vst.msk [vmem:[#allocation6 + $0x10] sm:$0xff] %vm1431, %v1417
          %1435 = vst.msk [vmem:[#allocation6 + $0x18] sm:$0xff] %vm1431, %v1418
          %1436 = vst.msk [vmem:[#allocation6 + $0x20] sm:$0xff] %vm1431, %v1419
          %1437 = vst.msk [vmem:[#allocation6 + $0x28] sm:$0xff] %vm1431, %v1420
          %1438 = vst.msk [vmem:[#allocation6 + $0x30] sm:$0xff] %vm1431, %v1421
          %1439 = vst.msk [vmem:[#allocation6 + $0x38] sm:$0xff] %vm1431, %v1422
          %1440 = vst.msk [vmem:[#allocation6 + $0x40] sm:$0xff] %vm1431, %v1423
          %1441 = vst.msk [vmem:[#allocation6 + $0x48] sm:$0xff] %vm1431, %v1424
          %1442 = vst.msk [vmem:[#allocation6 + $0x50] sm:$0xff] %vm1431, %v1425
          %1443 = vst.msk [vmem:[#allocation6 + $0x58] sm:$0xff] %vm1431, %v1426
          %1444 = vst.msk [vmem:[#allocation6 + $0x60] sm:$0xff] %vm1431, %v1427
          %1445 = vst.msk [vmem:[#allocation6 + $0x68] sm:$0xff] %vm1431, %v1428
          %1446 = vst.msk [vmem:[#allocation6 + $0x70] sm:$0xff] %vm1431, %v1429
          %1447 = vst.msk [vmem:[#allocation6 + $0x78] sm:$0xff] %vm1431, %v1430
        $region108: #{tpu_custom_call.1} parent=63 // pred_fallthru
          _
        %p1448 = scmp.gt.s32.totalorder %s35, 0
        // Predicated region
        $region109: #{tpu_custom_call.1} parent=63 // pred_check
          %p1449 = pneg %p1448
        $region110: #{tpu_custom_call.1} parent=63 // pred_check_branch
          %1451 = sbr.rel (%p1449) target = $region112
        $region111: #{tpu_custom_call.1} parent=63 // pred_region
          %v1452 = vld [vmem:[#allocation6] sm:$0xff]
          %v1453 = vld [vmem:[#allocation6 + $0x8] sm:$0xff]
          %v1454 = vld [vmem:[#allocation6 + $0x10] sm:$0xff]
          %v1455 = vld [vmem:[#allocation6 + $0x18] sm:$0xff]
          %v1456 = vld [vmem:[#allocation6 + $0x20] sm:$0xff]
          %v1457 = vld [vmem:[#allocation6 + $0x28] sm:$0xff]
          %v1458 = vld [vmem:[#allocation6 + $0x30] sm:$0xff]
          %v1459 = vld [vmem:[#allocation6 + $0x38] sm:$0xff]
          %v1460 = vld [vmem:[#allocation6 + $0x40] sm:$0xff]
          %v1461 = vld [vmem:[#allocation6 + $0x48] sm:$0xff]
          %v1462 = vld [vmem:[#allocation6 + $0x50] sm:$0xff]
          %v1463 = vld [vmem:[#allocation6 + $0x58] sm:$0xff]
          %v1464 = vld [vmem:[#allocation6 + $0x60] sm:$0xff]
          %v1465 = vld [vmem:[#allocation6 + $0x68] sm:$0xff]
          %v1466 = vld [vmem:[#allocation6 + $0x70] sm:$0xff]
          %v1467 = vld [vmem:[#allocation6 + $0x78] sm:$0xff]
          %s1468 = sshra.s32 %s574, 7
          %s1469 = sand.u32 %s574, 127
          %s1470 = sshra.s32 %s573, 4
          %s1471 = sand.u32 %s573, 15
          %s1472 = sadd.s32 %s1468, %s1470
          %s1473 = smul.addr %s1472, 8
          %s1474 = scalar_lea.vmem [#allocation9], %s1473
          %v1475 = vld [vmem:[%s1474] sm:$0xff]
          %v1476 = vld [vmem:[%s1474 + $0x8] sm:$0xff]
          %v1477 = vld [vmem:[%s1474 + $0x10] sm:$0xff]
          %v1478 = vld [vmem:[%s1474 + $0x18] sm:$0xff]
          %v1479 = vld [vmem:[%s1474 + $0x20] sm:$0xff]
          %v1480 = vld [vmem:[%s1474 + $0x28] sm:$0xff]
          %v1481 = vld [vmem:[%s1474 + $0x30] sm:$0xff]
          %v1482 = vld [vmem:[%s1474 + $0x38] sm:$0xff]
          %1483 = vmatprep.subr.bf16.mxu0 0
          %1484 = vmatpush1.bf16.msra.mxu0 %v1147
          %1485 = vmatprep.subr.bf16.mxu0 0
          %1486 = vmatpush1.bf16.msra.mxu0 %v1148
          %1487 = vmatprep.subr.bf16.mxu0 0
          %1488 = vmatpush1.bf16.msra.mxu0 %v1149
          %1489 = vmatprep.subr.bf16.mxu0 0
          %1490 = vmatpush1.bf16.msra.mxu0 %v1150
          %1491 = vmatprep.subr.bf16.mxu0 0
          %1492 = vmatpush1.bf16.msra.mxu0 %v1151
          %1493 = vmatprep.subr.bf16.mxu0 0
          %1494 = vmatpush1.bf16.msra.mxu0 %v1152
          %1495 = vmatprep.subr.bf16.mxu0 0
          %1496 = vmatpush1.bf16.msra.mxu0 %v1153
          %1497 = vmatprep.subr.bf16.mxu0 0
          %1498 = vmatpush1.bf16.msra.mxu0 %v1154
          %1499 = vmatprep.subr.bf16.mxu0 0
          %1500 = vmatpush1.bf16.msra.mxu0 0
          %1501 = vmatprep.subr.bf16.mxu0 0
          %1502 = vmatpush1.bf16.msra.mxu0 0
          %1503 = vmatprep.subr.bf16.mxu0 0
          %1504 = vmatpush1.bf16.msra.mxu0 0
          %1505 = vmatprep.subr.bf16.mxu0 0
          %1506 = vmatpush1.bf16.msra.mxu0 0
          %1507 = vmatprep.subr.bf16.mxu0 0
          %1508 = vmatpush1.bf16.msra.mxu0 0
          %1509 = vmatprep.subr.bf16.mxu0 0
          %1510 = vmatpush1.bf16.msra.mxu0 0
          %1511 = vmatprep.subr.bf16.mxu0 0
          %1512 = vmatpush1.bf16.msra.mxu0 0
          %1513 = vmatprep.subr.bf16.mxu0 0
          %1514 = vmatpush1.bf16.msra.mxu0 0
          %1515 = vmatprep.mubr.bf16.mxu0 0
          %1516 = vmatmul.mubr.bf16.gmra.mrb[0].mxu0 %v1475
          %v1517 = vpop.f32.mrb[0].mxu0
          %v1518 = vadd.f32 0.0, %v1517
          %v1519 = vpop.f32.mrb[0].mxu0
          %v1520 = vpop.f32.mrb[0].mxu0
          %v1521 = vadd.f32 0.0, %v1520
          %v1522 = vpop.f32.mrb[0].mxu0
          %1523 = vmatprep.mubr.bf16.mxu0 0
          %1524 = vmatmul.mubr.bf16.gmra.mrb[0].mxu0 %v1476
          %v1525 = vpop.f32.mrb[0].mxu0
          %v1526 = vadd.f32 0.0, %v1525
          %v1527 = vpop.f32.mrb[0].mxu0
          %v1528 = vpop.f32.mrb[0].mxu0
          %v1529 = vadd.f32 0.0, %v1528
          %v1530 = vpop.f32.mrb[0].mxu0
          %1531 = vmatprep.mubr.bf16.mxu0 0
          %1532 = vmatmul.mubr.bf16.gmra.mrb[0].mxu0 %v1477
          %v1533 = vpop.f32.mrb[0].mxu0
          %v1534 = vadd.f32 0.0, %v1533
          %v1535 = vpop.f32.mrb[0].mxu0
          %v1536 = vpop.f32.mrb[0].mxu0
          %v1537 = vadd.f32 0.0, %v1536
          %v1538 = vpop.f32.mrb[0].mxu0
          %1539 = vmatprep.mubr.bf16.mxu0 0
          %1540 = vmatmul.mubr.bf16.gmra.mrb[0].mxu0 %v1478
          %v1541 = vpop.f32.mrb[0].mxu0
          %v1542 = vadd.f32 0.0, %v1541
          %v1543 = vpop.f32.mrb[0].mxu0
          %v1544 = vpop.f32.mrb[0].mxu0
          %v1545 = vadd.f32 0.0, %v1544
          %v1546 = vpop.f32.mrb[0].mxu0
          %1547 = vmatprep.mubr.bf16.mxu0 0
          %1548 = vmatmul.mubr.bf16.gmra.mrb[0].mxu0 %v1479
          %v1549 = vpop.f32.mrb[0].mxu0
          %v1550 = vadd.f32 0.0, %v1549
          %v1551 = vpop.f32.mrb[0].mxu0
          %v1552 = vpop.f32.mrb[0].mxu0
          %v1553 = vadd.f32 0.0, %v1552
          %v1554 = vpop.f32.mrb[0].mxu0
          %1555 = vmatprep.mubr.bf16.mxu0 0
          %1556 = vmatmul.mubr.bf16.gmra.mrb[0].mxu0 %v1480
          %v1557 = vpop.f32.mrb[0].mxu0
          %v1558 = vadd.f32 0.0, %v1557
          %v1559 = vpop.f32.mrb[0].mxu0
          %v1560 = vpop.f32.mrb[0].mxu0
          %v1561 = vadd.f32 0.0, %v1560
          %v1562 = vpop.f32.mrb[0].mxu0
          %1563 = vmatprep.mubr.bf16.mxu0 0
          %1564 = vmatmul.mubr.bf16.gmra.mrb[0].mxu0 %v1481
          %v1565 = vpop.f32.mrb[0].mxu0
          %v1566 = vadd.f32 0.0, %v1565
          %v1567 = vpop.f32.mrb[0].mxu0
          %v1568 = vpop.f32.mrb[0].mxu0
          %v1569 = vadd.f32 0.0, %v1568
          %v1570 = vpop.f32.mrb[0].mxu0
          %1571 = vmatprep.mubr.bf16.mxu0 0
          %1572 = vmatmul.mubr.bf16.gmra.mrb[0].mxu0 %v1482
          %v1573 = vpop.f32.mrb[0].mxu0
          %v1574 = vadd.f32 0.0, %v1573
          %v1575 = vpop.f32.mrb[0].mxu0
          %v1576 = vpop.f32.mrb[0].mxu0
          %v1577 = vadd.f32 0.0, %v1576
          %v1578 = vpop.f32.mrb[0].mxu0
          %1579 = vdwg.mxu0
          %v1580 = vadd.f32 %v1452, %v1518
          %v1581 = vadd.f32 %v1453, %v1521
          %v1582 = vadd.f32 %v1454, %v1526
          %v1583 = vadd.f32 %v1455, %v1529
          %v1584 = vadd.f32 %v1456, %v1534
          %v1585 = vadd.f32 %v1457, %v1537
          %v1586 = vadd.f32 %v1458, %v1542
          %v1587 = vadd.f32 %v1459, %v1545
          %v1588 = vadd.f32 %v1460, %v1550
          %v1589 = vadd.f32 %v1461, %v1553
          %v1590 = vadd.f32 %v1462, %v1558
          %v1591 = vadd.f32 %v1463, %v1561
          %v1592 = vadd.f32 %v1464, %v1566
          %v1593 = vadd.f32 %v1465, %v1569
          %v1594 = vadd.f32 %v1466, %v1574
          %v1595 = vadd.f32 %v1467, %v1577
          %vm1596 = vcmask 523264
          %1597 = vst.msk [vmem:[#allocation6] sm:$0xff] %vm1596, %v1580
          %1598 = vst.msk [vmem:[#allocation6 + $0x8] sm:$0xff] %vm1596, %v1581
          %1599 = vst.msk [vmem:[#allocation6 + $0x10] sm:$0xff] %vm1596, %v1582
          %1600 = vst.msk [vmem:[#allocation6 + $0x18] sm:$0xff] %vm1596, %v1583
          %1601 = vst.msk [vmem:[#allocation6 + $0x20] sm:$0xff] %vm1596, %v1584
          %1602 = vst.msk [vmem:[#allocation6 + $0x28] sm:$0xff] %vm1596, %v1585
          %1603 = vst.msk [vmem:[#allocation6 + $0x30] sm:$0xff] %vm1596, %v1586
          %1604 = vst.msk [vmem:[#allocation6 + $0x38] sm:$0xff] %vm1596, %v1587
          %1605 = vst.msk [vmem:[#allocation6 + $0x40] sm:$0xff] %vm1596, %v1588
          %1606 = vst.msk [vmem:[#allocation6 + $0x48] sm:$0xff] %vm1596, %v1589
          %1607 = vst.msk [vmem:[#allocation6 + $0x50] sm:$0xff] %vm1596, %v1590
          %1608 = vst.msk [vmem:[#allocation6 + $0x58] sm:$0xff] %vm1596, %v1591
          %1609 = vst.msk [vmem:[#allocation6 + $0x60] sm:$0xff] %vm1596, %v1592
          %1610 = vst.msk [vmem:[#allocation6 + $0x68] sm:$0xff] %vm1596, %v1593
          %1611 = vst.msk [vmem:[#allocation6 + $0x70] sm:$0xff] %vm1596, %v1594
          %1612 = vst.msk [vmem:[#allocation6 + $0x78] sm:$0xff] %vm1596, %v1595
        $region112: #{tpu_custom_call.1} parent=63 // pred_fallthru
          _
        // Predicated region
        $region113: #{tpu_custom_call.1} parent=63 // pred_check
          %p1613 = pneg %p1122
        $region114: #{tpu_custom_call.1} parent=63 // pred_check_branch
          %1615 = sbr.rel (%p1613) target = $region116
        $region115: #{tpu_custom_call.1} parent=63 // pred_region
          %v1616 = vld [vmem:[#allocation6] sm:$0xff]
          %v1617 = vld [vmem:[#allocation6 + $0x8] sm:$0xff]
          %v1618 = vld [vmem:[#allocation6 + $0x10] sm:$0xff]
          %v1619 = vld [vmem:[#allocation6 + $0x18] sm:$0xff]
          %v1620 = vld [vmem:[#allocation6 + $0x20] sm:$0xff]
          %v1621 = vld [vmem:[#allocation6 + $0x28] sm:$0xff]
          %v1622 = vld [vmem:[#allocation6 + $0x30] sm:$0xff]
          %v1623 = vld [vmem:[#allocation6 + $0x38] sm:$0xff]
          %v1624 = vld [vmem:[#allocation6 + $0x40] sm:$0xff]
          %v1625 = vld [vmem:[#allocation6 + $0x48] sm:$0xff]
          %v1626 = vld [vmem:[#allocation6 + $0x50] sm:$0xff]
          %v1627 = vld [vmem:[#allocation6 + $0x58] sm:$0xff]
          %v1628 = vld [vmem:[#allocation6 + $0x60] sm:$0xff]
          %v1629 = vld [vmem:[#allocation6 + $0x68] sm:$0xff]
          %v1630 = vld [vmem:[#allocation6 + $0x70] sm:$0xff]
          %v1631 = vld [vmem:[#allocation6 + $0x78] sm:$0xff]
          %s1632 = sshra.s32 %s573, 4
          %s1633 = sand.u32 %s573, 15
          %s1634 = smul.addr %s1632, 8
          %s1635 = scalar_lea.vmem [#allocation4], %s1634
          %v1636 = vld [vmem:[%s1635] sm:$0xff]
          %v1637 = vld [vmem:[%s1635 + $0x8] sm:$0xff]
          %v1638 = vld [vmem:[%s1635 + $0x10] sm:$0xff]
          %v1639 = vld [vmem:[%s1635 + $0x18] sm:$0xff]
          %v1640 = vld [vmem:[%s1635 + $0x20] sm:$0xff]
          %v1641 = vld [vmem:[%s1635 + $0x28] sm:$0xff]
          %v1642 = vld [vmem:[%s1635 + $0x30] sm:$0xff]
          %v1643 = vld [vmem:[%s1635 + $0x38] sm:$0xff]
          %v1644 = vunpack.c.l.bf16 %v1636
          %v1645 = vunpack.c.h.bf16 %v1636
          %v1646 = vunpack.c.l.bf16 %v1637
          %v1647 = vunpack.c.h.bf16 %v1637
          %v1648 = vunpack.c.l.bf16 %v1638
          %v1649 = vunpack.c.h.bf16 %v1638
          %v1650 = vunpack.c.l.bf16 %v1639
          %v1651 = vunpack.c.h.bf16 %v1639
          %v1652 = vunpack.c.l.bf16 %v1640
          %v1653 = vunpack.c.h.bf16 %v1640
          %v1654 = vunpack.c.l.bf16 %v1641
          %v1655 = vunpack.c.h.bf16 %v1641
          %v1656 = vunpack.c.l.bf16 %v1642
          %v1657 = vunpack.c.h.bf16 %v1642
          %v1658 = vunpack.c.l.bf16 %v1643
          %v1659 = vunpack.c.h.bf16 %v1643
          %v1660 = vadd.f32 %v1616, %v1644
          %v1661 = vadd.f32 %v1617, %v1645
          %v1662 = vadd.f32 %v1618, %v1646
          %v1663 = vadd.f32 %v1619, %v1647
          %v1664 = vadd.f32 %v1620, %v1648
          %v1665 = vadd.f32 %v1621, %v1649
          %v1666 = vadd.f32 %v1622, %v1650
          %v1667 = vadd.f32 %v1623, %v1651
          %v1668 = vadd.f32 %v1624, %v1652
          %v1669 = vadd.f32 %v1625, %v1653
          %v1670 = vadd.f32 %v1626, %v1654
          %v1671 = vadd.f32 %v1627, %v1655
          %v1672 = vadd.f32 %v1628, %v1656
          %v1673 = vadd.f32 %v1629, %v1657
          %v1674 = vadd.f32 %v1630, %v1658
          %v1675 = vadd.f32 %v1631, %v1659
          %v1676 = vld [vmem:[%s475] sm:$0x1]
          %v1678 = vlaneseq
          %v1679 = vshrl.u32 %v1678, 7
          %v1680 = vsub.s32 0, %v1679
          %v1681 = vrot.slane %v1676, %v1680
          %v1683 = vadd.f32 %v1660, %v1681
          %v1684 = vadd.f32 %v1661, %v1681
          %v1685 = vadd.f32 %v1662, %v1681
          %v1686 = vadd.f32 %v1663, %v1681
          %v1687 = vadd.f32 %v1664, %v1681
          %v1688 = vadd.f32 %v1665, %v1681
          %v1689 = vadd.f32 %v1666, %v1681
          %v1690 = vadd.f32 %v1667, %v1681
          %v1691 = vadd.f32 %v1668, %v1681
          %v1692 = vadd.f32 %v1669, %v1681
          %v1693 = vadd.f32 %v1670, %v1681
          %v1694 = vadd.f32 %v1671, %v1681
          %v1695 = vadd.f32 %v1672, %v1681
          %v1696 = vadd.f32 %v1673, %v1681
          %v1697 = vadd.f32 %v1674, %v1681
          %v1698 = vadd.f32 %v1675, %v1681
          %v1699 = vmax.f32 %v1683, 0.0
          %v1700 = vmax.f32 %v1684, 0.0
          %v1701 = vmax.f32 %v1685, 0.0
          %v1702 = vmax.f32 %v1686, 0.0
          %v1703 = vmax.f32 %v1687, 0.0
          %v1704 = vmax.f32 %v1688, 0.0
          %v1705 = vmax.f32 %v1689, 0.0
          %v1706 = vmax.f32 %v1690, 0.0
          %v1707 = vmax.f32 %v1691, 0.0
          %v1708 = vmax.f32 %v1692, 0.0
          %v1709 = vmax.f32 %v1693, 0.0
          %v1710 = vmax.f32 %v1694, 0.0
          %v1711 = vmax.f32 %v1695, 0.0
          %v1712 = vmax.f32 %v1696, 0.0
          %v1713 = vmax.f32 %v1697, 0.0
          %v1714 = vmax.f32 %v1698, 0.0
          %v1715 = vpack.c.bf16 %v1700, %v1699
          %v1716 = vpack.c.bf16 %v1702, %v1701
          %v1717 = vpack.c.bf16 %v1704, %v1703
          %v1718 = vpack.c.bf16 %v1706, %v1705
          %v1719 = vpack.c.bf16 %v1708, %v1707
          %v1720 = vpack.c.bf16 %v1710, %v1709
          %v1721 = vpack.c.bf16 %v1712, %v1711
          %v1722 = vpack.c.bf16 %v1714, %v1713
          %s1723 = smul.addr %s1632, 8
          %s1724 = scalar_lea.vmem [#allocation5], %s1723
          %vm1725 = vcmask 523264
          %1726 = vst.msk [vmem:[%s1724] sm:$0xff] %vm1725, %v1715
          %1727 = vst.msk [vmem:[%s1724 + $0x8] sm:$0xff] %vm1725, %v1716
          %1728 = vst.msk [vmem:[%s1724 + $0x10] sm:$0xff] %vm1725, %v1717
          %1729 = vst.msk [vmem:[%s1724 + $0x18] sm:$0xff] %vm1725, %v1718
          %1730 = vst.msk [vmem:[%s1724 + $0x20] sm:$0xff] %vm1725, %v1719
          %1731 = vst.msk [vmem:[%s1724 + $0x28] sm:$0xff] %vm1725, %v1720
          %1732 = vst.msk [vmem:[%s1724 + $0x30] sm:$0xff] %vm1725, %v1721
          %1733 = vst.msk [vmem:[%s1724 + $0x38] sm:$0xff] %vm1725, %v1722
          %v1734 = vlaneseq
          %v1735 = vshrl.u32 %v1734, 7
          %v1736 = vadd.s32 %v1735, 8
          %v1737 = vadd.s32 %v1735, 16
          %v1738 = vadd.s32 %v1735, 24
          %v1739 = vadd.s32 %v1735, 32
          %v1740 = vadd.s32 %v1735, 40
          %v1741 = vadd.s32 %v1735, 48
          %v1742 = vadd.s32 %v1735, 56
          %v1743 = vadd.s32 %v1735, 64
          %v1744 = vadd.s32 %v1735, 72
          %v1745 = vadd.s32 %v1735, 80
          %v1746 = vadd.s32 %v1735, 88
          %v1747 = vadd.s32 %v1735, 96
          %v1748 = vadd.s32 %v1735, 104
          %v1749 = vadd.s32 %v1735, 112
          %v1750 = vadd.s32 %v1735, 120
          %v1751 = vstv %s573
          %v1752 = vadd.s32 %v1735, %v1751
          %v1753 = vadd.s32 %v1736, %v1751
          %v1754 = vadd.s32 %v1737, %v1751
          %v1755 = vadd.s32 %v1738, %v1751
          %v1756 = vadd.s32 %v1739, %v1751
          %v1757 = vadd.s32 %v1740, %v1751
          %v1758 = vadd.s32 %v1741, %v1751
          %v1759 = vadd.s32 %v1742, %v1751
          %v1760 = vadd.s32 %v1743, %v1751
          %v1761 = vadd.s32 %v1744, %v1751
          %v1762 = vadd.s32 %v1745, %v1751
          %v1763 = vadd.s32 %v1746, %v1751
          %v1764 = vadd.s32 %v1747, %v1751
          %v1765 = vadd.s32 %v1748, %v1751
          %v1766 = vadd.s32 %v1749, %v1751
          %v1767 = vadd.s32 %v1750, %v1751
          %vm1768 = vcmp.lt.s32.totalorder %v1752, 32
          %vm1769 = vcmp.lt.s32.totalorder %v1753, 32
          %vm1770 = vcmp.lt.s32.totalorder %v1754, 32
          %vm1771 = vcmp.lt.s32.totalorder %v1755, 32
          %vm1772 = vcmp.lt.s32.totalorder %v1756, 32
          %vm1773 = vcmp.lt.s32.totalorder %v1757, 32
          %vm1774 = vcmp.lt.s32.totalorder %v1758, 32
          %vm1775 = vcmp.lt.s32.totalorder %v1759, 32
          %vm1776 = vcmp.lt.s32.totalorder %v1760, 32
          %vm1777 = vcmp.lt.s32.totalorder %v1761, 32
          %vm1778 = vcmp.lt.s32.totalorder %v1762, 32
          %vm1779 = vcmp.lt.s32.totalorder %v1763, 32
          %vm1780 = vcmp.lt.s32.totalorder %v1764, 32
          %vm1781 = vcmp.lt.s32.totalorder %v1765, 32
          %vm1782 = vcmp.lt.s32.totalorder %v1766, 32
          %vm1783 = vcmp.lt.s32.totalorder %v1767, 32
          %v1784 = vsel %vm1768, 1, 0
          %v1785 = vsel %vm1769, 1, 0
          %v1786 = vsel %vm1770, 1, 0
          %v1787 = vsel %vm1771, 1, 0
          %v1788 = vsel %vm1772, 1, 0
          %v1789 = vsel %vm1773, 1, 0
          %v1790 = vsel %vm1774, 1, 0
          %v1791 = vsel %vm1775, 1, 0
          %v1792 = vsel %vm1776, 1, 0
          %v1793 = vsel %vm1777, 1, 0
          %v1794 = vsel %vm1778, 1, 0
          %v1795 = vsel %vm1779, 1, 0
          %v1796 = vsel %vm1780, 1, 0
          %v1797 = vsel %vm1781, 1, 0
          %v1798 = vsel %vm1782, 1, 0
          %v1799 = vsel %vm1783, 1, 0
          %v1800 = vcvt.s32.f32 %v1784
          %v1801 = vcvt.s32.f32 %v1785
          %v1802 = vcvt.s32.f32 %v1786
          %v1803 = vcvt.s32.f32 %v1787
          %v1804 = vcvt.s32.f32 %v1788
          %v1805 = vcvt.s32.f32 %v1789
          %v1806 = vcvt.s32.f32 %v1790
          %v1807 = vcvt.s32.f32 %v1791
          %v1808 = vcvt.s32.f32 %v1792
          %v1809 = vcvt.s32.f32 %v1793
          %v1810 = vcvt.s32.f32 %v1794
          %v1811 = vcvt.s32.f32 %v1795
          %v1812 = vcvt.s32.f32 %v1796
          %v1813 = vcvt.s32.f32 %v1797
          %v1814 = vcvt.s32.f32 %v1798
          %v1815 = vcvt.s32.f32 %v1799
          %v1816 = vmul.f32 %v1699, %v1800
          %v1817 = vmul.f32 %v1700, %v1801
          %v1818 = vmul.f32 %v1701, %v1802
          %v1819 = vmul.f32 %v1702, %v1803
          %v1820 = vmul.f32 %v1703, %v1804
          %v1821 = vmul.f32 %v1704, %v1805
          %v1822 = vmul.f32 %v1705, %v1806
          %v1823 = vmul.f32 %v1706, %v1807
          %v1824 = vmul.f32 %v1707, %v1808
          %v1825 = vmul.f32 %v1708, %v1809
          %v1826 = vmul.f32 %v1709, %v1810
          %v1827 = vmul.f32 %v1710, %v1811
          %v1828 = vmul.f32 %v1711, %v1812
          %v1829 = vmul.f32 %v1712, %v1813
          %v1830 = vmul.f32 %v1713, %v1814
          %v1831 = vmul.f32 %v1714, %v1815
          %v1832 = vld [vmem:[#allocation7] sm:$0x3]
          %v1833 = vsel %vm1725, %v1816, 0.0
          %v1834 = vsel %vm1725, %v1817, 0.0
          %v1835 = vadd.f32 %v1833, %v1834
          %v1836 = vsel %vm1725, %v1818, 0.0
          %v1837 = vadd.f32 %v1835, %v1836
          %v1838 = vsel %vm1725, %v1819, 0.0
          %v1839 = vadd.f32 %v1837, %v1838
          %v1840 = vsel %vm1725, %v1820, 0.0
          %v1841 = vadd.f32 %v1839, %v1840
          %v1842 = vsel %vm1725, %v1821, 0.0
          %v1843 = vadd.f32 %v1841, %v1842
          %v1844 = vsel %vm1725, %v1822, 0.0
          %v1845 = vadd.f32 %v1843, %v1844
          %v1846 = vsel %vm1725, %v1823, 0.0
          %v1847 = vadd.f32 %v1845, %v1846
          %v1848 = vsel %vm1725, %v1824, 0.0
          %v1849 = vadd.f32 %v1847, %v1848
          %v1850 = vsel %vm1725, %v1825, 0.0
          %v1851 = vadd.f32 %v1849, %v1850
          %v1852 = vsel %vm1725, %v1826, 0.0
          %v1853 = vadd.f32 %v1851, %v1852
          %v1854 = vsel %vm1725, %v1827, 0.0
          %v1855 = vadd.f32 %v1853, %v1854
          %v1856 = vsel %vm1725, %v1828, 0.0
          %v1857 = vadd.f32 %v1855, %v1856
          %v1858 = vsel %vm1725, %v1829, 0.0
          %v1859 = vadd.f32 %v1857, %v1858
          %v1860 = vsel %vm1725, %v1830, 0.0
          %v1861 = vadd.f32 %v1859, %v1860
          %v1862 = vsel %vm1725, %v1831, 0.0
          %v1863 = vadd.f32 %v1861, %v1862
          %v1864 = vrot.slane %v1863, 4
          %v1865 = vadd.f32 %v1863, %v1864
          %v1866 = vrot.slane %v1865, 2
          %v1867 = vadd.f32 %v1865, %v1866
          %v1868 = vrot.slane %v1867, 1
          %v1869 = vadd.f32 %v1867, %v1868
          %v1870 = vmul.f32 %v1816, %v1816
          %v1871 = vmul.f32 %v1817, %v1817
          %v1872 = vmul.f32 %v1818, %v1818
          %v1873 = vmul.f32 %v1819, %v1819
          %v1874 = vmul.f32 %v1820, %v1820
          %v1875 = vmul.f32 %v1821, %v1821
          %v1876 = vmul.f32 %v1822, %v1822
          %v1877 = vmul.f32 %v1823, %v1823
          %v1878 = vmul.f32 %v1824, %v1824
          %v1879 = vmul.f32 %v1825, %v1825
          %v1880 = vmul.f32 %v1826, %v1826
          %v1881 = vmul.f32 %v1827, %v1827
          %v1882 = vmul.f32 %v1828, %v1828
          %v1883 = vmul.f32 %v1829, %v1829
          %v1884 = vmul.f32 %v1830, %v1830
          %v1885 = vmul.f32 %v1831, %v1831
          %v1886 = vsel %vm1725, %v1870, 0.0
          %v1887 = vsel %vm1725, %v1871, 0.0
          %v1888 = vadd.f32 %v1886, %v1887
          %v1889 = vsel %vm1725, %v1872, 0.0
          %v1890 = vadd.f32 %v1888, %v1889
          %v1891 = vsel %vm1725, %v1873, 0.0
          %v1892 = vadd.f32 %v1890, %v1891
          %v1893 = vsel %vm1725, %v1874, 0.0
          %v1894 = vadd.f32 %v1892, %v1893
          %v1895 = vsel %vm1725, %v1875, 0.0
          %v1896 = vadd.f32 %v1894, %v1895
          %v1897 = vsel %vm1725, %v1876, 0.0
          %v1898 = vadd.f32 %v1896, %v1897
          %v1899 = vsel %vm1725, %v1877, 0.0
          %v1900 = vadd.f32 %v1898, %v1899
          %v1901 = vsel %vm1725, %v1878, 0.0
          %v1902 = vadd.f32 %v1900, %v1901
          %v1903 = vsel %vm1725, %v1879, 0.0
          %v1904 = vadd.f32 %v1902, %v1903
          %v1905 = vsel %vm1725, %v1880, 0.0
          %v1906 = vadd.f32 %v1904, %v1905
          %v1907 = vsel %vm1725, %v1881, 0.0
          %v1908 = vadd.f32 %v1906, %v1907
          %v1909 = vsel %vm1725, %v1882, 0.0
          %v1910 = vadd.f32 %v1908, %v1909
          %v1911 = vsel %vm1725, %v1883, 0.0
          %v1912 = vadd.f32 %v1910, %v1911
          %v1913 = vsel %vm1725, %v1884, 0.0
          %v1914 = vadd.f32 %v1912, %v1913
          %v1915 = vsel %vm1725, %v1885, 0.0
          %v1916 = vadd.f32 %v1914, %v1915
          %v1917 = vrot.slane %v1916, 4
          %v1918 = vadd.f32 %v1916, %v1917
          %v1919 = vrot.slane %v1918, 2
          %v1920 = vadd.f32 %v1918, %v1919
          %v1921 = vrot.slane %v1920, 1
          %v1922 = vadd.f32 %v1920, %v1921
          %vm1923 = vcmask 1040384
          %v1924 = vsel %vm1923, %v1869, %v1922
          %v1925 = vadd.f32 %v1832, %v1924
          %vm1926 = vcmask 517120
          %1927 = vst.msk [vmem:[#allocation7] sm:$0x3] %vm1926, %v1925
        $region116: #{tpu_custom_call.1} parent=63 // pred_fallthru
          _
        %p1928 = pnand %p575, %p1122
        %p1929 = pneg %p1928
        // Predicated region
        $region117: #{tpu_custom_call.1} parent=63 // pred_check
          _
        $region118: #{tpu_custom_call.1} parent=63 // pred_check_branch
          %1931 = sbr.rel (%p1928) target = $region120
        $region119: #{tpu_custom_call.1} parent=63 // pred_region
          %v1932 = vld [vmem:[#allocation7] sm:$0x1]
          %v1933 = vmul.f32 %v1932, 0.03125
          %v1934 = vld [vmem:[#allocation7 + $0x1] sm:$0x1]
          %v1935 = vmul.f32 %v1934, 0.03125
          %v1936 = vmul.f32 %v1933, %v1933
          %v1937 = vsub.f32 %v1935, %v1936
          %v1938 = vmax.f32 %v1937, 0.0
          %v1939 = vld [vmem:[%s483] sm:$0x1]
          %v1940 = vadd.f32 %v1938, 1e-05
          %v1941 = vrsqrt.pop %v1940
          %v1942 = vmul.f32 %v1939, %v1941
          %vm1943 = vcmask 516096
          %1944 = vst.msk [vmem:[#allocation8] sm:$0x1] %vm1943, %v1942
          %v1945 = vld [vmem:[%s491] sm:$0x1]
          %v1946 = vmul.f32 %v1933, %v1942
          %v1947 = vsub.f32 %v1945, %v1946
          %1948 = vst.msk [vmem:[#allocation8 + $0x1] sm:$0x1] %vm1943, %v1947
          %p1949 = scmp.eq.s32.totalorder %s35, 2
          // Predicated region
          $region121: #{tpu_custom_call.1} parent=119 // pred_check
            %p1950 = pneg %p1949
          $region122: #{tpu_custom_call.1} parent=119 // pred_check_branch
            %1952 = sbr.rel (%p1950) target = $region124
          $region123: #{tpu_custom_call.1} parent=119 // pred_region
            %v1953 = vld [vmem:[#allocation8] sm:$0x1]
            %v1954 = vld [vmem:[#allocation8 + $0x1] sm:$0x1]
            %v1955 = vld [vmem:[#allocation5] sm:$0xff]
            %v1956 = vld [vmem:[#allocation5 + $0x8] sm:$0xff]
            %v1957 = vld [vmem:[#allocation5 + $0x10] sm:$0xff]
            %v1958 = vld [vmem:[#allocation5 + $0x18] sm:$0xff]
            %v1959 = vld [vmem:[#allocation5 + $0x20] sm:$0xff]
            %v1960 = vld [vmem:[#allocation5 + $0x28] sm:$0xff]
            %v1961 = vld [vmem:[#allocation5 + $0x30] sm:$0xff]
            %v1962 = vld [vmem:[#allocation5 + $0x38] sm:$0xff]
            %v1963 = vunpack.c.l.bf16 %v1955
            %v1964 = vunpack.c.h.bf16 %v1955
            %v1965 = vunpack.c.l.bf16 %v1956
            %v1966 = vunpack.c.h.bf16 %v1956
            %v1967 = vunpack.c.l.bf16 %v1957
            %v1968 = vunpack.c.h.bf16 %v1957
            %v1969 = vunpack.c.l.bf16 %v1958
            %v1970 = vunpack.c.h.bf16 %v1958
            %v1971 = vunpack.c.l.bf16 %v1959
            %v1972 = vunpack.c.h.bf16 %v1959
            %v1973 = vunpack.c.l.bf16 %v1960
            %v1974 = vunpack.c.h.bf16 %v1960
            %v1975 = vunpack.c.l.bf16 %v1961
            %v1976 = vunpack.c.h.bf16 %v1961
            %v1977 = vunpack.c.l.bf16 %v1962
            %v1978 = vunpack.c.h.bf16 %v1962
            %v1979 = vlaneseq
            %v1980 = vshrl.u32 %v1979, 7
            %v1981 = vsub.s32 0, %v1980
            %v1982 = vrot.slane %v1953, %v1981
            %v1983 = vmul.f32 %v1963, %v1982
            %v1984 = vmul.f32 %v1964, %v1982
            %v1985 = vmul.f32 %v1965, %v1982
            %v1986 = vmul.f32 %v1966, %v1982
            %v1987 = vmul.f32 %v1967, %v1982
            %v1988 = vmul.f32 %v1968, %v1982
            %v1989 = vmul.f32 %v1969, %v1982
            %v1990 = vmul.f32 %v1970, %v1982
            %v1991 = vmul.f32 %v1971, %v1982
            %v1992 = vmul.f32 %v1972, %v1982
            %v1993 = vmul.f32 %v1973, %v1982
            %v1994 = vmul.f32 %v1974, %v1982
            %v1995 = vmul.f32 %v1975, %v1982
            %v1996 = vmul.f32 %v1976, %v1982
            %v1997 = vmul.f32 %v1977, %v1982
            %v1998 = vmul.f32 %v1978, %v1982
            %v1999 = vlaneseq
            %v2000 = vshrl.u32 %v1999, 7
            %v2001 = vsub.s32 0, %v2000
            %v2002 = vrot.slane %v1954, %v2001
            %v2003 = vadd.f32 %v1983, %v2002
            %v2004 = vadd.f32 %v1984, %v2002
            %v2005 = vadd.f32 %v1985, %v2002
            %v2006 = vadd.f32 %v1986, %v2002
            %v2007 = vadd.f32 %v1987, %v2002
            %v2008 = vadd.f32 %v1988, %v2002
            %v2009 = vadd.f32 %v1989, %v2002
            %v2010 = vadd.f32 %v1990, %v2002
            %v2011 = vadd.f32 %v1991, %v2002
            %v2012 = vadd.f32 %v1992, %v2002
            %v2013 = vadd.f32 %v1993, %v2002
            %v2014 = vadd.f32 %v1994, %v2002
            %v2015 = vadd.f32 %v1995, %v2002
            %v2016 = vadd.f32 %v1996, %v2002
            %v2017 = vadd.f32 %v1997, %v2002
            %v2018 = vadd.f32 %v1998, %v2002
            %v2019 = vmax.f32 %v2003, 0.0
            %v2020 = vmax.f32 %v2004, 0.0
            %v2021 = vmax.f32 %v2005, 0.0
            %v2022 = vmax.f32 %v2006, 0.0
            %v2023 = vmax.f32 %v2007, 0.0
            %v2024 = vmax.f32 %v2008, 0.0
            %v2025 = vmax.f32 %v2009, 0.0
            %v2026 = vmax.f32 %v2010, 0.0
            %v2027 = vmax.f32 %v2011, 0.0
            %v2028 = vmax.f32 %v2012, 0.0
            %v2029 = vmax.f32 %v2013, 0.0
            %v2030 = vmax.f32 %v2014, 0.0
            %v2031 = vmax.f32 %v2015, 0.0
            %v2032 = vmax.f32 %v2016, 0.0
            %v2033 = vmax.f32 %v2017, 0.0
            %v2034 = vmax.f32 %v2018, 0.0
            %v2035 = vld [vmem:[#allocation2] sm:$0xff]
            %v2036 = vld [vmem:[#allocation2 + $0x8] sm:$0xff]
            %v2037 = vld [vmem:[#allocation2 + $0x10] sm:$0xff]
            %v2038 = vld [vmem:[#allocation2 + $0x18] sm:$0xff]
            %v2039 = vld [vmem:[#allocation2 + $0x20] sm:$0xff]
            %v2040 = vld [vmem:[#allocation2 + $0x28] sm:$0xff]
            %v2041 = vld [vmem:[#allocation2 + $0x30] sm:$0xff]
            %v2042 = vld [vmem:[#allocation2 + $0x38] sm:$0xff]
            %v2043 = vld [vmem:[#allocation2 + $0x40] sm:$0xff]
            %v2044 = vld [vmem:[#allocation2 + $0x48] sm:$0xff]
            %v2045 = vld [vmem:[#allocation2 + $0x50] sm:$0xff]
            %v2046 = vld [vmem:[#allocation2 + $0x58] sm:$0xff]
            %v2047 = vld [vmem:[#allocation2 + $0x60] sm:$0xff]
            %v2048 = vld [vmem:[#allocation2 + $0x68] sm:$0xff]
            %v2049 = vld [vmem:[#allocation2 + $0x70] sm:$0xff]
            %v2050 = vld [vmem:[#allocation2 + $0x78] sm:$0xff]
            %v2051 = vadd.f32 %v2019, %v2035
            %v2052 = vadd.f32 %v2020, %v2036
            %v2053 = vadd.f32 %v2021, %v2037
            %v2054 = vadd.f32 %v2022, %v2038
            %v2055 = vadd.f32 %v2023, %v2039
            %v2056 = vadd.f32 %v2024, %v2040
            %v2057 = vadd.f32 %v2025, %v2041
            %v2058 = vadd.f32 %v2026, %v2042
            %v2059 = vadd.f32 %v2027, %v2043
            %v2060 = vadd.f32 %v2028, %v2044
            %v2061 = vadd.f32 %v2029, %v2045
            %v2062 = vadd.f32 %v2030, %v2046
            %v2063 = vadd.f32 %v2031, %v2047
            %v2064 = vadd.f32 %v2032, %v2048
            %v2065 = vadd.f32 %v2033, %v2049
            %v2066 = vadd.f32 %v2034, %v2050
            %v2067 = vlaneseq
            %v2068 = vshrl.u32 %v2067, 7
            %v2069 = vadd.s32 %v2068, 8
            %v2070 = vadd.s32 %v2068, 16
            %v2071 = vadd.s32 %v2068, 24
            %v2072 = vadd.s32 %v2068, 32
            %v2073 = vadd.s32 %v2068, 40
            %v2074 = vadd.s32 %v2068, 48
            %v2075 = vadd.s32 %v2068, 56
            %v2076 = vadd.s32 %v2068, 64
            %v2077 = vadd.s32 %v2068, 72
            %v2078 = vadd.s32 %v2068, 80
            %v2079 = vadd.s32 %v2068, 88
            %v2080 = vadd.s32 %v2068, 96
            %v2081 = vadd.s32 %v2068, 104
            %v2082 = vadd.s32 %v2068, 112
            %v2083 = vadd.s32 %v2068, 120
            %v2084 = vstv 0
            %v2085 = vadd.s32 %v2068, %v2084
            %v2086 = vadd.s32 %v2069, %v2084
            %v2087 = vadd.s32 %v2070, %v2084
            %v2088 = vadd.s32 %v2071, %v2084
            %v2089 = vadd.s32 %v2072, %v2084
            %v2090 = vadd.s32 %v2073, %v2084
            %v2091 = vadd.s32 %v2074, %v2084
            %v2092 = vadd.s32 %v2075, %v2084
            %v2093 = vadd.s32 %v2076, %v2084
            %v2094 = vadd.s32 %v2077, %v2084
            %v2095 = vadd.s32 %v2078, %v2084
            %v2096 = vadd.s32 %v2079, %v2084
            %v2097 = vadd.s32 %v2080, %v2084
            %v2098 = vadd.s32 %v2081, %v2084
            %v2099 = vadd.s32 %v2082, %v2084
            %v2100 = vadd.s32 %v2083, %v2084
            %vm2101 = vcmp.lt.s32.totalorder %v2085, 32
            %vm2102 = vcmp.lt.s32.totalorder %v2086, 32
            %vm2103 = vcmp.lt.s32.totalorder %v2087, 32
            %vm2104 = vcmp.lt.s32.totalorder %v2088, 32
            %vm2105 = vcmp.lt.s32.totalorder %v2089, 32
            %vm2106 = vcmp.lt.s32.totalorder %v2090, 32
            %vm2107 = vcmp.lt.s32.totalorder %v2091, 32
            %vm2108 = vcmp.lt.s32.totalorder %v2092, 32
            %vm2109 = vcmp.lt.s32.totalorder %v2093, 32
            %vm2110 = vcmp.lt.s32.totalorder %v2094, 32
            %vm2111 = vcmp.lt.s32.totalorder %v2095, 32
            %vm2112 = vcmp.lt.s32.totalorder %v2096, 32
            %vm2113 = vcmp.lt.s32.totalorder %v2097, 32
            %vm2114 = vcmp.lt.s32.totalorder %v2098, 32
            %vm2115 = vcmp.lt.s32.totalorder %v2099, 32
            %vm2116 = vcmp.lt.s32.totalorder %v2100, 32
            %v2117 = vsel %vm2101, 1, 0
            %v2118 = vsel %vm2102, 1, 0
            %v2119 = vsel %vm2103, 1, 0
            %v2120 = vsel %vm2104, 1, 0
            %v2121 = vsel %vm2105, 1, 0
            %v2122 = vsel %vm2106, 1, 0
            %v2123 = vsel %vm2107, 1, 0
            %v2124 = vsel %vm2108, 1, 0
            %v2125 = vsel %vm2109, 1, 0
            %v2126 = vsel %vm2110, 1, 0
            %v2127 = vsel %vm2111, 1, 0
            %v2128 = vsel %vm2112, 1, 0
            %v2129 = vsel %vm2113, 1, 0
            %v2130 = vsel %vm2114, 1, 0
            %v2131 = vsel %vm2115, 1, 0
            %v2132 = vsel %vm2116, 1, 0
            %v2133 = vcvt.s32.f32 %v2117
            %v2134 = vcvt.s32.f32 %v2118
            %v2135 = vcvt.s32.f32 %v2119
            %v2136 = vcvt.s32.f32 %v2120
            %v2137 = vcvt.s32.f32 %v2121
            %v2138 = vcvt.s32.f32 %v2122
            %v2139 = vcvt.s32.f32 %v2123
            %v2140 = vcvt.s32.f32 %v2124
            %v2141 = vcvt.s32.f32 %v2125
            %v2142 = vcvt.s32.f32 %v2126
            %v2143 = vcvt.s32.f32 %v2127
            %v2144 = vcvt.s32.f32 %v2128
            %v2145 = vcvt.s32.f32 %v2129
            %v2146 = vcvt.s32.f32 %v2130
            %v2147 = vcvt.s32.f32 %v2131
            %v2148 = vcvt.s32.f32 %v2132
            %v2149 = vmul.f32 %v2051, %v2133
            %v2150 = vmul.f32 %v2052, %v2134
            %v2151 = vmul.f32 %v2053, %v2135
            %v2152 = vmul.f32 %v2054, %v2136
            %v2153 = vmul.f32 %v2055, %v2137
            %v2154 = vmul.f32 %v2056, %v2138
            %v2155 = vmul.f32 %v2057, %v2139
            %v2156 = vmul.f32 %v2058, %v2140
            %v2157 = vmul.f32 %v2059, %v2141
            %v2158 = vmul.f32 %v2060, %v2142
            %v2159 = vmul.f32 %v2061, %v2143
            %v2160 = vmul.f32 %v2062, %v2144
            %v2161 = vmul.f32 %v2063, %v2145
            %v2162 = vmul.f32 %v2064, %v2146
            %v2163 = vmul.f32 %v2065, %v2147
            %v2164 = vmul.f32 %v2066, %v2148
            %vm2165 = vcmask 523264
            %2166 = vst.msk [vmem:[#allocation2] sm:$0xff] %vm2165, %v2149
            %2167 = vst.msk [vmem:[#allocation2 + $0x8] sm:$0xff] %vm2165, %v2150
            %2168 = vst.msk [vmem:[#allocation2 + $0x10] sm:$0xff] %vm2165, %v2151
            %2169 = vst.msk [vmem:[#allocation2 + $0x18] sm:$0xff] %vm2165, %v2152
            %2170 = vst.msk [vmem:[#allocation2 + $0x20] sm:$0xff] %vm2165, %v2153
            %2171 = vst.msk [vmem:[#allocation2 + $0x28] sm:$0xff] %vm2165, %v2154
            %2172 = vst.msk [vmem:[#allocation2 + $0x30] sm:$0xff] %vm2165, %v2155
            %2173 = vst.msk [vmem:[#allocation2 + $0x38] sm:$0xff] %vm2165, %v2156
            %2174 = vst.msk [vmem:[#allocation2 + $0x40] sm:$0xff] %vm2165, %v2157
            %2175 = vst.msk [vmem:[#allocation2 + $0x48] sm:$0xff] %vm2165, %v2158
            %2176 = vst.msk [vmem:[#allocation2 + $0x50] sm:$0xff] %vm2165, %v2159
            %2177 = vst.msk [vmem:[#allocation2 + $0x58] sm:$0xff] %vm2165, %v2160
            %2178 = vst.msk [vmem:[#allocation2 + $0x60] sm:$0xff] %vm2165, %v2161
            %2179 = vst.msk [vmem:[#allocation2 + $0x68] sm:$0xff] %vm2165, %v2162
            %2180 = vst.msk [vmem:[#allocation2 + $0x70] sm:$0xff] %vm2165, %v2163
            %2181 = vst.msk [vmem:[#allocation2 + $0x78] sm:$0xff] %vm2165, %v2164
            %v2182 = vld [vmem:[#allocation10] sm:$0xff]
            %v2183 = vld [vmem:[#allocation2] sm:$0xff]
            %v2184 = vld [vmem:[#allocation2 + $0x8] sm:$0xff]
            %v2185 = vld [vmem:[#allocation2 + $0x10] sm:$0xff]
            %v2186 = vld [vmem:[#allocation2 + $0x18] sm:$0xff]
            %v2187 = vld [vmem:[#allocation2 + $0x20] sm:$0xff]
            %v2188 = vld [vmem:[#allocation2 + $0x28] sm:$0xff]
            %v2189 = vld [vmem:[#allocation2 + $0x30] sm:$0xff]
            %v2190 = vld [vmem:[#allocation2 + $0x38] sm:$0xff]
            %v2191 = vld [vmem:[#allocation2 + $0x40] sm:$0xff]
            %v2192 = vld [vmem:[#allocation2 + $0x48] sm:$0xff]
            %v2193 = vld [vmem:[#allocation2 + $0x50] sm:$0xff]
            %v2194 = vld [vmem:[#allocation2 + $0x58] sm:$0xff]
            %v2195 = vld [vmem:[#allocation2 + $0x60] sm:$0xff]
            %v2196 = vld [vmem:[#allocation2 + $0x68] sm:$0xff]
            %v2197 = vld [vmem:[#allocation2 + $0x70] sm:$0xff]
            %v2198 = vld [vmem:[#allocation2 + $0x78] sm:$0xff]
            %2199 = vmatprep.subr.mxu0 0.0
            %2200 = vmatpush1.msra.mxu0 %v2183
            %2201 = vmatprep.subr.mxu0 0.0
            %2202 = vmatpush1.msra.mxu0 %v2184
            %2203 = vmatprep.subr.mxu0 0.0
            %2204 = vmatpush1.msra.mxu0 %v2185
            %2205 = vmatprep.subr.mxu0 0.0
            %2206 = vmatpush1.msra.mxu0 %v2186
            %2207 = vmatprep.subr.mxu0 0.0
            %2208 = vmatpush1.msra.mxu0 %v2187
            %2209 = vmatprep.subr.mxu0 0.0
            %2210 = vmatpush1.msra.mxu0 %v2188
            %2211 = vmatprep.subr.mxu0 0.0
            %2212 = vmatpush1.msra.mxu0 %v2189
            %2213 = vmatprep.subr.mxu0 0.0
            %2214 = vmatpush1.msra.mxu0 %v2190
            %2215 = vmatprep.subr.mxu0 0.0
            %2216 = vmatpush1.msra.mxu0 %v2191
            %2217 = vmatprep.subr.mxu0 0.0
            %2218 = vmatpush1.msra.mxu0 %v2192
            %2219 = vmatprep.subr.mxu0 0.0
            %2220 = vmatpush1.msra.mxu0 %v2193
            %2221 = vmatprep.subr.mxu0 0.0
            %2222 = vmatpush1.msra.mxu0 %v2194
            %2223 = vmatprep.subr.mxu0 0.0
            %2224 = vmatpush1.msra.mxu0 %v2195
            %2225 = vmatprep.subr.mxu0 0.0
            %2226 = vmatpush1.msra.mxu0 %v2196
            %2227 = vmatprep.subr.mxu0 0.0
            %2228 = vmatpush1.msra.mxu0 %v2197
            %2229 = vmatprep.subr.mxu0 0.0
            %2230 = vmatpush1.msra.mxu0 %v2198
            %2231 = vmatprep.subr.mxu0 0.0
            %2232 = vmatpush1.msra.mxu0 0.0
            %2233 = vmatprep.subr.mxu0 0.0
            %2234 = vmatpush1.msra.mxu0 0.0
            %2235 = vmatprep.subr.mxu0 0.0
            %2236 = vmatpush1.msra.mxu0 0.0
            %2237 = vmatprep.subr.mxu0 0.0
            %2238 = vmatpush1.msra.mxu0 0.0
            %2239 = vmatprep.subr.mxu0 0.0
            %2240 = vmatpush1.msra.mxu0 0.0
            %2241 = vmatprep.subr.mxu0 0.0
            %2242 = vmatpush1.msra.mxu0 0.0
            %2243 = vmatprep.subr.mxu0 0.0
            %2244 = vmatpush1.msra.mxu0 0.0
            %2245 = vmatprep.subr.mxu0 0.0
            %2246 = vmatpush1.msra.mxu0 0.0
            %2247 = vmatprep.subr.mxu0 0.0
            %2248 = vmatpush1.msra.mxu0 0.0
            %2249 = vmatprep.subr.mxu0 0.0
            %2250 = vmatpush1.msra.mxu0 0.0
            %2251 = vmatprep.subr.mxu0 0.0
            %2252 = vmatpush1.msra.mxu0 0.0
            %2253 = vmatprep.subr.mxu0 0.0
            %2254 = vmatpush1.msra.mxu0 0.0
            %2255 = vmatprep.subr.mxu0 0.0
            %2256 = vmatpush1.msra.mxu0 0.0
            %2257 = vmatprep.subr.mxu0 0.0
            %2258 = vmatpush1.msra.mxu0 0.0
            %2259 = vmatprep.subr.mxu0 0.0
            %2260 = vmatpush1.msra.mxu0 0.0
            %2261 = vmatprep.subr.mxu0 0.0
            %2262 = vmatpush1.msra.mxu0 0.0
            %2263 = vmatprep.mubr.f32.mxu0 0.0
            %2264 = vmatmul.mubr.f32.gmra.mrb[0].mxu0 %v2182
            %v2265 = vpop.f32.mrb[0].mxu0
            %v2266 = vadd.f32 0.0, %v2265
            %v2267 = vpop.f32.mrb[0].mxu0
            %2268 = vdwg.mxu0
            %v2269 = vld [vmem:[#allocation18] sm:$0xff]
            %v2270 = vld [vmem:[#allocation18 + $0x8] sm:$0xff]
            %v2271 = vld [vmem:[#allocation18 + $0x10] sm:$0xff]
            %v2272 = vld [vmem:[#allocation18 + $0x18] sm:$0xff]
            %v2273 = vld [vmem:[#allocation18 + $0x20] sm:$0xff]
            %v2274 = vld [vmem:[#allocation18 + $0x28] sm:$0xff]
            %v2275 = vld [vmem:[#allocation18 + $0x30] sm:$0xff]
            %v2276 = vld [vmem:[#allocation18 + $0x38] sm:$0xff]
            %v2277 = vld [vmem:[%s8] sm:$0x1]
            %v2279 = vlaneseq
            %v2280 = vshrl.u32 %v2279, 7
            %v2281 = vsub.s32 0, %v2280
            %v2282 = vrot.slane %v2277, %v2281
            %v2285 = vsel %vm2165, %v2266, 0
            %2287 = vmatprep.subr.mxu0 0.0
            %2288 = vmatpush1.msra.mxu0 %v2269
            %2289 = vmatprep.subr.mxu0 0.0
            %2290 = vmatpush1.msra.mxu0 %v2270
            %2291 = vmatprep.subr.mxu0 0.0
            %2292 = vmatpush1.msra.mxu0 %v2271
            %2293 = vmatprep.subr.mxu0 0.0
            %2294 = vmatpush1.msra.mxu0 %v2272
            %2295 = vmatprep.subr.mxu0 0.0
            %2296 = vmatpush1.msra.mxu0 %v2273
            %2297 = vmatprep.subr.mxu0 0.0
            %2298 = vmatpush1.msra.mxu0 %v2274
            %2299 = vmatprep.subr.mxu0 0.0
            %2300 = vmatpush1.msra.mxu0 %v2275
            %2301 = vmatprep.subr.mxu0 0.0
            %2302 = vmatpush1.msra.mxu0 %v2276
            %2303 = vmatprep.subr.mxu0 0.0
            %2304 = vmatpush1.msra.mxu0 0.0
            %2305 = vmatprep.subr.mxu0 0.0
            %2306 = vmatpush1.msra.mxu0 0.0
            %2307 = vmatprep.subr.mxu0 0.0
            %2308 = vmatpush1.msra.mxu0 0.0
            %2309 = vmatprep.subr.mxu0 0.0
            %2310 = vmatpush1.msra.mxu0 0.0
            %2311 = vmatprep.subr.mxu0 0.0
            %2312 = vmatpush1.msra.mxu0 0.0
            %2313 = vmatprep.subr.mxu0 0.0
            %2314 = vmatpush1.msra.mxu0 0.0
            %2315 = vmatprep.subr.mxu0 0.0
            %2316 = vmatpush1.msra.mxu0 0.0
            %2317 = vmatprep.subr.mxu0 0.0
            %2318 = vmatpush1.msra.mxu0 0.0
            %2319 = vmatprep.subr.mxu0 0.0
            %2320 = vmatpush1.msra.mxu0 0.0
            %2321 = vmatprep.subr.mxu0 0.0
            %2322 = vmatpush1.msra.mxu0 0.0
            %2323 = vmatprep.subr.mxu0 0.0
            %2324 = vmatpush1.msra.mxu0 0.0
            %2325 = vmatprep.subr.mxu0 0.0
            %2326 = vmatpush1.msra.mxu0 0.0
            %2327 = vmatprep.subr.mxu0 0.0
            %2328 = vmatpush1.msra.mxu0 0.0
            %2329 = vmatprep.subr.mxu0 0.0
            %2330 = vmatpush1.msra.mxu0 0.0
            %2331 = vmatprep.subr.mxu0 0.0
            %2332 = vmatpush1.msra.mxu0 0.0
            %2333 = vmatprep.subr.mxu0 0.0
            %2334 = vmatpush1.msra.mxu0 0.0
            %2335 = vmatprep.subr.mxu0 0.0
            %2336 = vmatpush1.msra.mxu0 0.0
            %2337 = vmatprep.subr.mxu0 0.0
            %2338 = vmatpush1.msra.mxu0 0.0
            %2339 = vmatprep.subr.mxu0 0.0
            %2340 = vmatpush1.msra.mxu0 0.0
            %2341 = vmatprep.subr.mxu0 0.0
            %2342 = vmatpush1.msra.mxu0 0.0
            %2343 = vmatprep.subr.mxu0 0.0
            %2344 = vmatpush1.msra.mxu0 0.0
            %2345 = vmatprep.subr.mxu0 0.0
            %2346 = vmatpush1.msra.mxu0 0.0
            %2347 = vmatprep.subr.mxu0 0.0
            %2348 = vmatpush1.msra.mxu0 0.0
            %2349 = vmatprep.subr.mxu0 0.0
            %2350 = vmatpush1.msra.mxu0 0.0
            %2351 = vmatprep.mubr.f32.mxu0 0.0
            %2352 = vmatmul.mubr.f32.gmra.mrb[0].mxu0 %v2285
            %v2353 = vpop.f32.mrb[0].mxu0
            %v2354 = vadd.f32 %v2282, %v2353
            %v2355 = vpop.f32.mrb[0].mxu0
            %2356 = vdwg.mxu0
            %v2357 = vmax.f32 %v2354, 0.0
            %v2358 = vld [vmem:[%s9] sm:$0xff]
            %v2359 = vld [vmem:[%s9 + $0x8] sm:$0xff]
            %v2360 = vld [vmem:[%s9 + $0x10] sm:$0xff]
            %v2361 = vld [vmem:[%s9 + $0x18] sm:$0xff]
            %v2362 = vld [vmem:[%s9 + $0x20] sm:$0xff]
            %v2363 = vld [vmem:[%s9 + $0x28] sm:$0xff]
            %v2364 = vld [vmem:[%s9 + $0x30] sm:$0xff]
            %v2365 = vld [vmem:[%s9 + $0x38] sm:$0xff]
            %v2366 = vld [vmem:[%s10] sm:$0x1]
            %v2368 = vlaneseq
            %v2369 = vshrl.u32 %v2368, 7
            %v2370 = vsub.s32 0, %v2369
            %v2371 = vrot.slane %v2366, %v2370
            %v2374 = vsel %vm2165, %v2357, 0
            %2376 = vmatprep.subr.mxu0 0.0
            %2377 = vmatpush1.msra.mxu0 %v2358
            %2378 = vmatprep.subr.mxu0 0.0
            %2379 = vmatpush1.msra.mxu0 %v2359
            %2380 = vmatprep.subr.mxu0 0.0
            %2381 = vmatpush1.msra.mxu0 %v2360
            %2382 = vmatprep.subr.mxu0 0.0
            %2383 = vmatpush1.msra.mxu0 %v2361
            %2384 = vmatprep.subr.mxu0 0.0
            %2385 = vmatpush1.msra.mxu0 %v2362
            %2386 = vmatprep.subr.mxu0 0.0
            %2387 = vmatpush1.msra.mxu0 %v2363
            %2388 = vmatprep.subr.mxu0 0.0
            %2389 = vmatpush1.msra.mxu0 %v2364
            %2390 = vmatprep.subr.mxu0 0.0
            %2391 = vmatpush1.msra.mxu0 %v2365
            %2392 = vmatprep.subr.mxu0 0.0
            %2393 = vmatpush1.msra.mxu0 0.0
            %2394 = vmatprep.subr.mxu0 0.0
            %2395 = vmatpush1.msra.mxu0 0.0
            %2396 = vmatprep.subr.mxu0 0.0
            %2397 = vmatpush1.msra.mxu0 0.0
            %2398 = vmatprep.subr.mxu0 0.0
            %2399 = vmatpush1.msra.mxu0 0.0
            %2400 = vmatprep.subr.mxu0 0.0
            %2401 = vmatpush1.msra.mxu0 0.0
            %2402 = vmatprep.subr.mxu0 0.0
            %2403 = vmatpush1.msra.mxu0 0.0
            %2404 = vmatprep.subr.mxu0 0.0
            %2405 = vmatpush1.msra.mxu0 0.0
            %2406 = vmatprep.subr.mxu0 0.0
            %2407 = vmatpush1.msra.mxu0 0.0
            %2408 = vmatprep.subr.mxu0 0.0
            %2409 = vmatpush1.msra.mxu0 0.0
            %2410 = vmatprep.subr.mxu0 0.0
            %2411 = vmatpush1.msra.mxu0 0.0
            %2412 = vmatprep.subr.mxu0 0.0
            %2413 = vmatpush1.msra.mxu0 0.0
            %2414 = vmatprep.subr.mxu0 0.0
            %2415 = vmatpush1.msra.mxu0 0.0
            %2416 = vmatprep.subr.mxu0 0.0
            %2417 = vmatpush1.msra.mxu0 0.0
            %2418 = vmatprep.subr.mxu0 0.0
            %2419 = vmatpush1.msra.mxu0 0.0
            %2420 = vmatprep.subr.mxu0 0.0
            %2421 = vmatpush1.msra.mxu0 0.0
            %2422 = vmatprep.subr.mxu0 0.0
            %2423 = vmatpush1.msra.mxu0 0.0
            %2424 = vmatprep.subr.mxu0 0.0
            %2425 = vmatpush1.msra.mxu0 0.0
            %2426 = vmatprep.subr.mxu0 0.0
            %2427 = vmatpush1.msra.mxu0 0.0
            %2428 = vmatprep.subr.mxu0 0.0
            %2429 = vmatpush1.msra.mxu0 0.0
            %2430 = vmatprep.subr.mxu0 0.0
            %2431 = vmatpush1.msra.mxu0 0.0
            %2432 = vmatprep.subr.mxu0 0.0
            %2433 = vmatpush1.msra.mxu0 0.0
            %2434 = vmatprep.subr.mxu0 0.0
            %2435 = vmatpush1.msra.mxu0 0.0
            %2436 = vmatprep.subr.mxu0 0.0
            %2437 = vmatpush1.msra.mxu0 0.0
            %2438 = vmatprep.subr.mxu0 0.0
            %2439 = vmatpush1.msra.mxu0 0.0
            %2440 = vmatprep.mubr.f32.mxu0 0.0
            %2441 = vmatmul.mubr.f32.gmra.mrb[0].mxu0 %v2374
            %v2442 = vpop.f32.mrb[0].mxu0
            %v2443 = vadd.f32 %v2371, %v2442
            %v2444 = vpop.f32.mrb[0].mxu0
            %2445 = vdwg.mxu0
            %2446 = vst [vmem:[#allocation19] sm:$0xff] %v2443
          $region124: #{tpu_custom_call.1} parent=119 // pred_fallthru
            _
        $region120: #{tpu_custom_call.1} parent=63 // pred_fallthru
          _
        // Predicated region
        $region125: #{tpu_custom_call.1} parent=63 // pred_check
          %p2447 = pneg %p326
        $region126: #{tpu_custom_call.1} parent=63 // pred_check_branch
          %2449 = sbr.rel (%p2447) target = $region128
        $region127: #{tpu_custom_call.1} parent=63 // pred_region
          %s2451 = ssub.s32 128, 128
          %2452 = vsyncadd [#allocation12], %s2451
          %s2454 = sshll.u32 [#allocation19], 4
          %s2455 = int_to_ptr.vmem [resolvable:$true] %s2454
          %2457 = dma.vmem_to_hbm [thread:$0]  %s2455, 128, %s11, [#allocation12]
        $region128: #{tpu_custom_call.1} parent=63 // pred_fallthru
          _
        // Predicated region
        $region129: #{tpu_custom_call.1} parent=63 // pred_check
          %p2458 = pneg %p326
        $region130: #{tpu_custom_call.1} parent=63 // pred_check_branch
          %2460 = sbr.rel (%p2458) target = $region132
        $region131: #{tpu_custom_call.1} parent=63 // pred_region
          %2461 = dma.done [#allocation12], 128
        $region132: #{tpu_custom_call.1} parent=63 // pred_fallthru
          _
      $region64: #{tpu_custom_call.1} parent=5 // pred_fallthru
        _
      %p2462 = scmp.le.s32.totalorder 2, %s25
      // Predicated region
      $region133: #{tpu_custom_call.1} parent=5 // pred_check
        %p2463 = pneg %p2462
      $region134: #{tpu_custom_call.1} parent=5 // pred_check_branch
        %2465 = sbr.rel (%p2463) target = $region136
      $region135: #{tpu_custom_call.1} parent=5 // pred_region
        %s2466 = ssub.s32 %s25, 2
      $region136: #{tpu_custom_call.1} parent=5 // pred_fallthru
        _
    $region6: #{tpu_custom_call.1} parent=1 // loop_footer
      %s29 = sadd.s32 1, %s25
    $region7: #{tpu_custom_call.1} parent=1 // loop_footer_branch
      %24 = sbr.rel target = $region3
    $region8: #{tpu_custom_call.1} parent=1 // loop_exit
      _
    %2467 = vsyncpa [#allocation11], 1
    %s2468 = scalar_lea.sflag [#allocation11], 1
    %2469 = vsyncpa %s2468, 1
    %2470 = vsyncpa [#allocation14], 1
    %s2471 = scalar_lea.sflag [#allocation14], 1
    %2472 = vsyncpa %s2471, 1
    %2473 = vsyncpa [#allocation17], 1
    %s2474 = scalar_lea.sflag [#allocation17], 1
    %2475 = vsyncpa %s2474, 1
    %2476 = vsyncpa [#allocation12], 1
    %s2477 = scalar_lea.sflag [#allocation12], 1
    %2478 = vsyncpa %s2477, 1

</llo_original>
